<compile_context>
chip_gen: v7x
topology: tpu7x:2x2x1
jax: 0.10.0
libtpu: 0.0.40
codegen_flags: <defaults>
</compile_context>

<pallas_src>
import jax
import jax.numpy as jnp
from jax.experimental import pallas as pl
from jax.experimental.pallas import tpu as pltpu


def _round_up(x, m):
    return ((x + m - 1) // m) * m


# ------------------------------ Pallas kernels ------------------------------

def _conv3x3_bias_stats_kernel(a0_ref, a1_ref, a2_ref, w_ref, b_ref,
                               o_ref, s_ref, ss_ref):
    """One upsampled image row of the 3x3 conv (pad=1) + bias, fused with
    per-row partial BatchNorm statistics.

    a{0,1,2}_ref : (W2+2, Cp)    bf16  -- padded input rows y, y+1, y+2
    w_ref        : (3, 3, Cp, tn) bf16 -- packed conv weights (stays resident)
    b_ref        : (1, tn)        f32  -- conv bias
    o_ref        : (W2, tn)       f32  -- conv output row
    s_ref/ss_ref : (1, tn)        f32  -- partial sum / sum of squares
    """
    W2, tn = o_ref.shape
    acc = jnp.zeros((W2, tn), jnp.float32)
    # 9 taps accumulated on the MXU with a f32 accumulator; bf16 operands.
    for dy, a_ref in enumerate((a0_ref, a1_ref, a2_ref)):
        for dx in range(3):
            acc = acc + jnp.dot(a_ref[dx:dx + W2, :], w_ref[dy, dx, :, :],
                                preferred_element_type=jnp.float32)
    z = acc + b_ref[...]
    o_ref[...] = z
    s_ref[...] = jnp.sum(z, axis=0, keepdims=True)
    ss_ref[...] = jnp.sum(z * z, axis=0, keepdims=True)


def conv3x3_bias_stats(u_p, w_packed, bias_p):
    """u_p: [N, H2+2, W2+2, Cp] bf16 (spatial pad=1, channel-padded upsampled x)
       w_packed: [3, 3, Cp, Np] bf16,  bias_p: [1, Np] f32.
       Returns conv output [N, H2, W2, Np] f32 and per-image-row partial
       sums / sums-of-squares [N, H2, 1, Np] f32 for BatchNorm."""
    N, H2p2, W2p2, Cp = u_p.shape
    H2, W2 = H2p2 - 2, W2p2 - 2
    Np = w_packed.shape[-1]
    tn = 256 if Np % 256 == 0 else 128
    nj = Np // tn

    def a_spec(dy):
        # Block row size is 1 along the padded-height axis, so the returned
        # block index is an exact element offset: row y + dy of image n.
        def imap(j, n, y):
            return (n, y + dy, 0, 0)
        return pl.BlockSpec((None, None, W2 + 2, Cp), imap)

    return pl.pallas_call(
        _conv3x3_bias_stats_kernel,
        out_shape=(
            jax.ShapeDtypeStruct((N, H2, W2, Np), jnp.float32),
            jax.ShapeDtypeStruct((N, H2, 1, Np), jnp.float32),
            jax.ShapeDtypeStruct((N, H2, 1, Np), jnp.float32),
        ),
        grid_spec=pltpu.PrefetchScalarGridSpec(
            num_scalar_prefetch=0,
            # j outermost so the weight/bias tiles stay VMEM-resident across
            # the whole (n, y) sweep; all axes independent -> all parallel.
            grid=(nj, N, H2),
            in_specs=[
                a_spec(0), a_spec(1), a_spec(2),
                pl.BlockSpec((3, 3, Cp, tn), lambda j, n, y: (0, 0, 0, j)),
                pl.BlockSpec((1, tn), lambda j, n, y: (0, j)),
            ],
            out_specs=(
                pl.BlockSpec((None, None, W2, tn), lambda j, n, y: (n, y, 0, j)),
                pl.BlockSpec((None, None, 1, tn), lambda j, n, y: (n, y, 0, j)),
                pl.BlockSpec((None, None, 1, tn), lambda j, n, y: (n, y, 0, j)),
            ),
        ),
        compiler_params=pltpu.CompilerParams(
            dimension_semantics=("parallel", "parallel", "parallel")),
    )(u_p, u_p, u_p, w_packed, bias_p)


def _bn_relu_kernel(y_ref, scale_ref, shift_ref, o_ref):
    o_ref[...] = jnp.maximum(y_ref[...] * scale_ref[...] + shift_ref[...], 0.0)


def bn_relu_apply(y2, scale, shift):
    """y2: [M, Np] f32 (Np multiple of 128 -> lane-dense loads/stores);
       scale/shift: [Np] f32. Tiled over M with a real grid."""
    M, Np = y2.shape
    max_rows = max(256, min(4096, (2 * 1024 * 1024) // (Np * 4)))
    tr = M  # fallback: single block (only for tiny M)
    for cand in (4096, 2048, 1024, 512, 256, 128, 64, 32, 16, 8):
        if cand <= max_rows and M % cand == 0:
            tr = cand
            break
    return pl.pallas_call(
        _bn_relu_kernel,
        out_shape=jax.ShapeDtypeStruct((M, Np), jnp.float32),
        grid_spec=pltpu.PrefetchScalarGridSpec(
            num_scalar_prefetch=0,
            grid=(M // tr,),
            in_specs=[
                pl.BlockSpec((tr, Np), lambda i: (i, 0)),
                pl.BlockSpec((1, Np), lambda i: (0, 0)),
                pl.BlockSpec((1, Np), lambda i: (0, 0)),
            ],
            out_specs=pl.BlockSpec((tr, Np), lambda i: (i, 0)),
        ),
        compiler_params=pltpu.CompilerParams(dimension_semantics=("parallel",)),
    )(y2, scale.reshape(1, Np), shift.reshape(1, Np))


# --------------------------------- params -----------------------------------

def init_up_conv_params(key, in_ch, out_ch):
    """Deterministic parameters, pre-packed ONCE for the kernels:
    conv weight -> [3,3,Cp,Np] bf16 (Cp=Cin rounded to 16, Np=Cout rounded to
    128), bias/BN params zero/one padded to Np."""
    k1, k2 = jax.random.split(key)
    fan_in = 9 * in_ch
    W = jax.random.normal(k1, (3, 3, in_ch, out_ch), jnp.float32) / jnp.sqrt(fan_in)
    b = 0.01 * jax.random.normal(k2, (out_ch,), jnp.float32)
    gamma = jnp.ones((out_ch,), jnp.float32)
    beta = jnp.zeros((out_ch,), jnp.float32)

    Cp = _round_up(in_ch, 16)     # bf16 sublane packing for the K dim
    Np = _round_up(out_ch, 128)   # lane-dense conv / BN stores
    w_packed = jnp.pad(W, ((0, 0), (0, 0), (0, Cp - in_ch), (0, Np - out_ch)))
    w_packed = w_packed.astype(jnp.bfloat16)
    bias_p = jnp.pad(b, (0, Np - out_ch)).reshape(1, Np)
    gamma_p = jnp.pad(gamma, (0, Np - out_ch), constant_values=1.0)
    beta_p = jnp.pad(beta, (0, Np - out_ch))
    return dict(w=w_packed, b=bias_p, gamma=gamma_p, beta=beta_p,
                in_ch=in_ch, out_ch=out_ch)


# -------------------------------- forward -----------------------------------

def up_conv_forward(x_nchw, params, eps=1e-5):
    """up_conv forward: Upsample(scale=2, nearest) -> Conv2d(3x3, s=1, p=1,
    bias) -> BatchNorm2d (training-mode batch statistics, biased variance,
    eps=1e-5) -> ReLU.  Input/output are NCHW like PyTorch."""
    w_packed, bias_p = params["w"], params["b"]
    gamma, beta = params["gamma"], params["beta"]
    out_ch = params["out_ch"]
    Cp, Np = w_packed.shape[2], w_packed.shape[3]

    x = jnp.transpose(x_nchw, (0, 2, 3, 1)).astype(jnp.bfloat16)   # NHWC bf16
    N, H, W, Cin = x.shape
    H2, W2 = 2 * H, 2 * W

    # nearest-neighbour x2 upsample: pure interleave (no gather)
    u = jnp.broadcast_to(x[:, :, None, :, None, :], (N, H, 2, W, 2, Cin))
    u = u.reshape(N, H2, W2, Cin)
    # spatial pad=1 for the 3x3 conv + channel pad to the packed weight's Cin
    u_p = jnp.pad(u, ((0, 0), (1, 1), (1, 1), (0, Cp - Cin)))

    # fused conv + bias + partial BN stats (single HBM write of the activation)
    y, psum, psumsq = conv3x3_bias_stats(u_p, w_packed, bias_p)

    # batch statistics (training-mode BatchNorm2d, biased variance)
    cnt = float(N * H2 * W2)
    s = jnp.sum(psum, axis=(0, 1, 2))
    ss = jnp.sum(psumsq, axis=(0, 1, 2))
    mean = s / cnt
    var = jnp.maximum(ss / cnt - mean * mean, 0.0)   # guard cancellation
    rstd = jax.lax.rsqrt(var + eps)
    scale = gamma * rstd
    shift = beta - mean * scale

    out = bn_relu_apply(y.reshape(N * H2 * W2, Np), scale, shift)
    out = out.reshape(N, H2, W2, Np)[:, :, :, :out_ch]
    return jnp.transpose(out, (0, 3, 1, 2))


if __name__ == "__main__":
    key = jax.random.PRNGKey(0)
    kx, kp = jax.random.split(key)
    # up_conv(in_ch=64, out_ch=32); small NCHW input
    x = jax.random.normal(kx, (2, 64, 16, 16), jnp.float32)
    params = init_up_conv_params(kp, in_ch=64, out_ch=32)

    fwd = jax.jit(lambda inp: up_conv_forward(inp, params))
    out = fwd(x)
    jax.block_until_ready(out)

    assert out.shape == (2, 32, 32, 32), out.shape
    assert bool(jnp.all(jnp.isfinite(out)))
    print("KERNEL_OK")
</pallas_src>

<mosaic_0001>
module attributes {stable_mosaic.version = 11 : i64} {
  func.func @_conv3x3_bias_stats_kernel(%arg0: i32, %arg1: i32, %arg2: i32, %arg3: memref<1x1x34x64xbf16, #tpu.memory_space<vmem>>, %arg4: memref<1x1x34x64xbf16, #tpu.memory_space<vmem>>, %arg5: memref<1x1x34x64xbf16, #tpu.memory_space<vmem>>, %arg6: memref<3x3x64x128xbf16, #tpu.memory_space<vmem>>, %arg7: memref<1x128xf32, #tpu.memory_space<vmem>>, %arg8: memref<1x1x32x128xf32, #tpu.memory_space<vmem>>, %arg9: memref<1x1x1x128xf32, #tpu.memory_space<vmem>>, %arg10: memref<1x1x1x128xf32, #tpu.memory_space<vmem>>) attributes {dimension_semantics = [#tpu.dimension_semantics<parallel>, #tpu.dimension_semantics<parallel>, #tpu.dimension_semantics<parallel>], iteration_bounds = array<i64: 1, 2, 32>, scalar_prefetch = 0 : i64, scratch_operands = 0 : i64, tpu.core_type = #tpu.core_type<tc>, window_params = [{transform_indices = @transform_0, window_bounds = array<i64: 1, 1, 34, 64>}, {transform_indices = @transform_1, window_bounds = array<i64: 1, 1, 34, 64>}, {transform_indices = @transform_2, window_bounds = array<i64: 1, 1, 34, 64>}, {transform_indices = @transform_3, window_bounds = array<i64: 3, 3, 64, 128>}, {transform_indices = @transform_4, window_bounds = array<i64: 1, 128>}, {transform_indices = @transform_5, window_bounds = array<i64: 1, 1, 32, 128>}, {transform_indices = @transform_6, window_bounds = array<i64: 1, 1, 1, 128>}, {transform_indices = @transform_7, window_bounds = array<i64: 1, 1, 1, 128>}]} {
    %cst = arith.constant 0.000000e+00 : f32
    %0 = vector.broadcast %cst : f32 to vector<32x128xf32>
    %c0 = arith.constant 0 : index
    %c0_0 = arith.constant 0 : index
    %c0_1 = arith.constant 0 : index
    %c0_2 = arith.constant 0 : index
    %1 = vector.load %arg3[%c0, %c0_0, %c0_1, %c0_2] : memref<1x1x34x64xbf16, #tpu.memory_space<vmem>>, vector<1x1x32x64xbf16>
    %2 = vector.shape_cast %1 : vector<1x1x32x64xbf16> to vector<32x64xbf16>
    %c0_3 = arith.constant 0 : index
    %c0_4 = arith.constant 0 : index
    %c0_5 = arith.constant 0 : index
    %c0_6 = arith.constant 0 : index
    %3 = vector.load %arg6[%c0_3, %c0_4, %c0_5, %c0_6] : memref<3x3x64x128xbf16, #tpu.memory_space<vmem>>, vector<1x1x64x128xbf16>
    %4 = vector.shape_cast %3 : vector<1x1x64x128xbf16> to vector<64x128xbf16>
    %cst_7 = arith.constant dense<0.000000e+00> : vector<32x128xf32>
    %5 = tpu.matmul %2, %4, %cst_7 {dimension_numbers = #tpu.dot_dimension_numbers<[1], [0], [0], [1], [0, 0, 1, 1], [], []>} : vector<32x64xbf16>, vector<64x128xbf16>, vector<32x128xf32> -> vector<32x128xf32>
    %6 = arith.addf %0, %5 : vector<32x128xf32>
    %c0_8 = arith.constant 0 : index
    %c0_9 = arith.constant 0 : index
    %c1 = arith.constant 1 : index
    %c0_10 = arith.constant 0 : index
    %7 = vector.load %arg3[%c0_8, %c0_9, %c1, %c0_10] : memref<1x1x34x64xbf16, #tpu.memory_space<vmem>>, vector<1x1x32x64xbf16>
    %8 = vector.shape_cast %7 : vector<1x1x32x64xbf16> to vector<32x64xbf16>
    %c0_11 = arith.constant 0 : index
    %c1_12 = arith.constant 1 : index
    %c0_13 = arith.constant 0 : index
    %c0_14 = arith.constant 0 : index
    %9 = vector.load %arg6[%c0_11, %c1_12, %c0_13, %c0_14] : memref<3x3x64x128xbf16, #tpu.memory_space<vmem>>, vector<1x1x64x128xbf16>
    %10 = vector.shape_cast %9 : vector<1x1x64x128xbf16> to vector<64x128xbf16>
    %cst_15 = arith.constant dense<0.000000e+00> : vector<32x128xf32>
    %11 = tpu.matmul %8, %10, %cst_15 {dimension_numbers = #tpu.dot_dimension_numbers<[1], [0], [0], [1], [0, 0, 1, 1], [], []>} : vector<32x64xbf16>, vector<64x128xbf16>, vector<32x128xf32> -> vector<32x128xf32>
    %12 = arith.addf %6, %11 : vector<32x128xf32>
    %c0_16 = arith.constant 0 : index
    %c0_17 = arith.constant 0 : index
    %c2 = arith.constant 2 : index
    %c0_18 = arith.constant 0 : index
    %13 = vector.load %arg3[%c0_16, %c0_17, %c2, %c0_18] : memref<1x1x34x64xbf16, #tpu.memory_space<vmem>>, vector<1x1x32x64xbf16>
    %14 = vector.shape_cast %13 : vector<1x1x32x64xbf16> to vector<32x64xbf16>
    %c0_19 = arith.constant 0 : index
    %c2_20 = arith.constant 2 : index
    %c0_21 = arith.constant 0 : index
    %c0_22 = arith.constant 0 : index
    %15 = vector.load %arg6[%c0_19, %c2_20, %c0_21, %c0_22] : memref<3x3x64x128xbf16, #tpu.memory_space<vmem>>, vector<1x1x64x128xbf16>
    %16 = vector.shape_cast %15 : vector<1x1x64x128xbf16> to vector<64x128xbf16>
    %cst_23 = arith.constant dense<0.000000e+00> : vector<32x128xf32>
    %17 = tpu.matmul %14, %16, %cst_23 {dimension_numbers = #tpu.dot_dimension_numbers<[1], [0], [0], [1], [0, 0, 1, 1], [], []>} : vector<32x64xbf16>, vector<64x128xbf16>, vector<32x128xf32> -> vector<32x128xf32>
    %18 = arith.addf %12, %17 : vector<32x128xf32>
    %c0_24 = arith.constant 0 : index
    %c0_25 = arith.constant 0 : index
    %c0_26 = arith.constant 0 : index
    %c0_27 = arith.constant 0 : index
    %19 = vector.load %arg4[%c0_24, %c0_25, %c0_26, %c0_27] : memref<1x1x34x64xbf16, #tpu.memory_space<vmem>>, vector<1x1x32x64xbf16>
    %20 = vector.shape_cast %19 : vector<1x1x32x64xbf16> to vector<32x64xbf16>
    %c1_28 = arith.constant 1 : index
    %c0_29 = arith.constant 0 : index
    %c0_30 = arith.constant 0 : index
    %c0_31 = arith.constant 0 : index
    %21 = vector.load %arg6[%c1_28, %c0_29, %c0_30, %c0_31] : memref<3x3x64x128xbf16, #tpu.memory_space<vmem>>, vector<1x1x64x128xbf16>
    %22 = vector.shape_cast %21 : vector<1x1x64x128xbf16> to vector<64x128xbf16>
    %cst_32 = arith.constant dense<0.000000e+00> : vector<32x128xf32>
    %23 = tpu.matmul %20, %22, %cst_32 {dimension_numbers = #tpu.dot_dimension_numbers<[1], [0], [0], [1], [0, 0, 1, 1], [], []>} : vector<32x64xbf16>, vector<64x128xbf16>, vector<32x128xf32> -> vector<32x128xf32>
    %24 = arith.addf %18, %23 : vector<32x128xf32>
    %c0_33 = arith.constant 0 : index
    %c0_34 = arith.constant 0 : index
    %c1_35 = arith.constant 1 : index
    %c0_36 = arith.constant 0 : index
    %25 = vector.load %arg4[%c0_33, %c0_34, %c1_35, %c0_36] : memref<1x1x34x64xbf16, #tpu.memory_space<vmem>>, vector<1x1x32x64xbf16>
    %26 = vector.shape_cast %25 : vector<1x1x32x64xbf16> to vector<32x64xbf16>
    %c1_37 = arith.constant 1 : index
    %c1_38 = arith.constant 1 : index
    %c0_39 = arith.constant 0 : index
    %c0_40 = arith.constant 0 : index
    %27 = vector.load %arg6[%c1_37, %c1_38, %c0_39, %c0_40] : memref<3x3x64x128xbf16, #tpu.memory_space<vmem>>, vector<1x1x64x128xbf16>
    %28 = vector.shape_cast %27 : vector<1x1x64x128xbf16> to vector<64x128xbf16>
    %cst_41 = arith.constant dense<0.000000e+00> : vector<32x128xf32>
    %29 = tpu.matmul %26, %28, %cst_41 {dimension_numbers = #tpu.dot_dimension_numbers<[1], [0], [0], [1], [0, 0, 1, 1], [], []>} : vector<32x64xbf16>, vector<64x128xbf16>, vector<32x128xf32> -> vector<32x128xf32>
    %30 = arith.addf %24, %29 : vector<32x128xf32>
    %c0_42 = arith.constant 0 : index
    %c0_43 = arith.constant 0 : index
    %c2_44 = arith.constant 2 : index
    %c0_45 = arith.constant 0 : index
    %31 = vector.load %arg4[%c0_42, %c0_43, %c2_44, %c0_45] : memref<1x1x34x64xbf16, #tpu.memory_space<vmem>>, vector<1x1x32x64xbf16>
    %32 = vector.shape_cast %31 : vector<1x1x32x64xbf16> to vector<32x64xbf16>
    %c1_46 = arith.constant 1 : index
    %c2_47 = arith.constant 2 : index
    %c0_48 = arith.constant 0 : index
    %c0_49 = arith.constant 0 : index
    %33 = vector.load %arg6[%c1_46, %c2_47, %c0_48, %c0_49] : memref<3x3x64x128xbf16, #tpu.memory_space<vmem>>, vector<1x1x64x128xbf16>
    %34 = vector.shape_cast %33 : vector<1x1x64x128xbf16> to vector<64x128xbf16>
    %cst_50 = arith.constant dense<0.000000e+00> : vector<32x128xf32>
    %35 = tpu.matmul %32, %34, %cst_50 {dimension_numbers = #tpu.dot_dimension_numbers<[1], [0], [0], [1], [0, 0, 1, 1], [], []>} : vector<32x64xbf16>, vector<64x128xbf16>, vector<32x128xf32> -> vector<32x128xf32>
    %36 = arith.addf %30, %35 : vector<32x128xf32>
    %c0_51 = arith.constant 0 : index
    %c0_52 = arith.constant 0 : index
    %c0_53 = arith.constant 0 : index
    %c0_54 = arith.constant 0 : index
    %37 = vector.load %arg5[%c0_51, %c0_52, %c0_53, %c0_54] : memref<1x1x34x64xbf16, #tpu.memory_space<vmem>>, vector<1x1x32x64xbf16>
    %38 = vector.shape_cast %37 : vector<1x1x32x64xbf16> to vector<32x64xbf16>
    %c2_55 = arith.constant 2 : index
    %c0_56 = arith.constant 0 : index
    %c0_57 = arith.constant 0 : index
    %c0_58 = arith.constant 0 : index
    %39 = vector.load %arg6[%c2_55, %c0_56, %c0_57, %c0_58] : memref<3x3x64x128xbf16, #tpu.memory_space<vmem>>, vector<1x1x64x128xbf16>
    %40 = vector.shape_cast %39 : vector<1x1x64x128xbf16> to vector<64x128xbf16>
    %cst_59 = arith.constant dense<0.000000e+00> : vector<32x128xf32>
    %41 = tpu.matmul %38, %40, %cst_59 {dimension_numbers = #tpu.dot_dimension_numbers<[1], [0], [0], [1], [0, 0, 1, 1], [], []>} : vector<32x64xbf16>, vector<64x128xbf16>, vector<32x128xf32> -> vector<32x128xf32>
    %42 = arith.addf %36, %41 : vector<32x128xf32>
    %c0_60 = arith.constant 0 : index
    %c0_61 = arith.constant 0 : index
    %c1_62 = arith.constant 1 : index
    %c0_63 = arith.constant 0 : index
    %43 = vector.load %arg5[%c0_60, %c0_61, %c1_62, %c0_63] : memref<1x1x34x64xbf16, #tpu.memory_space<vmem>>, vector<1x1x32x64xbf16>
    %44 = vector.shape_cast %43 : vector<1x1x32x64xbf16> to vector<32x64xbf16>
    %c2_64 = arith.constant 2 : index
    %c1_65 = arith.constant 1 : index
    %c0_66 = arith.constant 0 : index
    %c0_67 = arith.constant 0 : index
    %45 = vector.load %arg6[%c2_64, %c1_65, %c0_66, %c0_67] : memref<3x3x64x128xbf16, #tpu.memory_space<vmem>>, vector<1x1x64x128xbf16>
    %46 = vector.shape_cast %45 : vector<1x1x64x128xbf16> to vector<64x128xbf16>
    %cst_68 = arith.constant dense<0.000000e+00> : vector<32x128xf32>
    %47 = tpu.matmul %44, %46, %cst_68 {dimension_numbers = #tpu.dot_dimension_numbers<[1], [0], [0], [1], [0, 0, 1, 1], [], []>} : vector<32x64xbf16>, vector<64x128xbf16>, vector<32x128xf32> -> vector<32x128xf32>
    %48 = arith.addf %42, %47 : vector<32x128xf32>
    %c0_69 = arith.constant 0 : index
    %c0_70 = arith.constant 0 : index
    %c2_71 = arith.constant 2 : index
    %c0_72 = arith.constant 0 : index
    %49 = vector.load %arg5[%c0_69, %c0_70, %c2_71, %c0_72] : memref<1x1x34x64xbf16, #tpu.memory_space<vmem>>, vector<1x1x32x64xbf16>
    %50 = vector.shape_cast %49 : vector<1x1x32x64xbf16> to vector<32x64xbf16>
    %c2_73 = arith.constant 2 : index
    %c2_74 = arith.constant 2 : index
    %c0_75 = arith.constant 0 : index
    %c0_76 = arith.constant 0 : index
    %51 = vector.load %arg6[%c2_73, %c2_74, %c0_75, %c0_76] : memref<3x3x64x128xbf16, #tpu.memory_space<vmem>>, vector<1x1x64x128xbf16>
    %52 = vector.shape_cast %51 : vector<1x1x64x128xbf16> to vector<64x128xbf16>
    %cst_77 = arith.constant dense<0.000000e+00> : vector<32x128xf32>
    %53 = tpu.matmul %50, %52, %cst_77 {dimension_numbers = #tpu.dot_dimension_numbers<[1], [0], [0], [1], [0, 0, 1, 1], [], []>} : vector<32x64xbf16>, vector<64x128xbf16>, vector<32x128xf32> -> vector<32x128xf32>
    %54 = arith.addf %48, %53 : vector<32x128xf32>
    %c0_78 = arith.constant 0 : index
    %c0_79 = arith.constant 0 : index
    %55 = vector.load %arg7[%c0_78, %c0_79] : memref<1x128xf32, #tpu.memory_space<vmem>>, vector<1x128xf32>
    %56 = vector.broadcast %55 : vector<1x128xf32> to vector<32x128xf32>
    %57 = arith.addf %54, %56 : vector<32x128xf32>
    %c0_80 = arith.constant 0 : index
    %c0_81 = arith.constant 0 : index
    %c0_82 = arith.constant 0 : index
    %c0_83 = arith.constant 0 : index
    %58 = vector.load %arg8[%c0_80, %c0_81, %c0_82, %c0_83] : memref<1x1x32x128xf32, #tpu.memory_space<vmem>>, vector<1x1x32x128xf32>
    %59 = vector.shape_cast %58 : vector<1x1x32x128xf32> to vector<32x128xf32>
    %60 = vector.shape_cast %57 : vector<32x128xf32> to vector<1x1x32x128xf32>
    tpu.vector_store %arg8[%c0_80, %c0_81, %c0_82, %c0_83], %60 {strides = array<i32>} : memref<1x1x32x128xf32, #tpu.memory_space<vmem>>, vector<1x1x32x128xf32>,
    %cst_84 = arith.constant dense<0.000000e+00> : vector<128xf32>
    %61 = vector.multi_reduction <add>, %57, %cst_84 [0] : vector<32x128xf32> to vector<128xf32>
    %62 = vector.shape_cast %61 : vector<128xf32> to vector<1x128xf32>
    %c0_85 = arith.constant 0 : index
    %c0_86 = arith.constant 0 : index
    %c0_87 = arith.constant 0 : index
    %c0_88 = arith.constant 0 : index
    %63 = vector.load %arg9[%c0_85, %c0_86, %c0_87, %c0_88] : memref<1x1x1x128xf32, #tpu.memory_space<vmem>>, vector<1x1x1x128xf32>
    %64 = vector.shape_cast %63 : vector<1x1x1x128xf32> to vector<1x128xf32>
    %65 = vector.shape_cast %62 : vector<1x128xf32> to vector<1x1x1x128xf32>
    tpu.vector_store %arg9[%c0_85, %c0_86, %c0_87, %c0_88], %65 {strides = array<i32>} : memref<1x1x1x128xf32, #tpu.memory_space<vmem>>, vector<1x1x1x128xf32>,
    %66 = arith.mulf %57, %57 : vector<32x128xf32>
    %cst_89 = arith.constant dense<0.000000e+00> : vector<128xf32>
    %67 = vector.multi_reduction <add>, %66, %cst_89 [0] : vector<32x128xf32> to vector<128xf32>
    %68 = vector.shape_cast %67 : vector<128xf32> to vector<1x128xf32>
    %c0_90 = arith.constant 0 : index
    %c0_91 = arith.constant 0 : index
    %c0_92 = arith.constant 0 : index
    %c0_93 = arith.constant 0 : index
    %69 = vector.load %arg10[%c0_90, %c0_91, %c0_92, %c0_93] : memref<1x1x1x128xf32, #tpu.memory_space<vmem>>, vector<1x1x1x128xf32>
    %70 = vector.shape_cast %69 : vector<1x1x1x128xf32> to vector<1x128xf32>
    %71 = vector.shape_cast %68 : vector<1x128xf32> to vector<1x1x1x128xf32>
    tpu.vector_store %arg10[%c0_90, %c0_91, %c0_92, %c0_93], %71 {strides = array<i32>} : memref<1x1x1x128xf32, #tpu.memory_space<vmem>>, vector<1x1x1x128xf32>,
    return
  }
  func.func @transform_0(%arg0: i32, %arg1: i32, %arg2: i32) -> (i32, i32, i32, i32) {
    %c0_i32 = arith.constant 0 : i32
    %0 = arith.addi %arg2, %c0_i32 : i32
    %c0_i32_0 = arith.constant 0 : i32
    %c0_i32_1 = arith.constant 0 : i32
    %c0_i32_2 = arith.constant 0 : i32
    return %arg1, %0, %c0_i32_0, %c0_i32_1 : i32, i32, i32, i32
  }
  func.func @transform_1(%arg0: i32, %arg1: i32, %arg2: i32) -> (i32, i32, i32, i32) {
    %c1_i32 = arith.constant 1 : i32
    %0 = arith.addi %arg2, %c1_i32 : i32
    %c0_i32 = arith.constant 0 : i32
    %c0_i32_0 = arith.constant 0 : i32
    %c0_i32_1 = arith.constant 0 : i32
    return %arg1, %0, %c0_i32, %c0_i32_0 : i32, i32, i32, i32
  }
  func.func @transform_2(%arg0: i32, %arg1: i32, %arg2: i32) -> (i32, i32, i32, i32) {
    %c2_i32 = arith.constant 2 : i32
    %0 = arith.addi %arg2, %c2_i32 : i32
    %c0_i32 = arith.constant 0 : i32
    %c0_i32_0 = arith.constant 0 : i32
    %c0_i32_1 = arith.constant 0 : i32
    return %arg1, %0, %c0_i32, %c0_i32_0 : i32, i32, i32, i32
  }
  func.func @transform_3(%arg0: i32, %arg1: i32, %arg2: i32) -> (i32, i32, i32, i32) {
    %c0_i32 = arith.constant 0 : i32
    %c0_i32_0 = arith.constant 0 : i32
    %c0_i32_1 = arith.constant 0 : i32
    %c0_i32_2 = arith.constant 0 : i32
    return %c0_i32, %c0_i32_0, %c0_i32_1, %arg0 : i32, i32, i32, i32
  }
  func.func @transform_4(%arg0: i32, %arg1: i32, %arg2: i32) -> (i32, i32) {
    %c0_i32 = arith.constant 0 : i32
    %c0_i32_0 = arith.constant 0 : i32
    return %c0_i32, %arg0 : i32, i32
  }
  func.func @transform_5(%arg0: i32, %arg1: i32, %arg2: i32) -> (i32, i32, i32, i32) {
    %c0_i32 = arith.constant 0 : i32
    %c0_i32_0 = arith.constant 0 : i32
    return %arg1, %arg2, %c0_i32, %arg0 : i32, i32, i32, i32
  }
  func.func @transform_6(%arg0: i32, %arg1: i32, %arg2: i32) -> (i32, i32, i32, i32) {
    %c0_i32 = arith.constant 0 : i32
    %c0_i32_0 = arith.constant 0 : i32
    return %arg1, %arg2, %c0_i32, %arg0 : i32, i32, i32, i32
  }
  func.func @transform_7(%arg0: i32, %arg1: i32, %arg2: i32) -> (i32, i32, i32, i32) {
    %c0_i32 = arith.constant 0 : i32
    %c0_i32_0 = arith.constant 0 : i32
    return %arg1, %arg2, %c0_i32, %arg0 : i32, i32, i32, i32
  }
}

module attributes {stable_mosaic.version = 11 : i64} {
  func.func @_bn_relu_kernel(%arg0: i32, %arg1: memref<2048x128xf32, #tpu.memory_space<vmem>>, %arg2: memref<1x128xf32, #tpu.memory_space<vmem>>, %arg3: memref<1x128xf32, #tpu.memory_space<vmem>>, %arg4: memref<2048x128xf32, #tpu.memory_space<vmem>>) attributes {dimension_semantics = [#tpu.dimension_semantics<parallel>], iteration_bounds = array<i64: 1>, scalar_prefetch = 0 : i64, scratch_operands = 0 : i64, tpu.core_type = #tpu.core_type<tc>, window_params = [{transform_indices = @transform_0, window_bounds = array<i64: 2048, 128>}, {pipeline_mode = #tpu.pipeline_mode<synchronous>, transform_indices = @transform_1, window_bounds = array<i64: 1, 128>}, {pipeline_mode = #tpu.pipeline_mode<synchronous>, transform_indices = @transform_2, window_bounds = array<i64: 1, 128>}, {transform_indices = @transform_3, window_bounds = array<i64: 2048, 128>}]} {
    %c0 = arith.constant 0 : index
    %c0_0 = arith.constant 0 : index
    %0 = vector.load %arg1[%c0, %c0_0] : memref<2048x128xf32, #tpu.memory_space<vmem>>, vector<2048x128xf32>
    %c0_1 = arith.constant 0 : index
    %c0_2 = arith.constant 0 : index
    %1 = vector.load %arg2[%c0_1, %c0_2] : memref<1x128xf32, #tpu.memory_space<vmem>>, vector<1x128xf32>
    %2 = vector.broadcast %1 : vector<1x128xf32> to vector<2048x128xf32>
    %3 = arith.mulf %0, %2 : vector<2048x128xf32>
    %c0_3 = arith.constant 0 : index
    %c0_4 = arith.constant 0 : index
    %4 = vector.load %arg3[%c0_3, %c0_4] : memref<1x128xf32, #tpu.memory_space<vmem>>, vector<1x128xf32>
    %5 = vector.broadcast %4 : vector<1x128xf32> to vector<2048x128xf32>
    %6 = arith.addf %3, %5 : vector<2048x128xf32>
    %cst = arith.constant 0.000000e+00 : f32
    %7 = vector.broadcast %cst : f32 to vector<2048x128xf32>
    %8 = arith.maximumf %6, %7 : vector<2048x128xf32>
    %c0_5 = arith.constant 0 : index
    %c0_6 = arith.constant 0 : index
    %9 = vector.load %arg4[%c0_5, %c0_6] : memref<2048x128xf32, #tpu.memory_space<vmem>>, vector<2048x128xf32>
    tpu.vector_store %arg4[%c0_5, %c0_6], %8 {strides = array<i32>} : memref<2048x128xf32, #tpu.memory_space<vmem>>, vector<2048x128xf32>,
    return
  }
  func.func @transform_0(%arg0: i32) -> (i32, i32) {
    %c0_i32 = arith.constant 0 : i32
    %c0_i32_0 = arith.constant 0 : i32
    return %arg0, %c0_i32 : i32, i32
  }
  func.func @transform_1(%arg0: i32) -> (i32, i32) {
    %c0_i32 = arith.constant 0 : i32
    %c0_i32_0 = arith.constant 0 : i32
    %c0_i32_1 = arith.constant 0 : i32
    return %c0_i32, %c0_i32_0 : i32, i32
  }
  func.func @transform_2(%arg0: i32) -> (i32, i32) {
    %c0_i32 = arith.constant 0 : i32
    %c0_i32_0 = arith.constant 0 : i32
    %c0_i32_1 = arith.constant 0 : i32
    return %c0_i32, %c0_i32_0 : i32, i32
  }
  func.func @transform_3(%arg0: i32) -> (i32, i32) {
    %c0_i32 = arith.constant 0 : i32
    %c0_i32_0 = arith.constant 0 : i32
    return %arg0, %c0_i32 : i32, i32
  }
}

</mosaic_0001>

<llo_original>
// kernel: _lambda_.2
$region0: #{_lambda_.2}
  #allocation0 [shape = 'u32[]', space=smem, size = 0x4, offset = 0x4, fixed_abs, tag = 'smem constant byte address 0x4 - core index']
  #allocation1 [shape = 'u32[144,128]{1,0:T(1,128)}', space=vmem, size = 0x12000, scoped, tag = 'internal scratch']
  %s0 = inlined_call_operand.vmem [shape: bf16[2,34,34,64], index: 0, kind: input, shape index: {}, may-alias: {0,1,2}]
  %s1 = inlined_call_operand.vmem [shape: bf16[2,34,34,64], index: 1, kind: input, shape index: {}, may-alias: {0,1,2}]
  %s2 = inlined_call_operand.vmem [shape: bf16[2,34,34,64], index: 2, kind: input, shape index: {}, may-alias: {0,1,2}]
  %s3 = inlined_call_operand.vmem [shape: bf16[3,3,64,128], index: 3, kind: input, shape index: {}]
  %s4 = inlined_call_operand.vmem [shape: f32[1,128], index: 4, kind: input, shape index: {}]
  %s5 = inlined_call_operand.vmem [shape: f32[2,32,32,128], index: 5, kind: output, shape index: {0}]
  %s6 = inlined_call_operand.vmem [shape: f32[2,32,1,128], index: 6, kind: output, shape index: {1}]
  %s7 = inlined_call_operand.vmem [shape: f32[2,32,1,128], index: 7, kind: output, shape index: {2}]
  %8 = xla_tuple %s5, %s6, %s7
  %s9 = sld [smem:[#allocation0]]
  $region69: #{_lambda_.2} parent=0
    _
  %s11 = ssub.s32 1, %s9
  %s12 = scalar_select 0, %s11, %s9
  loop: start=0, step=1, limit=66
  $region2: #{_lambda_.2} parent=0 // loop_pre_header
    _
  $region3: #{_lambda_.2} parent=0 // loop_header
    %s14 = sphi 0, %s18
    %p15 = scmp.ge.s32.totalorder %s14, 66
    %s21 = sphi 0, %s40
    %s22 = sphi 0, %s36
    %s23 = sphi 0, %s32
    %s24 = sphi 0, %s21
    %s25 = sphi 0, %s22
    %s26 = sphi 0, %s23
    %s27 = sphi 0, %s24
    %s28 = sphi 0, %s25
    %s29 = sphi 0, %s26
    %s45 = sphi 0, %s47
    %s48 = sphi 0, %s45
    %s49 = sphi 0, %s48
    %s65 = sphi 0, %s49
    %s75 = sphi 0, %s77
    %s78 = sphi 0, %s75
    %s79 = sphi 0, %s78
    %s95 = sphi 0, %s79
    %s105 = sphi 0, %s107
    %s108 = sphi 0, %s105
    %s109 = sphi 0, %s108
    %s125 = sphi 0, %s109
    %s131 = sphi 0, %s133
    %s134 = sphi 0, %s131
    %s135 = sphi 0, %s134
    %s151 = sphi 0, %s135
    %s157 = sphi 0, %s159
    %s160 = sphi 0, %s157
    %s161 = sphi 0, %s160
    %s177 = sphi 0, %s161
    %s187 = sphi 0, %s189
    %s190 = sphi 0, %s187
    %s191 = sphi 0, %s190
    %s207 = sphi 0, %s191
    %s217 = sphi 0, %s219
    %s220 = sphi 0, %s217
    %s221 = sphi 0, %s220
    %s237 = sphi 0, %s221
    %s247 = sphi 0, %s249
    %s250 = sphi 0, %s247
    %s251 = sphi 0, %s250
    %s267 = sphi 0, %s251
  $region4: #{_lambda_.2} parent=0 // loop_header_branch
    %17 = sbr.rel (%p15) target = $region8
  $region5: #{_lambda_.2} parent=0 // loop_body
    %s19 = ssub.s32 %s14, 1
    %s20 = ssub.s32 %s14, 2
    %s30 = sadd.s32 1, %s23
    %p31 = scmp.ge.s32.totalorder %s30, 32
    %s32 = scalar_select %p31, 0, %s30
    %s33 = sadd.s32 1, %s22
    %s34 = scalar_select %p31, %s33, %s22
    %p35 = scmp.ge.s32.totalorder %s34, 2
    %s36 = scalar_select %p35, 0, %s34
    %s37 = sadd.s32 1, %s21
    %s38 = scalar_select %p35, %s37, %s21
    %p39 = scmp.ge.s32.totalorder %s38, 1
    %s40 = scalar_select %p39, 0, %s38
    %s41 = ssub.s32 %s22, %s36
    %s42 = ssub.s32 %s23, %s32
    %s43 = sor.u32 %s41, %s42
    %p44 = scmp.eq.s32.totalorder %s43, 0
    %s46 = sadd.s32 %s45, 1
    %s47 = scalar_select %p44, %s45, %s46
    %p50 = pneg %p44
    %p51 = scmp.eq.s32.totalorder %s14, 63
    %p52 = por %p50, %p51
    %p53 = scmp.ne.s32.totalorder %s45, %s48
    %p54 = scmp.eq.s32.totalorder %s14, 0
    %p55 = por %p53, %p54
    %p56 = scmp.ne.s32.totalorder %s45, %s48
    %p57 = scmp.eq.s32.totalorder %s19, 63
    %p58 = por %p56, %p57
    %p59 = scmp.ne.s32.totalorder %s48, %s49
    %p60 = scmp.eq.s32.totalorder %s19, 0
    %p61 = por %p59, %p60
    %p62 = scmp.ne.s32.totalorder %s48, %s49
    %p63 = scmp.eq.s32.totalorder %s20, 63
    %p64 = por %p62, %p63
    %p66 = scmp.ne.s32.totalorder %s49, %s65
    %p67 = scmp.eq.s32.totalorder %s20, 0
    %p68 = por %p66, %p67
    %s69 = sadd.s32 %s23, 1
    %s70 = sadd.s32 %s32, 1
    %s71 = ssub.s32 %s22, %s36
    %s72 = ssub.s32 %s69, %s70
    %s73 = sor.u32 %s71, %s72
    %p74 = scmp.eq.s32.totalorder %s73, 0
    %s76 = sadd.s32 %s75, 1
    %s77 = scalar_select %p74, %s75, %s76
    %p80 = pneg %p74
    %p81 = scmp.eq.s32.totalorder %s14, 63
    %p82 = por %p80, %p81
    %p83 = scmp.ne.s32.totalorder %s75, %s78
    %p84 = scmp.eq.s32.totalorder %s14, 0
    %p85 = por %p83, %p84
    %p86 = scmp.ne.s32.totalorder %s75, %s78
    %p87 = scmp.eq.s32.totalorder %s19, 63
    %p88 = por %p86, %p87
    %p89 = scmp.ne.s32.totalorder %s78, %s79
    %p90 = scmp.eq.s32.totalorder %s19, 0
    %p91 = por %p89, %p90
    %p92 = scmp.ne.s32.totalorder %s78, %s79
    %p93 = scmp.eq.s32.totalorder %s20, 63
    %p94 = por %p92, %p93
    %p96 = scmp.ne.s32.totalorder %s79, %s95
    %p97 = scmp.eq.s32.totalorder %s20, 0
    %p98 = por %p96, %p97
    %s99 = sadd.s32 %s23, 2
    %s100 = sadd.s32 %s32, 2
    %s101 = ssub.s32 %s22, %s36
    %s102 = ssub.s32 %s99, %s100
    %s103 = sor.u32 %s101, %s102
    %p104 = scmp.eq.s32.totalorder %s103, 0
    %s106 = sadd.s32 %s105, 1
    %s107 = scalar_select %p104, %s105, %s106
    %p110 = pneg %p104
    %p111 = scmp.eq.s32.totalorder %s14, 63
    %p112 = por %p110, %p111
    %p113 = scmp.ne.s32.totalorder %s105, %s108
    %p114 = scmp.eq.s32.totalorder %s14, 0
    %p115 = por %p113, %p114
    %p116 = scmp.ne.s32.totalorder %s105, %s108
    %p117 = scmp.eq.s32.totalorder %s19, 63
    %p118 = por %p116, %p117
    %p119 = scmp.ne.s32.totalorder %s108, %s109
    %p120 = scmp.eq.s32.totalorder %s19, 0
    %p121 = por %p119, %p120
    %p122 = scmp.ne.s32.totalorder %s108, %s109
    %p123 = scmp.eq.s32.totalorder %s20, 63
    %p124 = por %p122, %p123
    %p126 = scmp.ne.s32.totalorder %s109, %s125
    %p127 = scmp.eq.s32.totalorder %s20, 0
    %p128 = por %p126, %p127
    %s129 = ssub.s32 %s21, %s40
    %p130 = scmp.eq.s32.totalorder %s129, 0
    %s132 = sadd.s32 %s131, 1
    %s133 = scalar_select %p130, %s131, %s132
    %p136 = pneg %p130
    %p137 = scmp.eq.s32.totalorder %s14, 63
    %p138 = por %p136, %p137
    %p139 = scmp.ne.s32.totalorder %s131, %s134
    %p140 = scmp.eq.s32.totalorder %s14, 0
    %p141 = por %p139, %p140
    %p142 = scmp.ne.s32.totalorder %s131, %s134
    %p143 = scmp.eq.s32.totalorder %s19, 63
    %p144 = por %p142, %p143
    %p145 = scmp.ne.s32.totalorder %s134, %s135
    %p146 = scmp.eq.s32.totalorder %s19, 0
    %p147 = por %p145, %p146
    %p148 = scmp.ne.s32.totalorder %s134, %s135
    %p149 = scmp.eq.s32.totalorder %s20, 63
    %p150 = por %p148, %p149
    %p152 = scmp.ne.s32.totalorder %s135, %s151
    %p153 = scmp.eq.s32.totalorder %s20, 0
    %p154 = por %p152, %p153
    %s155 = ssub.s32 %s21, %s40
    %p156 = scmp.eq.s32.totalorder %s155, 0
    %s158 = sadd.s32 %s157, 1
    %s159 = scalar_select %p156, %s157, %s158
    %p162 = pneg %p156
    %p163 = scmp.eq.s32.totalorder %s14, 63
    %p164 = por %p162, %p163
    %p165 = scmp.ne.s32.totalorder %s157, %s160
    %p166 = scmp.eq.s32.totalorder %s14, 0
    %p167 = por %p165, %p166
    %p168 = scmp.ne.s32.totalorder %s157, %s160
    %p169 = scmp.eq.s32.totalorder %s19, 63
    %p170 = por %p168, %p169
    %p171 = scmp.ne.s32.totalorder %s160, %s161
    %p172 = scmp.eq.s32.totalorder %s19, 0
    %p173 = por %p171, %p172
    %p174 = scmp.ne.s32.totalorder %s160, %s161
    %p175 = scmp.eq.s32.totalorder %s20, 63
    %p176 = por %p174, %p175
    %p178 = scmp.ne.s32.totalorder %s161, %s177
    %p179 = scmp.eq.s32.totalorder %s20, 0
    %p180 = por %p178, %p179
    %s181 = ssub.s32 %s22, %s36
    %s182 = ssub.s32 %s23, %s32
    %s183 = sor.u32 %s181, %s182
    %s184 = ssub.s32 %s21, %s40
    %s185 = sor.u32 %s183, %s184
    %p186 = scmp.eq.s32.totalorder %s185, 0
    %s188 = sadd.s32 %s187, 1
    %s189 = scalar_select %p186, %s187, %s188
    %p192 = pneg %p186
    %p193 = scmp.eq.s32.totalorder %s14, 63
    %p194 = por %p192, %p193
    %p195 = scmp.ne.s32.totalorder %s187, %s190
    %p196 = scmp.eq.s32.totalorder %s14, 0
    %p197 = por %p195, %p196
    %p198 = scmp.ne.s32.totalorder %s187, %s190
    %p199 = scmp.eq.s32.totalorder %s19, 63
    %p200 = por %p198, %p199
    %p201 = scmp.ne.s32.totalorder %s190, %s191
    %p202 = scmp.eq.s32.totalorder %s19, 0
    %p203 = por %p201, %p202
    %p204 = scmp.ne.s32.totalorder %s190, %s191
    %p205 = scmp.eq.s32.totalorder %s20, 63
    %p206 = por %p204, %p205
    %p208 = scmp.ne.s32.totalorder %s191, %s207
    %p209 = scmp.eq.s32.totalorder %s20, 0
    %p210 = por %p208, %p209
    %s211 = ssub.s32 %s22, %s36
    %s212 = ssub.s32 %s23, %s32
    %s213 = sor.u32 %s211, %s212
    %s214 = ssub.s32 %s21, %s40
    %s215 = sor.u32 %s213, %s214
    %p216 = scmp.eq.s32.totalorder %s215, 0
    %s218 = sadd.s32 %s217, 1
    %s219 = scalar_select %p216, %s217, %s218
    %p222 = pneg %p216
    %p223 = scmp.eq.s32.totalorder %s14, 63
    %p224 = por %p222, %p223
    %p225 = scmp.ne.s32.totalorder %s217, %s220
    %p226 = scmp.eq.s32.totalorder %s14, 0
    %p227 = por %p225, %p226
    %p228 = scmp.ne.s32.totalorder %s217, %s220
    %p229 = scmp.eq.s32.totalorder %s19, 63
    %p230 = por %p228, %p229
    %p231 = scmp.ne.s32.totalorder %s220, %s221
    %p232 = scmp.eq.s32.totalorder %s19, 0
    %p233 = por %p231, %p232
    %p234 = scmp.ne.s32.totalorder %s220, %s221
    %p235 = scmp.eq.s32.totalorder %s20, 63
    %p236 = por %p234, %p235
    %p238 = scmp.ne.s32.totalorder %s221, %s237
    %p239 = scmp.eq.s32.totalorder %s20, 0
    %p240 = por %p238, %p239
    %s241 = ssub.s32 %s22, %s36
    %s242 = ssub.s32 %s23, %s32
    %s243 = sor.u32 %s241, %s242
    %s244 = ssub.s32 %s21, %s40
    %s245 = sor.u32 %s243, %s244
    %p246 = scmp.eq.s32.totalorder %s245, 0
    %s248 = sadd.s32 %s247, 1
    %s249 = scalar_select %p246, %s247, %s248
    %p252 = pneg %p246
    %p253 = scmp.eq.s32.totalorder %s14, 63
    %p254 = por %p252, %p253
    %p255 = scmp.ne.s32.totalorder %s247, %s250
    %p256 = scmp.eq.s32.totalorder %s14, 0
    %p257 = por %p255, %p256
    %p258 = scmp.ne.s32.totalorder %s247, %s250
    %p259 = scmp.eq.s32.totalorder %s19, 63
    %p260 = por %p258, %p259
    %p261 = scmp.ne.s32.totalorder %s250, %s251
    %p262 = scmp.eq.s32.totalorder %s19, 0
    %p263 = por %p261, %p262
    %p264 = scmp.ne.s32.totalorder %s250, %s251
    %p265 = scmp.eq.s32.totalorder %s20, 63
    %p266 = por %p264, %p265
    %p268 = scmp.ne.s32.totalorder %s251, %s267
    %p269 = scmp.eq.s32.totalorder %s20, 0
    %p270 = por %p268, %p269
    %p271 = scmp.le.s32.totalorder 1, %s14
    %p272 = scmp.lt.s32.totalorder %s14, 65
    %p273 = pnand %p271, %p272
    %p274 = pneg %p273
    // Predicated region
    $region9: #{_lambda_.2} parent=5 // pred_check
      _
    $region10: #{_lambda_.2} parent=5 // pred_check_branch
      %276 = sbr.rel (%p273) target = $region12
    $region11: #{_lambda_.2} parent=5 // pred_region
      %s277 = ssub.s32 %s14, 1
      // Predicated region
      $region13: #{_lambda_.2} parent=11 // pred_check
        %p278 = pneg %p147
      $region14: #{_lambda_.2} parent=11 // pred_check_branch
        %280 = sbr.rel (%p278) target = $region16
      $region15: #{_lambda_.2} parent=11 // pred_region
        %p281 = scmp.lt.s32.totalorder %s24, 0
        %s282 = scalar_select %p281, %s24, 0
        %s283 = smul.addr %s282, 4
        %s284 = scalar_lea.vmem %s3, %s283
      $region16: #{_lambda_.2} parent=11 // pred_fallthru
        _
      // Predicated region
      $region17: #{_lambda_.2} parent=11 // pred_check
        %p285 = pneg %p173
      $region18: #{_lambda_.2} parent=11 // pred_check_branch
        %287 = sbr.rel (%p285) target = $region20
      $region19: #{_lambda_.2} parent=11 // pred_region
        %p288 = scmp.lt.s32.totalorder %s24, 0
        %s289 = scalar_select %p288, %s24, 0
        %s290 = scalar_lea.vmem %s4, %s289
      $region20: #{_lambda_.2} parent=11 // pred_fallthru
        _
    $region12: #{_lambda_.2} parent=5 // pred_fallthru
      _
    %p291 = scmp.lt.s32.totalorder %s14, 64
    // Predicated region
    $region21: #{_lambda_.2} parent=5 // pred_check
      %p292 = pneg %p291
    $region22: #{_lambda_.2} parent=5 // pred_check_branch
      %294 = sbr.rel (%p292) target = $region24
    $region23: #{_lambda_.2} parent=5 // pred_region
      // Predicated region
      $region25: #{_lambda_.2} parent=23 // pred_check
        %p295 = pneg %p55
      $region26: #{_lambda_.2} parent=23 // pred_check_branch
        %297 = sbr.rel (%p295) target = $region28
      $region27: #{_lambda_.2} parent=23 // pred_region
        %p298 = scmp.lt.s32.totalorder %s22, 1
        %s299 = scalar_select %p298, %s22, 1
        %p300 = scmp.lt.s32.totalorder %s23, 33
        %s301 = scalar_select %p300, %s23, 33
        %s302 = smul.addr %s301, 5
        %s303 = smul.addr %s299, 170
        %s304 = sadd.s32 %s302, %s303
        %s305 = smul.addr %s304, 4
        %s306 = scalar_lea.vmem %s0, %s305
      $region28: #{_lambda_.2} parent=23 // pred_fallthru
        _
      // Predicated region
      $region29: #{_lambda_.2} parent=23 // pred_check
        %p307 = pneg %p85
      $region30: #{_lambda_.2} parent=23 // pred_check_branch
        %309 = sbr.rel (%p307) target = $region32
      $region31: #{_lambda_.2} parent=23 // pred_region
        %s310 = sadd.s32 %s23, 1
        %p311 = scmp.lt.s32.totalorder %s22, 1
        %s312 = scalar_select %p311, %s22, 1
        %p313 = scmp.lt.s32.totalorder %s310, 33
        %s314 = scalar_select %p313, %s310, 33
        %s315 = smul.addr %s314, 5
        %s316 = smul.addr %s312, 170
        %s317 = sadd.s32 %s315, %s316
        %s318 = smul.addr %s317, 4
        %s319 = scalar_lea.vmem %s1, %s318
        %s320 = sadd.s32 %s23, 1
      $region32: #{_lambda_.2} parent=23 // pred_fallthru
        _
      // Predicated region
      $region33: #{_lambda_.2} parent=23 // pred_check
        %p321 = pneg %p115
      $region34: #{_lambda_.2} parent=23 // pred_check_branch
        %323 = sbr.rel (%p321) target = $region36
      $region35: #{_lambda_.2} parent=23 // pred_region
        %s324 = sadd.s32 %s23, 2
        %p325 = scmp.lt.s32.totalorder %s22, 1
        %s326 = scalar_select %p325, %s22, 1
        %p327 = scmp.lt.s32.totalorder %s324, 33
        %s328 = scalar_select %p327, %s324, 33
        %s329 = smul.addr %s328, 5
        %s330 = smul.addr %s326, 170
        %s331 = sadd.s32 %s329, %s330
        %s332 = smul.addr %s331, 4
        %s333 = scalar_lea.vmem %s2, %s332
        %s334 = sadd.s32 %s23, 2
      $region36: #{_lambda_.2} parent=23 // pred_fallthru
        _
    $region24: #{_lambda_.2} parent=5 // pred_fallthru
      _
    %p335 = scmp.le.s32.totalorder 1, %s14
    %p336 = scmp.lt.s32.totalorder %s14, 65
    %p337 = pnand %p335, %p336
    %p338 = pneg %p337
    // Predicated region
    $region37: #{_lambda_.2} parent=5 // pred_check
      _
    $region38: #{_lambda_.2} parent=5 // pred_check_branch
      %340 = sbr.rel (%p337) target = $region40
    $region39: #{_lambda_.2} parent=5 // pred_region
      %s341 = ssub.s32 %s14, 1
      %p342 = scmp.lt.s32.totalorder %s25, 1
      %s343 = scalar_select %p342, %s25, 1
      %p344 = scmp.lt.s32.totalorder %s26, 33
      %s345 = scalar_select %p344, %s26, 33
      %s346 = smul.addr %s345, 5
      %s347 = smul.addr %s343, 170
      %s348 = sadd.s32 %s346, %s347
      %s349 = smul.addr %s348, 4
      %s350 = scalar_lea.vmem %s0, %s349
      %p351 = pneg %p61
      %p352 = pneg %p58
      %s353 = sadd.s32 %s26, 1
      %p354 = scmp.lt.s32.totalorder %s25, 1
      %s355 = scalar_select %p354, %s25, 1
      %p356 = scmp.lt.s32.totalorder %s353, 33
      %s357 = scalar_select %p356, %s353, 33
      %s358 = smul.addr %s357, 5
      %s359 = smul.addr %s355, 170
      %s360 = sadd.s32 %s358, %s359
      %s361 = smul.addr %s360, 4
      %s362 = scalar_lea.vmem %s1, %s361
      %p363 = pneg %p91
      %p364 = pneg %p88
      %s365 = sadd.s32 %s26, 2
      %p366 = scmp.lt.s32.totalorder %s25, 1
      %s367 = scalar_select %p366, %s25, 1
      %p368 = scmp.lt.s32.totalorder %s365, 33
      %s369 = scalar_select %p368, %s365, 33
      %s370 = smul.addr %s369, 5
      %s371 = smul.addr %s367, 170
      %s372 = sadd.s32 %s370, %s371
      %s373 = smul.addr %s372, 4
      %s374 = scalar_lea.vmem %s2, %s373
      %p375 = pneg %p121
      %p376 = pneg %p118
      %p377 = scmp.lt.s32.totalorder %s24, 0
      %s378 = scalar_select %p377, %s24, 0
      %s379 = smul.addr %s378, 4
      %s380 = scalar_lea.vmem %s3, %s379
      %p381 = pneg %p147
      %p382 = pneg %p144
      %p383 = scmp.lt.s32.totalorder %s24, 0
      %s384 = scalar_select %p383, %s24, 0
      %s385 = scalar_lea.vmem %s4, %s384
      %p386 = pneg %p173
      %p387 = pneg %p170
      %p388 = pneg %p203
      %p389 = pneg %p200
      %p390 = scmp.lt.s32.totalorder %s25, 1
      %s391 = scalar_select %p390, %s25, 1
      %p392 = scmp.lt.s32.totalorder %s26, 31
      %s393 = scalar_select %p392, %s26, 31
      %p394 = scmp.lt.s32.totalorder %s24, 0
      %s395 = scalar_select %p394, %s24, 0
      %s396 = smul.addr %s393, 4
      %s397 = sadd.s32 %s395, %s396
      %s398 = smul.addr %s391, 128
      %s399 = sadd.s32 %s397, %s398
      %s400 = smul.addr %s399, 8
      %s401 = scalar_lea.vmem %s5, %s400
      %p402 = pneg %p233
      %p403 = pneg %p230
      %p404 = scmp.lt.s32.totalorder %s25, 1
      %s405 = scalar_select %p404, %s25, 1
      %p406 = scmp.lt.s32.totalorder %s26, 31
      %s407 = scalar_select %p406, %s26, 31
      %p408 = scmp.lt.s32.totalorder %s24, 0
      %s409 = scalar_select %p408, %s24, 0
      %s410 = sadd.s32 %s409, %s407
      %s411 = smul.addr %s405, 32
      %s412 = sadd.s32 %s410, %s411
      %s413 = scalar_lea.vmem %s6, %s412
      %p414 = pneg %p263
      %p415 = pneg %p260
      %p416 = scmp.lt.s32.totalorder %s25, 1
      %s417 = scalar_select %p416, %s25, 1
      %p418 = scmp.lt.s32.totalorder %s26, 31
      %s419 = scalar_select %p418, %s26, 31
      %p420 = scmp.lt.s32.totalorder %s24, 0
      %s421 = scalar_select %p420, %s24, 0
      %s422 = sadd.s32 %s421, %s419
      %s423 = smul.addr %s417, 32
      %s424 = sadd.s32 %s422, %s423
      %s425 = scalar_lea.vmem %s7, %s424
      %p426 = scmp.lt.s32.totalorder %s25, 1
      %s427 = scalar_select %p426, %s25, 1
      %p428 = scmp.lt.s32.totalorder %s26, 33
      %s429 = scalar_select %p428, %s26, 33
      %s430 = smul.addr %s429, 5
      %s431 = smul.addr %s427, 170
      %s432 = sadd.s32 %s430, %s431
      %s433 = smul.addr %s432, 4
      %s434 = scalar_lea.vmem %s0, %s433
      %s435 = sadd.s32 %s26, 1
      %p436 = scmp.lt.s32.totalorder %s25, 1
      %s437 = scalar_select %p436, %s25, 1
      %p438 = scmp.lt.s32.totalorder %s435, 33
      %s439 = scalar_select %p438, %s435, 33
      %s440 = smul.addr %s439, 5
      %s441 = smul.addr %s437, 170
      %s442 = sadd.s32 %s440, %s441
      %s443 = smul.addr %s442, 4
      %s444 = scalar_lea.vmem %s1, %s443
      %s445 = sadd.s32 %s26, 1
      %s446 = sadd.s32 %s26, 2
      %p447 = scmp.lt.s32.totalorder %s25, 1
      %s448 = scalar_select %p447, %s25, 1
      %p449 = scmp.lt.s32.totalorder %s446, 33
      %s450 = scalar_select %p449, %s446, 33
      %s451 = smul.addr %s450, 5
      %s452 = smul.addr %s448, 170
      %s453 = sadd.s32 %s451, %s452
      %s454 = smul.addr %s453, 4
      %s455 = scalar_lea.vmem %s2, %s454
      %s456 = sadd.s32 %s26, 2
      %p457 = scmp.lt.s32.totalorder %s24, 0
      %s458 = scalar_select %p457, %s24, 0
      %s459 = smul.addr %s458, 4
      %s460 = scalar_lea.vmem %s3, %s459
      %p461 = scmp.lt.s32.totalorder %s24, 0
      %s462 = scalar_select %p461, %s24, 0
      %s463 = scalar_lea.vmem %s4, %s462
      %p464 = scmp.lt.s32.totalorder %s25, 1
      %s465 = scalar_select %p464, %s25, 1
      %p466 = scmp.lt.s32.totalorder %s26, 31
      %s467 = scalar_select %p466, %s26, 31
      %p468 = scmp.lt.s32.totalorder %s24, 0
      %s469 = scalar_select %p468, %s24, 0
      %s470 = smul.addr %s467, 4
      %s471 = sadd.s32 %s469, %s470
      %s472 = smul.addr %s465, 128
      %s473 = sadd.s32 %s471, %s472
      %s474 = smul.addr %s473, 8
      %s475 = scalar_lea.vmem %s5, %s474
      %p476 = scmp.lt.s32.totalorder %s25, 1
      %s477 = scalar_select %p476, %s25, 1
      %p478 = scmp.lt.s32.totalorder %s26, 31
      %s479 = scalar_select %p478, %s26, 31
      %p480 = scmp.lt.s32.totalorder %s24, 0
      %s481 = scalar_select %p480, %s24, 0
      %s482 = sadd.s32 %s481, %s479
      %s483 = smul.addr %s477, 32
      %s484 = sadd.s32 %s482, %s483
      %s485 = scalar_lea.vmem %s6, %s484
      %p486 = scmp.lt.s32.totalorder %s25, 1
      %s487 = scalar_select %p486, %s25, 1
      %p488 = scmp.lt.s32.totalorder %s26, 31
      %s489 = scalar_select %p488, %s26, 31
      %p490 = scmp.lt.s32.totalorder %s24, 0
      %s491 = scalar_select %p490, %s24, 0
      %s492 = sadd.s32 %s491, %s489
      %s493 = smul.addr %s487, 32
      %s494 = sadd.s32 %s492, %s493
      %s495 = scalar_lea.vmem %s7, %s494
      %v497 = vld [vmem:[%s434] sm:$0xf]
      %v498 = vld [vmem:[%s434 + $0x4] sm:$0xf]
      %v499 = vld [vmem:[%s434 + $0x8] sm:$0xf]
      %v500 = vld [vmem:[%s434 + $0xc] sm:$0xf]
      %v501 = vld [vmem:[%s460] sm:$0xf]
      %v502 = vld [vmem:[%s460 + $0x4] sm:$0xf]
      %v503 = vld [vmem:[%s460 + $0x8] sm:$0xf]
      %v504 = vld [vmem:[%s460 + $0xc] sm:$0xf]
      %v505 = vld [vmem:[%s460 + $0x10] sm:$0xf]
      %v506 = vld [vmem:[%s460 + $0x14] sm:$0xf]
      %v507 = vld [vmem:[%s460 + $0x18] sm:$0xf]
      %v508 = vld [vmem:[%s460 + $0x1c] sm:$0xf]
      %v509 = vld [vmem:[%s434 + $0x10] sm:$0x1]
      %s510 = scalar_lea.vmem %s460, 32
      %v511 = vld [vmem:[%s510] sm:$0xf]
      %v512 = vld [vmem:[%s510 + $0x4] sm:$0xf]
      %v513 = vld [vmem:[%s510 + $0x8] sm:$0xf]
      %v514 = vld [vmem:[%s510 + $0xc] sm:$0xf]
      %v515 = vld [vmem:[%s510 + $0x10] sm:$0xf]
      %v516 = vld [vmem:[%s510 + $0x14] sm:$0xf]
      %v517 = vld [vmem:[%s510 + $0x18] sm:$0xf]
      %v518 = vld [vmem:[%s510 + $0x1c] sm:$0xf]
      %v524 = vunpack.c.l.b16 %v497
      %v525 = vunpack.c.l.b16 %v498
      %v526 = vunpack.c.l.b16 %v499
      %v527 = vunpack.c.l.b16 %v500
      %v528 = vunpack.c.l.b16 %v509
      %v529 = vpack.c.b16 %v525, %v524
      %v530 = vpack.c.b16 %v527, %v526
      %v531 = vpack.c.b16 %v528, %v528
      %vm532 = vsmask.f32 7424
      %v534 = vshrl.u32 %v529, 16
      %v536 = vshll.u32 %v529, 16
      %v538 = vrot.slane %v536, 1
      %v539 = vor.u32 %v534, %v538
      %v541 = vshll.u32 %v530, 16
      %v543 = vrot.slane %v541, 1
      %v544 = vsel %vm532, %v539, %v543
      %v545 = vshrl.u32 %v530, 16
      %v547 = vor.u32 %v545, %v543
      %v549 = vshll.u32 %v531, 16
      %v551 = vrot.slane %v549, 1
      %v552 = vsel %vm532, %v547, %v551
      %v561 = vunpack.c.l.b16 %v511
      %v562 = vunpack.c.l.b16 %v512
      %v563 = vunpack.c.l.b16 %v513
      %v564 = vunpack.c.l.b16 %v514
      %v565 = vunpack.c.l.b16 %v515
      %v566 = vunpack.c.l.b16 %v516
      %v567 = vunpack.c.l.b16 %v517
      %v568 = vunpack.c.l.b16 %v518
      %v569 = vpack.c.b16 %v562, %v561
      %v570 = vpack.c.b16 %v564, %v563
      %v571 = vpack.c.b16 %v566, %v565
      %v572 = vpack.c.b16 %v568, %v567
      %vm577 = vcmask 523264
      %v579 = vsel %vm577, %v544, 0
      %v582 = vsel %vm577, %v552, 0
      %584 = vmatprep.subr.bf16.mxu0 0
      %585 = vmatpush1.bf16.msra.mxu0 %v569
      %586 = vmatprep.subr.bf16.mxu0 0
      %587 = vmatpush1.bf16.msra.mxu0 %v570
      %588 = vmatprep.subr.bf16.mxu0 0
      %589 = vmatpush1.bf16.msra.mxu0 %v571
      %590 = vmatprep.subr.bf16.mxu0 0
      %591 = vmatpush1.bf16.msra.mxu0 %v572
      %592 = vmatprep.subr.bf16.mxu0 0
      %593 = vmatpush1.bf16.msra.mxu0 0
      %594 = vmatprep.subr.bf16.mxu0 0
      %595 = vmatpush1.bf16.msra.mxu0 0
      %596 = vmatprep.subr.bf16.mxu0 0
      %597 = vmatpush1.bf16.msra.mxu0 0
      %598 = vmatprep.subr.bf16.mxu0 0
      %599 = vmatpush1.bf16.msra.mxu0 0
      %600 = vmatprep.subr.bf16.mxu0 0
      %601 = vmatpush1.bf16.msra.mxu0 0
      %602 = vmatprep.subr.bf16.mxu0 0
      %603 = vmatpush1.bf16.msra.mxu0 0
      %604 = vmatprep.subr.bf16.mxu0 0
      %605 = vmatpush1.bf16.msra.mxu0 0
      %606 = vmatprep.subr.bf16.mxu0 0
      %607 = vmatpush1.bf16.msra.mxu0 0
      %608 = vmatprep.subr.bf16.mxu0 0
      %609 = vmatpush1.bf16.msra.mxu0 0
      %610 = vmatprep.subr.bf16.mxu0 0
      %611 = vmatpush1.bf16.msra.mxu0 0
      %612 = vmatprep.subr.bf16.mxu0 0
      %613 = vmatpush1.bf16.msra.mxu0 0
      %614 = vmatprep.subr.bf16.mxu0 0
      %615 = vmatpush1.bf16.msra.mxu0 0
      %616 = vmatprep.mubr.bf16.mxu0 0
      %617 = vmatmul.mubr.bf16.gmra.mrb[0].mxu0 %v579
      %v618 = vpop.f32.mrb[0].mxu0
      %v619 = vadd.f32 0.0, %v618
      %v620 = vpop.f32.mrb[0].mxu0
      %v621 = vpop.f32.mrb[0].mxu0
      %v622 = vadd.f32 0.0, %v621
      %v623 = vpop.f32.mrb[0].mxu0
      %624 = vmatprep.mubr.bf16.mxu0 0
      %625 = vmatmul.mubr.bf16.gmra.mrb[0].mxu0 %v582
      %v626 = vpop.f32.mrb[0].mxu0
      %v627 = vadd.f32 0.0, %v626
      %v628 = vpop.f32.mrb[0].mxu0
      %v629 = vpop.f32.mrb[0].mxu0
      %v630 = vadd.f32 0.0, %v629
      %v631 = vpop.f32.mrb[0].mxu0
      %632 = vdwg.mxu0
      %v641 = vunpack.c.l.b16 %v501
      %v642 = vunpack.c.l.b16 %v502
      %v643 = vunpack.c.l.b16 %v503
      %v644 = vunpack.c.l.b16 %v504
      %v645 = vunpack.c.l.b16 %v505
      %v646 = vunpack.c.l.b16 %v506
      %v647 = vunpack.c.l.b16 %v507
      %v648 = vunpack.c.l.b16 %v508
      %v649 = vpack.c.b16 %v642, %v641
      %v650 = vpack.c.b16 %v644, %v643
      %v651 = vpack.c.b16 %v646, %v645
      %v652 = vpack.c.b16 %v648, %v647
      %v657 = vsel %vm577, %v529, 0
      %v659 = vsel %vm577, %v530, 0
      %661 = vmatprep.subr.bf16.mxu0 0
      %662 = vmatpush1.bf16.msra.mxu0 %v649
      %663 = vmatprep.subr.bf16.mxu0 0
      %664 = vmatpush1.bf16.msra.mxu0 %v650
      %665 = vmatprep.subr.bf16.mxu0 0
      %666 = vmatpush1.bf16.msra.mxu0 %v651
      %667 = vmatprep.subr.bf16.mxu0 0
      %668 = vmatpush1.bf16.msra.mxu0 %v652
      %669 = vmatprep.subr.bf16.mxu0 0
      %670 = vmatpush1.bf16.msra.mxu0 0
      %671 = vmatprep.subr.bf16.mxu0 0
      %672 = vmatpush1.bf16.msra.mxu0 0
      %673 = vmatprep.subr.bf16.mxu0 0
      %674 = vmatpush1.bf16.msra.mxu0 0
      %675 = vmatprep.subr.bf16.mxu0 0
      %676 = vmatpush1.bf16.msra.mxu0 0
      %677 = vmatprep.subr.bf16.mxu0 0
      %678 = vmatpush1.bf16.msra.mxu0 0
      %679 = vmatprep.subr.bf16.mxu0 0
      %680 = vmatpush1.bf16.msra.mxu0 0
      %681 = vmatprep.subr.bf16.mxu0 0
      %682 = vmatpush1.bf16.msra.mxu0 0
      %683 = vmatprep.subr.bf16.mxu0 0
      %684 = vmatpush1.bf16.msra.mxu0 0
      %685 = vmatprep.subr.bf16.mxu0 0
      %686 = vmatpush1.bf16.msra.mxu0 0
      %687 = vmatprep.subr.bf16.mxu0 0
      %688 = vmatpush1.bf16.msra.mxu0 0
      %689 = vmatprep.subr.bf16.mxu0 0
      %690 = vmatpush1.bf16.msra.mxu0 0
      %691 = vmatprep.subr.bf16.mxu0 0
      %692 = vmatpush1.bf16.msra.mxu0 0
      %693 = vmatprep.mubr.bf16.mxu0 0
      %694 = vmatmul.mubr.bf16.gmra.mrb[0].mxu0 %v657
      %v695 = vpop.f32.mrb[0].mxu0
      %v696 = vadd.f32 %v619, %v695
      %v697 = vpop.f32.mrb[0].mxu0
      %v698 = vpop.f32.mrb[0].mxu0
      %v699 = vadd.f32 %v622, %v698
      %v700 = vpop.f32.mrb[0].mxu0
      %701 = vmatprep.mubr.bf16.mxu0 0
      %702 = vmatmul.mubr.bf16.gmra.mrb[0].mxu0 %v659
      %v703 = vpop.f32.mrb[0].mxu0
      %v704 = vadd.f32 %v627, %v703
      %v705 = vpop.f32.mrb[0].mxu0
      %v706 = vpop.f32.mrb[0].mxu0
      %v707 = vadd.f32 %v630, %v706
      %v708 = vpop.f32.mrb[0].mxu0
      %709 = vdwg.mxu0
      %v710 = vld [vmem:[%s434] sm:$0xe]
      %s711 = scalar_lea.vmem %s460, 64
      %v712 = vld [vmem:[%s711] sm:$0xf]
      %v713 = vld [vmem:[%s711 + $0x4] sm:$0xf]
      %v714 = vld [vmem:[%s711 + $0x8] sm:$0xf]
      %v715 = vld [vmem:[%s711 + $0xc] sm:$0xf]
      %v716 = vld [vmem:[%s711 + $0x10] sm:$0xf]
      %v717 = vld [vmem:[%s711 + $0x14] sm:$0xf]
      %v718 = vld [vmem:[%s711 + $0x18] sm:$0xf]
      %v719 = vld [vmem:[%s711 + $0x1c] sm:$0xf]
      %v721 = vunpack.c.l.b16 %v710
      %v722 = vpack.c.b16 %v525, %v721
      %vm723 = vcmask 1046528
      %v724 = vrot.slane %v722, 1
      %v725 = vrot.slane %v530, 1
      %v726 = vsel %vm723, %v724, %v725
      %v727 = vrot.slane %v531, 1
      %v728 = vsel %vm723, %v725, %v727
      %v737 = vunpack.c.l.b16 %v712
      %v738 = vunpack.c.l.b16 %v713
      %v739 = vunpack.c.l.b16 %v714
      %v740 = vunpack.c.l.b16 %v715
      %v741 = vunpack.c.l.b16 %v716
      %v742 = vunpack.c.l.b16 %v717
      %v743 = vunpack.c.l.b16 %v718
      %v744 = vunpack.c.l.b16 %v719
      %v745 = vpack.c.b16 %v738, %v737
      %v746 = vpack.c.b16 %v740, %v739
      %v747 = vpack.c.b16 %v742, %v741
      %v748 = vpack.c.b16 %v744, %v743
      %v754 = vsel %vm577, %v726, 0
      %v757 = vsel %vm577, %v728, 0
      %759 = vmatprep.subr.bf16.mxu0 0
      %760 = vmatpush1.bf16.msra.mxu0 %v745
      %761 = vmatprep.subr.bf16.mxu0 0
      %762 = vmatpush1.bf16.msra.mxu0 %v746
      %763 = vmatprep.subr.bf16.mxu0 0
      %764 = vmatpush1.bf16.msra.mxu0 %v747
      %765 = vmatprep.subr.bf16.mxu0 0
      %766 = vmatpush1.bf16.msra.mxu0 %v748
      %767 = vmatprep.subr.bf16.mxu0 0
      %768 = vmatpush1.bf16.msra.mxu0 0
      %769 = vmatprep.subr.bf16.mxu0 0
      %770 = vmatpush1.bf16.msra.mxu0 0
      %771 = vmatprep.subr.bf16.mxu0 0
      %772 = vmatpush1.bf16.msra.mxu0 0
      %773 = vmatprep.subr.bf16.mxu0 0
      %774 = vmatpush1.bf16.msra.mxu0 0
      %775 = vmatprep.subr.bf16.mxu0 0
      %776 = vmatpush1.bf16.msra.mxu0 0
      %777 = vmatprep.subr.bf16.mxu0 0
      %778 = vmatpush1.bf16.msra.mxu0 0
      %779 = vmatprep.subr.bf16.mxu0 0
      %780 = vmatpush1.bf16.msra.mxu0 0
      %781 = vmatprep.subr.bf16.mxu0 0
      %782 = vmatpush1.bf16.msra.mxu0 0
      %783 = vmatprep.subr.bf16.mxu0 0
      %784 = vmatpush1.bf16.msra.mxu0 0
      %785 = vmatprep.subr.bf16.mxu0 0
      %786 = vmatpush1.bf16.msra.mxu0 0
      %787 = vmatprep.subr.bf16.mxu0 0
      %788 = vmatpush1.bf16.msra.mxu0 0
      %789 = vmatprep.subr.bf16.mxu0 0
      %790 = vmatpush1.bf16.msra.mxu0 0
      %791 = vmatprep.mubr.bf16.mxu0 0
      %792 = vmatmul.mubr.bf16.gmra.mrb[0].mxu0 %v754
      %v793 = vpop.f32.mrb[0].mxu0
      %v794 = vadd.f32 0.0, %v793
      %v795 = vpop.f32.mrb[0].mxu0
      %v796 = vpop.f32.mrb[0].mxu0
      %v797 = vadd.f32 0.0, %v796
      %v798 = vpop.f32.mrb[0].mxu0
      %799 = vmatprep.mubr.bf16.mxu0 0
      %800 = vmatmul.mubr.bf16.gmra.mrb[0].mxu0 %v757
      %v801 = vpop.f32.mrb[0].mxu0
      %v802 = vadd.f32 0.0, %v801
      %v803 = vpop.f32.mrb[0].mxu0
      %v804 = vpop.f32.mrb[0].mxu0
      %v805 = vadd.f32 0.0, %v804
      %v806 = vpop.f32.mrb[0].mxu0
      %807 = vdwg.mxu0
      %v808 = vadd.f32 %v696, %v794
      %v809 = vadd.f32 %v699, %v797
      %v810 = vadd.f32 %v704, %v802
      %v811 = vadd.f32 %v707, %v805
      %v812 = vld [vmem:[%s444] sm:$0xf]
      %v813 = vld [vmem:[%s444 + $0x4] sm:$0xf]
      %v814 = vld [vmem:[%s444 + $0x8] sm:$0xf]
      %v815 = vld [vmem:[%s444 + $0xc] sm:$0xf]
      %s816 = scalar_lea.vmem %s460, 96
      %v817 = vld [vmem:[%s816] sm:$0xf]
      %v818 = vld [vmem:[%s816 + $0x4] sm:$0xf]
      %v819 = vld [vmem:[%s816 + $0x8] sm:$0xf]
      %v820 = vld [vmem:[%s816 + $0xc] sm:$0xf]
      %v821 = vld [vmem:[%s816 + $0x10] sm:$0xf]
      %v822 = vld [vmem:[%s816 + $0x14] sm:$0xf]
      %v823 = vld [vmem:[%s816 + $0x18] sm:$0xf]
      %v824 = vld [vmem:[%s816 + $0x1c] sm:$0xf]
      %v829 = vunpack.c.l.b16 %v812
      %v830 = vunpack.c.l.b16 %v813
      %v831 = vunpack.c.l.b16 %v814
      %v832 = vunpack.c.l.b16 %v815
      %v833 = vpack.c.b16 %v830, %v829
      %v834 = vpack.c.b16 %v832, %v831
      %v843 = vunpack.c.l.b16 %v817
      %v844 = vunpack.c.l.b16 %v818
      %v845 = vunpack.c.l.b16 %v819
      %v846 = vunpack.c.l.b16 %v820
      %v847 = vunpack.c.l.b16 %v821
      %v848 = vunpack.c.l.b16 %v822
      %v849 = vunpack.c.l.b16 %v823
      %v850 = vunpack.c.l.b16 %v824
      %v851 = vpack.c.b16 %v844, %v843
      %v852 = vpack.c.b16 %v846, %v845
      %v853 = vpack.c.b16 %v848, %v847
      %v854 = vpack.c.b16 %v850, %v849
      %v860 = vsel %vm577, %v833, 0
      %v863 = vsel %vm577, %v834, 0
      %865 = vmatprep.subr.bf16.mxu0 0
      %866 = vmatpush1.bf16.msra.mxu0 %v851
      %867 = vmatprep.subr.bf16.mxu0 0
      %868 = vmatpush1.bf16.msra.mxu0 %v852
      %869 = vmatprep.subr.bf16.mxu0 0
      %870 = vmatpush1.bf16.msra.mxu0 %v853
      %871 = vmatprep.subr.bf16.mxu0 0
      %872 = vmatpush1.bf16.msra.mxu0 %v854
      %873 = vmatprep.subr.bf16.mxu0 0
      %874 = vmatpush1.bf16.msra.mxu0 0
      %875 = vmatprep.subr.bf16.mxu0 0
      %876 = vmatpush1.bf16.msra.mxu0 0
      %877 = vmatprep.subr.bf16.mxu0 0
      %878 = vmatpush1.bf16.msra.mxu0 0
      %879 = vmatprep.subr.bf16.mxu0 0
      %880 = vmatpush1.bf16.msra.mxu0 0
      %881 = vmatprep.subr.bf16.mxu0 0
      %882 = vmatpush1.bf16.msra.mxu0 0
      %883 = vmatprep.subr.bf16.mxu0 0
      %884 = vmatpush1.bf16.msra.mxu0 0
      %885 = vmatprep.subr.bf16.mxu0 0
      %886 = vmatpush1.bf16.msra.mxu0 0
      %887 = vmatprep.subr.bf16.mxu0 0
      %888 = vmatpush1.bf16.msra.mxu0 0
      %889 = vmatprep.subr.bf16.mxu0 0
      %890 = vmatpush1.bf16.msra.mxu0 0
      %891 = vmatprep.subr.bf16.mxu0 0
      %892 = vmatpush1.bf16.msra.mxu0 0
      %893 = vmatprep.subr.bf16.mxu0 0
      %894 = vmatpush1.bf16.msra.mxu0 0
      %895 = vmatprep.subr.bf16.mxu0 0
      %896 = vmatpush1.bf16.msra.mxu0 0
      %897 = vmatprep.mubr.bf16.mxu0 0
      %898 = vmatmul.mubr.bf16.gmra.mrb[0].mxu0 %v860
      %v899 = vpop.f32.mrb[0].mxu0
      %v900 = vadd.f32 0.0, %v899
      %v901 = vpop.f32.mrb[0].mxu0
      %v902 = vpop.f32.mrb[0].mxu0
      %v903 = vadd.f32 0.0, %v902
      %v904 = vpop.f32.mrb[0].mxu0
      %905 = vmatprep.mubr.bf16.mxu0 0
      %906 = vmatmul.mubr.bf16.gmra.mrb[0].mxu0 %v863
      %v907 = vpop.f32.mrb[0].mxu0
      %v908 = vadd.f32 0.0, %v907
      %v909 = vpop.f32.mrb[0].mxu0
      %v910 = vpop.f32.mrb[0].mxu0
      %v911 = vadd.f32 0.0, %v910
      %v912 = vpop.f32.mrb[0].mxu0
      %913 = vdwg.mxu0
      %v914 = vadd.f32 %v808, %v900
      %v915 = vadd.f32 %v809, %v903
      %v916 = vadd.f32 %v810, %v908
      %v917 = vadd.f32 %v811, %v911
      %v918 = vld [vmem:[%s444] sm:$0xf]
      %v919 = vld [vmem:[%s444 + $0x4] sm:$0xf]
      %v920 = vld [vmem:[%s444 + $0x8] sm:$0xf]
      %v921 = vld [vmem:[%s444 + $0xc] sm:$0xf]
      %v922 = vld [vmem:[%s444 + $0x10] sm:$0x1]
      %s923 = scalar_lea.vmem %s460, 128
      %v924 = vld [vmem:[%s923] sm:$0xf]
      %v925 = vld [vmem:[%s923 + $0x4] sm:$0xf]
      %v926 = vld [vmem:[%s923 + $0x8] sm:$0xf]
      %v927 = vld [vmem:[%s923 + $0xc] sm:$0xf]
      %v928 = vld [vmem:[%s923 + $0x10] sm:$0xf]
      %v929 = vld [vmem:[%s923 + $0x14] sm:$0xf]
      %v930 = vld [vmem:[%s923 + $0x18] sm:$0xf]
      %v931 = vld [vmem:[%s923 + $0x1c] sm:$0xf]
      %v937 = vunpack.c.l.b16 %v918
      %v938 = vunpack.c.l.b16 %v919
      %v939 = vunpack.c.l.b16 %v920
      %v940 = vunpack.c.l.b16 %v921
      %v941 = vunpack.c.l.b16 %v922
      %v942 = vpack.c.b16 %v938, %v937
      %v943 = vpack.c.b16 %v940, %v939
      %v944 = vpack.c.b16 %v941, %v941
      %v946 = vshrl.u32 %v942, 16
      %v948 = vshll.u32 %v942, 16
      %v950 = vrot.slane %v948, 1
      %v951 = vor.u32 %v946, %v950
      %v953 = vshll.u32 %v943, 16
      %v955 = vrot.slane %v953, 1
      %v956 = vsel %vm532, %v951, %v955
      %v957 = vshrl.u32 %v943, 16
      %v959 = vor.u32 %v957, %v955
      %v961 = vshll.u32 %v944, 16
      %v963 = vrot.slane %v961, 1
      %v964 = vsel %vm532, %v959, %v963
      %v973 = vunpack.c.l.b16 %v924
      %v974 = vunpack.c.l.b16 %v925
      %v975 = vunpack.c.l.b16 %v926
      %v976 = vunpack.c.l.b16 %v927
      %v977 = vunpack.c.l.b16 %v928
      %v978 = vunpack.c.l.b16 %v929
      %v979 = vunpack.c.l.b16 %v930
      %v980 = vunpack.c.l.b16 %v931
      %v981 = vpack.c.b16 %v974, %v973
      %v982 = vpack.c.b16 %v976, %v975
      %v983 = vpack.c.b16 %v978, %v977
      %v984 = vpack.c.b16 %v980, %v979
      %v990 = vsel %vm577, %v956, 0
      %v993 = vsel %vm577, %v964, 0
      %995 = vmatprep.subr.bf16.mxu0 0
      %996 = vmatpush1.bf16.msra.mxu0 %v981
      %997 = vmatprep.subr.bf16.mxu0 0
      %998 = vmatpush1.bf16.msra.mxu0 %v982
      %999 = vmatprep.subr.bf16.mxu0 0
      %1000 = vmatpush1.bf16.msra.mxu0 %v983
      %1001 = vmatprep.subr.bf16.mxu0 0
      %1002 = vmatpush1.bf16.msra.mxu0 %v984
      %1003 = vmatprep.subr.bf16.mxu0 0
      %1004 = vmatpush1.bf16.msra.mxu0 0
      %1005 = vmatprep.subr.bf16.mxu0 0
      %1006 = vmatpush1.bf16.msra.mxu0 0
      %1007 = vmatprep.subr.bf16.mxu0 0
      %1008 = vmatpush1.bf16.msra.mxu0 0
      %1009 = vmatprep.subr.bf16.mxu0 0
      %1010 = vmatpush1.bf16.msra.mxu0 0
      %1011 = vmatprep.subr.bf16.mxu0 0
      %1012 = vmatpush1.bf16.msra.mxu0 0
      %1013 = vmatprep.subr.bf16.mxu0 0
      %1014 = vmatpush1.bf16.msra.mxu0 0
      %1015 = vmatprep.subr.bf16.mxu0 0
      %1016 = vmatpush1.bf16.msra.mxu0 0
      %1017 = vmatprep.subr.bf16.mxu0 0
      %1018 = vmatpush1.bf16.msra.mxu0 0
      %1019 = vmatprep.subr.bf16.mxu0 0
      %1020 = vmatpush1.bf16.msra.mxu0 0
      %1021 = vmatprep.subr.bf16.mxu0 0
      %1022 = vmatpush1.bf16.msra.mxu0 0
      %1023 = vmatprep.subr.bf16.mxu0 0
      %1024 = vmatpush1.bf16.msra.mxu0 0
      %1025 = vmatprep.subr.bf16.mxu0 0
      %1026 = vmatpush1.bf16.msra.mxu0 0
      %1027 = vmatprep.mubr.bf16.mxu0 0
      %1028 = vmatmul.mubr.bf16.gmra.mrb[0].mxu0 %v990
      %v1029 = vpop.f32.mrb[0].mxu0
      %v1030 = vadd.f32 0.0, %v1029
      %v1031 = vpop.f32.mrb[0].mxu0
      %v1032 = vpop.f32.mrb[0].mxu0
      %v1033 = vadd.f32 0.0, %v1032
      %v1034 = vpop.f32.mrb[0].mxu0
      %1035 = vmatprep.mubr.bf16.mxu0 0
      %1036 = vmatmul.mubr.bf16.gmra.mrb[0].mxu0 %v993
      %v1037 = vpop.f32.mrb[0].mxu0
      %v1038 = vadd.f32 0.0, %v1037
      %v1039 = vpop.f32.mrb[0].mxu0
      %v1040 = vpop.f32.mrb[0].mxu0
      %v1041 = vadd.f32 0.0, %v1040
      %v1042 = vpop.f32.mrb[0].mxu0
      %1043 = vdwg.mxu0
      %v1044 = vadd.f32 %v914, %v1030
      %v1045 = vadd.f32 %v915, %v1033
      %v1046 = vadd.f32 %v916, %v1038
      %v1047 = vadd.f32 %v917, %v1041
      %v1048 = vld [vmem:[%s444] sm:$0xe]
      %s1049 = scalar_lea.vmem %s460, 160
      %v1050 = vld [vmem:[%s1049] sm:$0xf]
      %v1051 = vld [vmem:[%s1049 + $0x4] sm:$0xf]
      %v1052 = vld [vmem:[%s1049 + $0x8] sm:$0xf]
      %v1053 = vld [vmem:[%s1049 + $0xc] sm:$0xf]
      %v1054 = vld [vmem:[%s1049 + $0x10] sm:$0xf]
      %v1055 = vld [vmem:[%s1049 + $0x14] sm:$0xf]
      %v1056 = vld [vmem:[%s1049 + $0x18] sm:$0xf]
      %v1057 = vld [vmem:[%s1049 + $0x1c] sm:$0xf]
      %v1059 = vunpack.c.l.b16 %v1048
      %v1060 = vpack.c.b16 %v938, %v1059
      %v1061 = vrot.slane %v1060, 1
      %v1062 = vrot.slane %v943, 1
      %v1063 = vsel %vm723, %v1061, %v1062
      %v1064 = vrot.slane %v944, 1
      %v1065 = vsel %vm723, %v1062, %v1064
      %v1074 = vunpack.c.l.b16 %v1050
      %v1075 = vunpack.c.l.b16 %v1051
      %v1076 = vunpack.c.l.b16 %v1052
      %v1077 = vunpack.c.l.b16 %v1053
      %v1078 = vunpack.c.l.b16 %v1054
      %v1079 = vunpack.c.l.b16 %v1055
      %v1080 = vunpack.c.l.b16 %v1056
      %v1081 = vunpack.c.l.b16 %v1057
      %v1082 = vpack.c.b16 %v1075, %v1074
      %v1083 = vpack.c.b16 %v1077, %v1076
      %v1084 = vpack.c.b16 %v1079, %v1078
      %v1085 = vpack.c.b16 %v1081, %v1080
      %v1091 = vsel %vm577, %v1063, 0
      %v1094 = vsel %vm577, %v1065, 0
      %1096 = vmatprep.subr.bf16.mxu0 0
      %1097 = vmatpush1.bf16.msra.mxu0 %v1082
      %1098 = vmatprep.subr.bf16.mxu0 0
      %1099 = vmatpush1.bf16.msra.mxu0 %v1083
      %1100 = vmatprep.subr.bf16.mxu0 0
      %1101 = vmatpush1.bf16.msra.mxu0 %v1084
      %1102 = vmatprep.subr.bf16.mxu0 0
      %1103 = vmatpush1.bf16.msra.mxu0 %v1085
      %1104 = vmatprep.subr.bf16.mxu0 0
      %1105 = vmatpush1.bf16.msra.mxu0 0
      %1106 = vmatprep.subr.bf16.mxu0 0
      %1107 = vmatpush1.bf16.msra.mxu0 0
      %1108 = vmatprep.subr.bf16.mxu0 0
      %1109 = vmatpush1.bf16.msra.mxu0 0
      %1110 = vmatprep.subr.bf16.mxu0 0
      %1111 = vmatpush1.bf16.msra.mxu0 0
      %1112 = vmatprep.subr.bf16.mxu0 0
      %1113 = vmatpush1.bf16.msra.mxu0 0
      %1114 = vmatprep.subr.bf16.mxu0 0
      %1115 = vmatpush1.bf16.msra.mxu0 0
      %1116 = vmatprep.subr.bf16.mxu0 0
      %1117 = vmatpush1.bf16.msra.mxu0 0
      %1118 = vmatprep.subr.bf16.mxu0 0
      %1119 = vmatpush1.bf16.msra.mxu0 0
      %1120 = vmatprep.subr.bf16.mxu0 0
      %1121 = vmatpush1.bf16.msra.mxu0 0
      %1122 = vmatprep.subr.bf16.mxu0 0
      %1123 = vmatpush1.bf16.msra.mxu0 0
      %1124 = vmatprep.subr.bf16.mxu0 0
      %1125 = vmatpush1.bf16.msra.mxu0 0
      %1126 = vmatprep.subr.bf16.mxu0 0
      %1127 = vmatpush1.bf16.msra.mxu0 0
      %1128 = vmatprep.mubr.bf16.mxu0 0
      %1129 = vmatmul.mubr.bf16.gmra.mrb[0].mxu0 %v1091
      %v1130 = vpop.f32.mrb[0].mxu0
      %v1131 = vadd.f32 0.0, %v1130
      %v1132 = vpop.f32.mrb[0].mxu0
      %v1133 = vpop.f32.mrb[0].mxu0
      %v1134 = vadd.f32 0.0, %v1133
      %v1135 = vpop.f32.mrb[0].mxu0
      %1136 = vmatprep.mubr.bf16.mxu0 0
      %1137 = vmatmul.mubr.bf16.gmra.mrb[0].mxu0 %v1094
      %v1138 = vpop.f32.mrb[0].mxu0
      %v1139 = vadd.f32 0.0, %v1138
      %v1140 = vpop.f32.mrb[0].mxu0
      %v1141 = vpop.f32.mrb[0].mxu0
      %v1142 = vadd.f32 0.0, %v1141
      %v1143 = vpop.f32.mrb[0].mxu0
      %1144 = vdwg.mxu0
      %v1145 = vadd.f32 %v1044, %v1131
      %v1146 = vadd.f32 %v1045, %v1134
      %v1147 = vadd.f32 %v1046, %v1139
      %v1148 = vadd.f32 %v1047, %v1142
      %v1149 = vld [vmem:[%s455] sm:$0xf]
      %v1150 = vld [vmem:[%s455 + $0x4] sm:$0xf]
      %v1151 = vld [vmem:[%s455 + $0x8] sm:$0xf]
      %v1152 = vld [vmem:[%s455 + $0xc] sm:$0xf]
      %s1153 = scalar_lea.vmem %s460, 192
      %v1154 = vld [vmem:[%s1153] sm:$0xf]
      %v1155 = vld [vmem:[%s1153 + $0x4] sm:$0xf]
      %v1156 = vld [vmem:[%s1153 + $0x8] sm:$0xf]
      %v1157 = vld [vmem:[%s1153 + $0xc] sm:$0xf]
      %v1158 = vld [vmem:[%s1153 + $0x10] sm:$0xf]
      %v1159 = vld [vmem:[%s1153 + $0x14] sm:$0xf]
      %v1160 = vld [vmem:[%s1153 + $0x18] sm:$0xf]
      %v1161 = vld [vmem:[%s1153 + $0x1c] sm:$0xf]
      %v1166 = vunpack.c.l.b16 %v1149
      %v1167 = vunpack.c.l.b16 %v1150
      %v1168 = vunpack.c.l.b16 %v1151
      %v1169 = vunpack.c.l.b16 %v1152
      %v1170 = vpack.c.b16 %v1167, %v1166
      %v1171 = vpack.c.b16 %v1169, %v1168
      %v1180 = vunpack.c.l.b16 %v1154
      %v1181 = vunpack.c.l.b16 %v1155
      %v1182 = vunpack.c.l.b16 %v1156
      %v1183 = vunpack.c.l.b16 %v1157
      %v1184 = vunpack.c.l.b16 %v1158
      %v1185 = vunpack.c.l.b16 %v1159
      %v1186 = vunpack.c.l.b16 %v1160
      %v1187 = vunpack.c.l.b16 %v1161
      %v1188 = vpack.c.b16 %v1181, %v1180
      %v1189 = vpack.c.b16 %v1183, %v1182
      %v1190 = vpack.c.b16 %v1185, %v1184
      %v1191 = vpack.c.b16 %v1187, %v1186
      %v1197 = vsel %vm577, %v1170, 0
      %v1200 = vsel %vm577, %v1171, 0
      %1202 = vmatprep.subr.bf16.mxu0 0
      %1203 = vmatpush1.bf16.msra.mxu0 %v1188
      %1204 = vmatprep.subr.bf16.mxu0 0
      %1205 = vmatpush1.bf16.msra.mxu0 %v1189
      %1206 = vmatprep.subr.bf16.mxu0 0
      %1207 = vmatpush1.bf16.msra.mxu0 %v1190
      %1208 = vmatprep.subr.bf16.mxu0 0
      %1209 = vmatpush1.bf16.msra.mxu0 %v1191
      %1210 = vmatprep.subr.bf16.mxu0 0
      %1211 = vmatpush1.bf16.msra.mxu0 0
      %1212 = vmatprep.subr.bf16.mxu0 0
      %1213 = vmatpush1.bf16.msra.mxu0 0
      %1214 = vmatprep.subr.bf16.mxu0 0
      %1215 = vmatpush1.bf16.msra.mxu0 0
      %1216 = vmatprep.subr.bf16.mxu0 0
      %1217 = vmatpush1.bf16.msra.mxu0 0
      %1218 = vmatprep.subr.bf16.mxu0 0
      %1219 = vmatpush1.bf16.msra.mxu0 0
      %1220 = vmatprep.subr.bf16.mxu0 0
      %1221 = vmatpush1.bf16.msra.mxu0 0
      %1222 = vmatprep.subr.bf16.mxu0 0
      %1223 = vmatpush1.bf16.msra.mxu0 0
      %1224 = vmatprep.subr.bf16.mxu0 0
      %1225 = vmatpush1.bf16.msra.mxu0 0
      %1226 = vmatprep.subr.bf16.mxu0 0
      %1227 = vmatpush1.bf16.msra.mxu0 0
      %1228 = vmatprep.subr.bf16.mxu0 0
      %1229 = vmatpush1.bf16.msra.mxu0 0
      %1230 = vmatprep.subr.bf16.mxu0 0
      %1231 = vmatpush1.bf16.msra.mxu0 0
      %1232 = vmatprep.subr.bf16.mxu0 0
      %1233 = vmatpush1.bf16.msra.mxu0 0
      %1234 = vmatprep.mubr.bf16.mxu0 0
      %1235 = vmatmul.mubr.bf16.gmra.mrb[0].mxu0 %v1197
      %v1236 = vpop.f32.mrb[0].mxu0
      %v1237 = vadd.f32 0.0, %v1236
      %v1238 = vpop.f32.mrb[0].mxu0
      %v1239 = vpop.f32.mrb[0].mxu0
      %v1240 = vadd.f32 0.0, %v1239
      %v1241 = vpop.f32.mrb[0].mxu0
      %1242 = vmatprep.mubr.bf16.mxu0 0
      %1243 = vmatmul.mubr.bf16.gmra.mrb[0].mxu0 %v1200
      %v1244 = vpop.f32.mrb[0].mxu0
      %v1245 = vadd.f32 0.0, %v1244
      %v1246 = vpop.f32.mrb[0].mxu0
      %v1247 = vpop.f32.mrb[0].mxu0
      %v1248 = vadd.f32 0.0, %v1247
      %v1249 = vpop.f32.mrb[0].mxu0
      %1250 = vdwg.mxu0
      %v1251 = vadd.f32 %v1145, %v1237
      %v1252 = vadd.f32 %v1146, %v1240
      %v1253 = vadd.f32 %v1147, %v1245
      %v1254 = vadd.f32 %v1148, %v1248
      %v1255 = vld [vmem:[%s455] sm:$0xf]
      %v1256 = vld [vmem:[%s455 + $0x4] sm:$0xf]
      %v1257 = vld [vmem:[%s455 + $0x8] sm:$0xf]
      %v1258 = vld [vmem:[%s455 + $0xc] sm:$0xf]
      %v1259 = vld [vmem:[%s455 + $0x10] sm:$0x1]
      %s1260 = scalar_lea.vmem %s460, 224
      %v1261 = vld [vmem:[%s1260] sm:$0xf]
      %v1262 = vld [vmem:[%s1260 + $0x4] sm:$0xf]
      %v1263 = vld [vmem:[%s1260 + $0x8] sm:$0xf]
      %v1264 = vld [vmem:[%s1260 + $0xc] sm:$0xf]
      %v1265 = vld [vmem:[%s1260 + $0x10] sm:$0xf]
      %v1266 = vld [vmem:[%s1260 + $0x14] sm:$0xf]
      %v1267 = vld [vmem:[%s1260 + $0x18] sm:$0xf]
      %v1268 = vld [vmem:[%s1260 + $0x1c] sm:$0xf]
      %v1274 = vunpack.c.l.b16 %v1255
      %v1275 = vunpack.c.l.b16 %v1256
      %v1276 = vunpack.c.l.b16 %v1257
      %v1277 = vunpack.c.l.b16 %v1258
      %v1278 = vunpack.c.l.b16 %v1259
      %v1279 = vpack.c.b16 %v1275, %v1274
      %v1280 = vpack.c.b16 %v1277, %v1276
      %v1281 = vpack.c.b16 %v1278, %v1278
      %v1283 = vshrl.u32 %v1279, 16
      %v1285 = vshll.u32 %v1279, 16
      %v1287 = vrot.slane %v1285, 1
      %v1288 = vor.u32 %v1283, %v1287
      %v1290 = vshll.u32 %v1280, 16
      %v1292 = vrot.slane %v1290, 1
      %v1293 = vsel %vm532, %v1288, %v1292
      %v1294 = vshrl.u32 %v1280, 16
      %v1296 = vor.u32 %v1294, %v1292
      %v1298 = vshll.u32 %v1281, 16
      %v1300 = vrot.slane %v1298, 1
      %v1301 = vsel %vm532, %v1296, %v1300
      %v1310 = vunpack.c.l.b16 %v1261
      %v1311 = vunpack.c.l.b16 %v1262
      %v1312 = vunpack.c.l.b16 %v1263
      %v1313 = vunpack.c.l.b16 %v1264
      %v1314 = vunpack.c.l.b16 %v1265
      %v1315 = vunpack.c.l.b16 %v1266
      %v1316 = vunpack.c.l.b16 %v1267
      %v1317 = vunpack.c.l.b16 %v1268
      %v1318 = vpack.c.b16 %v1311, %v1310
      %v1319 = vpack.c.b16 %v1313, %v1312
      %v1320 = vpack.c.b16 %v1315, %v1314
      %v1321 = vpack.c.b16 %v1317, %v1316
      %v1327 = vsel %vm577, %v1293, 0
      %v1330 = vsel %vm577, %v1301, 0
      %1332 = vmatprep.subr.bf16.mxu0 0
      %1333 = vmatpush1.bf16.msra.mxu0 %v1318
      %1334 = vmatprep.subr.bf16.mxu0 0
      %1335 = vmatpush1.bf16.msra.mxu0 %v1319
      %1336 = vmatprep.subr.bf16.mxu0 0
      %1337 = vmatpush1.bf16.msra.mxu0 %v1320
      %1338 = vmatprep.subr.bf16.mxu0 0
      %1339 = vmatpush1.bf16.msra.mxu0 %v1321
      %1340 = vmatprep.subr.bf16.mxu0 0
      %1341 = vmatpush1.bf16.msra.mxu0 0
      %1342 = vmatprep.subr.bf16.mxu0 0
      %1343 = vmatpush1.bf16.msra.mxu0 0
      %1344 = vmatprep.subr.bf16.mxu0 0
      %1345 = vmatpush1.bf16.msra.mxu0 0
      %1346 = vmatprep.subr.bf16.mxu0 0
      %1347 = vmatpush1.bf16.msra.mxu0 0
      %1348 = vmatprep.subr.bf16.mxu0 0
      %1349 = vmatpush1.bf16.msra.mxu0 0
      %1350 = vmatprep.subr.bf16.mxu0 0
      %1351 = vmatpush1.bf16.msra.mxu0 0
      %1352 = vmatprep.subr.bf16.mxu0 0
      %1353 = vmatpush1.bf16.msra.mxu0 0
      %1354 = vmatprep.subr.bf16.mxu0 0
      %1355 = vmatpush1.bf16.msra.mxu0 0
      %1356 = vmatprep.subr.bf16.mxu0 0
      %1357 = vmatpush1.bf16.msra.mxu0 0
      %1358 = vmatprep.subr.bf16.mxu0 0
      %1359 = vmatpush1.bf16.msra.mxu0 0
      %1360 = vmatprep.subr.bf16.mxu0 0
      %1361 = vmatpush1.bf16.msra.mxu0 0
      %1362 = vmatprep.subr.bf16.mxu0 0
      %1363 = vmatpush1.bf16.msra.mxu0 0
      %1364 = vmatprep.mubr.bf16.mxu0 0
      %1365 = vmatmul.mubr.bf16.gmra.mrb[0].mxu0 %v1327
      %v1366 = vpop.f32.mrb[0].mxu0
      %v1367 = vadd.f32 0.0, %v1366
      %v1368 = vpop.f32.mrb[0].mxu0
      %v1369 = vpop.f32.mrb[0].mxu0
      %v1370 = vadd.f32 0.0, %v1369
      %v1371 = vpop.f32.mrb[0].mxu0
      %1372 = vmatprep.mubr.bf16.mxu0 0
      %1373 = vmatmul.mubr.bf16.gmra.mrb[0].mxu0 %v1330
      %v1374 = vpop.f32.mrb[0].mxu0
      %v1375 = vadd.f32 0.0, %v1374
      %v1376 = vpop.f32.mrb[0].mxu0
      %v1377 = vpop.f32.mrb[0].mxu0
      %v1378 = vadd.f32 0.0, %v1377
      %v1379 = vpop.f32.mrb[0].mxu0
      %1380 = vdwg.mxu0
      %v1381 = vadd.f32 %v1251, %v1367
      %v1382 = vadd.f32 %v1252, %v1370
      %v1383 = vadd.f32 %v1253, %v1375
      %v1384 = vadd.f32 %v1254, %v1378
      %v1385 = vld [vmem:[%s455] sm:$0xe]
      %s1386 = scalar_lea.vmem %s460, 256
      %v1387 = vld [vmem:[%s1386] sm:$0xf]
      %v1388 = vld [vmem:[%s1386 + $0x4] sm:$0xf]
      %v1389 = vld [vmem:[%s1386 + $0x8] sm:$0xf]
      %v1390 = vld [vmem:[%s1386 + $0xc] sm:$0xf]
      %v1391 = vld [vmem:[%s1386 + $0x10] sm:$0xf]
      %v1392 = vld [vmem:[%s1386 + $0x14] sm:$0xf]
      %v1393 = vld [vmem:[%s1386 + $0x18] sm:$0xf]
      %v1394 = vld [vmem:[%s1386 + $0x1c] sm:$0xf]
      %v1396 = vunpack.c.l.b16 %v1385
      %v1397 = vpack.c.b16 %v1275, %v1396
      %v1398 = vrot.slane %v1397, 1
      %v1399 = vrot.slane %v1280, 1
      %v1400 = vsel %vm723, %v1398, %v1399
      %v1401 = vrot.slane %v1281, 1
      %v1402 = vsel %vm723, %v1399, %v1401
      %v1411 = vunpack.c.l.b16 %v1387
      %v1412 = vunpack.c.l.b16 %v1388
      %v1413 = vunpack.c.l.b16 %v1389
      %v1414 = vunpack.c.l.b16 %v1390
      %v1415 = vunpack.c.l.b16 %v1391
      %v1416 = vunpack.c.l.b16 %v1392
      %v1417 = vunpack.c.l.b16 %v1393
      %v1418 = vunpack.c.l.b16 %v1394
      %v1419 = vpack.c.b16 %v1412, %v1411
      %v1420 = vpack.c.b16 %v1414, %v1413
      %v1421 = vpack.c.b16 %v1416, %v1415
      %v1422 = vpack.c.b16 %v1418, %v1417
      %v1428 = vsel %vm577, %v1400, 0
      %v1431 = vsel %vm577, %v1402, 0
      %1433 = vmatprep.subr.bf16.mxu0 0
      %1434 = vmatpush1.bf16.msra.mxu0 %v1419
      %1435 = vmatprep.subr.bf16.mxu0 0
      %1436 = vmatpush1.bf16.msra.mxu0 %v1420
      %1437 = vmatprep.subr.bf16.mxu0 0
      %1438 = vmatpush1.bf16.msra.mxu0 %v1421
      %1439 = vmatprep.subr.bf16.mxu0 0
      %1440 = vmatpush1.bf16.msra.mxu0 %v1422
      %1441 = vmatprep.subr.bf16.mxu0 0
      %1442 = vmatpush1.bf16.msra.mxu0 0
      %1443 = vmatprep.subr.bf16.mxu0 0
      %1444 = vmatpush1.bf16.msra.mxu0 0
      %1445 = vmatprep.subr.bf16.mxu0 0
      %1446 = vmatpush1.bf16.msra.mxu0 0
      %1447 = vmatprep.subr.bf16.mxu0 0
      %1448 = vmatpush1.bf16.msra.mxu0 0
      %1449 = vmatprep.subr.bf16.mxu0 0
      %1450 = vmatpush1.bf16.msra.mxu0 0
      %1451 = vmatprep.subr.bf16.mxu0 0
      %1452 = vmatpush1.bf16.msra.mxu0 0
      %1453 = vmatprep.subr.bf16.mxu0 0
      %1454 = vmatpush1.bf16.msra.mxu0 0
      %1455 = vmatprep.subr.bf16.mxu0 0
      %1456 = vmatpush1.bf16.msra.mxu0 0
      %1457 = vmatprep.subr.bf16.mxu0 0
      %1458 = vmatpush1.bf16.msra.mxu0 0
      %1459 = vmatprep.subr.bf16.mxu0 0
      %1460 = vmatpush1.bf16.msra.mxu0 0
      %1461 = vmatprep.subr.bf16.mxu0 0
      %1462 = vmatpush1.bf16.msra.mxu0 0
      %1463 = vmatprep.subr.bf16.mxu0 0
      %1464 = vmatpush1.bf16.msra.mxu0 0
      %1465 = vmatprep.mubr.bf16.mxu0 0
      %1466 = vmatmul.mubr.bf16.gmra.mrb[0].mxu0 %v1428
      %v1467 = vpop.f32.mrb[0].mxu0
      %v1468 = vadd.f32 0.0, %v1467
      %v1469 = vpop.f32.mrb[0].mxu0
      %v1470 = vpop.f32.mrb[0].mxu0
      %v1471 = vadd.f32 0.0, %v1470
      %v1472 = vpop.f32.mrb[0].mxu0
      %1473 = vmatprep.mubr.bf16.mxu0 0
      %1474 = vmatmul.mubr.bf16.gmra.mrb[0].mxu0 %v1431
      %v1475 = vpop.f32.mrb[0].mxu0
      %v1476 = vadd.f32 0.0, %v1475
      %v1477 = vpop.f32.mrb[0].mxu0
      %v1478 = vpop.f32.mrb[0].mxu0
      %v1479 = vadd.f32 0.0, %v1478
      %v1480 = vpop.f32.mrb[0].mxu0
      %1481 = vdwg.mxu0
      %v1482 = vadd.f32 %v1381, %v1468
      %v1483 = vadd.f32 %v1382, %v1471
      %v1484 = vadd.f32 %v1383, %v1476
      %v1485 = vadd.f32 %v1384, %v1479
      %v1486 = vld [vmem:[%s463] sm:$0x1]
      %v1488 = vlaneseq
      %v1489 = vshrl.u32 %v1488, 7
      %v1490 = vsub.s32 0, %v1489
      %v1491 = vrot.slane %v1486, %v1490
      %v1493 = vadd.f32 %v1482, %v1491
      %v1494 = vadd.f32 %v1483, %v1491
      %v1495 = vadd.f32 %v1484, %v1491
      %v1496 = vadd.f32 %v1485, %v1491
      %1497 = vst [vmem:[%s475] sm:$0xff] %v1493
      %1498 = vst [vmem:[%s475 + $0x8] sm:$0xff] %v1494
      %1499 = vst [vmem:[%s475 + $0x10] sm:$0xff] %v1495
      %1500 = vst [vmem:[%s475 + $0x18] sm:$0xff] %v1496
      %v1501 = vadd.f32 %v1493, %v1494
      %v1502 = vadd.f32 %v1501, %v1495
      %v1503 = vadd.f32 %v1502, %v1496
      %v1504 = vrot.slane %v1503, 4
      %v1505 = vadd.f32 %v1503, %v1504
      %v1506 = vrot.slane %v1505, 2
      %v1507 = vadd.f32 %v1505, %v1506
      %v1508 = vrot.slane %v1507, 1
      %v1509 = vadd.f32 %v1507, %v1508
      %1510 = vst [vmem:[%s485] sm:$0x1] %v1509
      %v1511 = vmul.f32 %v1493, %v1493
      %v1512 = vmul.f32 %v1494, %v1494
      %v1513 = vmul.f32 %v1495, %v1495
      %v1514 = vmul.f32 %v1496, %v1496
      %v1515 = vadd.f32 %v1511, %v1512
      %v1516 = vadd.f32 %v1515, %v1513
      %v1517 = vadd.f32 %v1516, %v1514
      %v1518 = vrot.slane %v1517, 4
      %v1519 = vadd.f32 %v1517, %v1518
      %v1520 = vrot.slane %v1519, 2
      %v1521 = vadd.f32 %v1519, %v1520
      %v1522 = vrot.slane %v1521, 1
      %v1523 = vadd.f32 %v1521, %v1522
      %1524 = vst [vmem:[%s495] sm:$0x1] %v1523
      %p1525 = scmp.lt.s32.totalorder %s25, 1
      %s1526 = scalar_select %p1525, %s25, 1
      %p1527 = scmp.lt.s32.totalorder %s26, 31
      %s1528 = scalar_select %p1527, %s26, 31
      %p1529 = scmp.lt.s32.totalorder %s24, 0
      %s1530 = scalar_select %p1529, %s24, 0
      %s1531 = smul.addr %s1528, 4
      %s1532 = sadd.s32 %s1530, %s1531
      %s1533 = smul.addr %s1526, 128
      %s1534 = sadd.s32 %s1532, %s1533
      %s1535 = smul.addr %s1534, 8
      %s1536 = scalar_lea.vmem %s5, %s1535
      %p1537 = scmp.lt.s32.totalorder %s25, 1
      %s1538 = scalar_select %p1537, %s25, 1
      %p1539 = scmp.lt.s32.totalorder %s26, 31
      %s1540 = scalar_select %p1539, %s26, 31
      %p1541 = scmp.lt.s32.totalorder %s24, 0
      %s1542 = scalar_select %p1541, %s24, 0
      %s1543 = sadd.s32 %s1542, %s1540
      %s1544 = smul.addr %s1538, 32
      %s1545 = sadd.s32 %s1543, %s1544
      %s1546 = scalar_lea.vmem %s6, %s1545
      %p1547 = scmp.lt.s32.totalorder %s25, 1
      %s1548 = scalar_select %p1547, %s25, 1
      %p1549 = scmp.lt.s32.totalorder %s26, 31
      %s1550 = scalar_select %p1549, %s26, 31
      %p1551 = scmp.lt.s32.totalorder %s24, 0
      %s1552 = scalar_select %p1551, %s24, 0
      %s1553 = sadd.s32 %s1552, %s1550
      %s1554 = smul.addr %s1548, 32
      %s1555 = sadd.s32 %s1553, %s1554
      %s1556 = scalar_lea.vmem %s7, %s1555
      // Predicated region
      $region41: #{_lambda_.2} parent=39 // pred_check
        %p1557 = pneg %p200
      $region42: #{_lambda_.2} parent=39 // pred_check_branch
        %1559 = sbr.rel (%p1557) target = $region44
      $region43: #{_lambda_.2} parent=39 // pred_region
        _
      $region44: #{_lambda_.2} parent=39 // pred_fallthru
        _
      // Predicated region
      $region45: #{_lambda_.2} parent=39 // pred_check
        %p1560 = pneg %p230
      $region46: #{_lambda_.2} parent=39 // pred_check_branch
        %1562 = sbr.rel (%p1560) target = $region48
      $region47: #{_lambda_.2} parent=39 // pred_region
        _
      $region48: #{_lambda_.2} parent=39 // pred_fallthru
        _
      // Predicated region
      $region49: #{_lambda_.2} parent=39 // pred_check
        %p1563 = pneg %p260
      $region50: #{_lambda_.2} parent=39 // pred_check_branch
        %1565 = sbr.rel (%p1563) target = $region52
      $region51: #{_lambda_.2} parent=39 // pred_region
        _
      $region52: #{_lambda_.2} parent=39 // pred_fallthru
        _
    $region40: #{_lambda_.2} parent=5 // pred_fallthru
      _
    %p1566 = scmp.le.s32.totalorder 2, %s14
    // Predicated region
    $region53: #{_lambda_.2} parent=5 // pred_check
      %p1567 = pneg %p1566
    $region54: #{_lambda_.2} parent=5 // pred_check_branch
      %1569 = sbr.rel (%p1567) target = $region56
    $region55: #{_lambda_.2} parent=5 // pred_region
      %s1570 = ssub.s32 %s14, 2
      // Predicated region
      $region57: #{_lambda_.2} parent=55 // pred_check
        %p1571 = pneg %p206
      $region58: #{_lambda_.2} parent=55 // pred_check_branch
        %1573 = sbr.rel (%p1571) target = $region60
      $region59: #{_lambda_.2} parent=55 // pred_region
        %p1574 = scmp.lt.s32.totalorder %s28, 1
        %s1575 = scalar_select %p1574, %s28, 1
        %p1576 = scmp.lt.s32.totalorder %s29, 31
        %s1577 = scalar_select %p1576, %s29, 31
        %p1578 = scmp.lt.s32.totalorder %s27, 0
        %s1579 = scalar_select %p1578, %s27, 0
        %s1580 = smul.addr %s1577, 4
        %s1581 = sadd.s32 %s1579, %s1580
        %s1582 = smul.addr %s1575, 128
        %s1583 = sadd.s32 %s1581, %s1582
        %s1584 = smul.addr %s1583, 8
        %s1585 = scalar_lea.vmem %s5, %s1584
      $region60: #{_lambda_.2} parent=55 // pred_fallthru
        _
      // Predicated region
      $region61: #{_lambda_.2} parent=55 // pred_check
        %p1586 = pneg %p236
      $region62: #{_lambda_.2} parent=55 // pred_check_branch
        %1588 = sbr.rel (%p1586) target = $region64
      $region63: #{_lambda_.2} parent=55 // pred_region
        %p1589 = scmp.lt.s32.totalorder %s28, 1
        %s1590 = scalar_select %p1589, %s28, 1
        %p1591 = scmp.lt.s32.totalorder %s29, 31
        %s1592 = scalar_select %p1591, %s29, 31
        %p1593 = scmp.lt.s32.totalorder %s27, 0
        %s1594 = scalar_select %p1593, %s27, 0
        %s1595 = sadd.s32 %s1594, %s1592
        %s1596 = smul.addr %s1590, 32
        %s1597 = sadd.s32 %s1595, %s1596
        %s1598 = scalar_lea.vmem %s6, %s1597
      $region64: #{_lambda_.2} parent=55 // pred_fallthru
        _
      // Predicated region
      $region65: #{_lambda_.2} parent=55 // pred_check
        %p1599 = pneg %p266
      $region66: #{_lambda_.2} parent=55 // pred_check_branch
        %1601 = sbr.rel (%p1599) target = $region68
      $region67: #{_lambda_.2} parent=55 // pred_region
        %p1602 = scmp.lt.s32.totalorder %s28, 1
        %s1603 = scalar_select %p1602, %s28, 1
        %p1604 = scmp.lt.s32.totalorder %s29, 31
        %s1605 = scalar_select %p1604, %s29, 31
        %p1606 = scmp.lt.s32.totalorder %s27, 0
        %s1607 = scalar_select %p1606, %s27, 0
        %s1608 = sadd.s32 %s1607, %s1605
        %s1609 = smul.addr %s1603, 32
        %s1610 = sadd.s32 %s1608, %s1609
        %s1611 = scalar_lea.vmem %s7, %s1610
      $region68: #{_lambda_.2} parent=55 // pred_fallthru
        _
    $region56: #{_lambda_.2} parent=5 // pred_fallthru
      _
  $region6: #{_lambda_.2} parent=0 // loop_footer
    %s18 = sadd.s32 1, %s14
  $region7: #{_lambda_.2} parent=0 // loop_footer_branch
    %13 = sbr.rel target = $region3
  $region8: #{_lambda_.2} parent=0 // loop_exit
    _

// kernel: _lambda_.3
$region0: #{_lambda_.3}
  #allocation0 [shape = 'u32[]', space=smem, size = 0x4, offset = 0x4, fixed_abs, tag = 'smem constant byte address 0x4 - core index']
  #allocation1 [shape = 'u32[144,128]{1,0:T(1,128)}', space=vmem, size = 0x12000, scoped, tag = 'internal scratch']
  %s0 = inlined_call_operand.vmem [shape: f32[2048,128], index: 0, kind: input, shape index: {}]
  %s1 = inlined_call_operand.vmem [shape: f32[1,128], index: 1, kind: input, shape index: {}]
  %s2 = inlined_call_operand.vmem [shape: f32[1,128], index: 2, kind: input, shape index: {}]
  %s3 = inlined_call_operand.vmem [shape: f32[2048,128], index: 3, kind: output, shape index: {}]
  %s4 = sld [smem:[#allocation0]]
  $region22: #{_lambda_.3} parent=0
    _
  %s6 = ssub.s32 1, %s4
  %s7 = scalar_select 0, %s6, %s4
  // Predicated region
  $region2: #{_lambda_.3} parent=0 // pred_check
    _
  $region3: #{_lambda_.3} parent=0 // pred_check_branch
    %9 = sbr.rel (0) target = $region5
  $region4: #{_lambda_.3} parent=0 // pred_region
    _
  $region5: #{_lambda_.3} parent=0 // pred_fallthru
    _
  // Predicated region
  $region6: #{_lambda_.3} parent=0 // pred_check
    _
  $region7: #{_lambda_.3} parent=0 // pred_check_branch
    %11 = sbr.rel (0) target = $region9
  $region8: #{_lambda_.3} parent=0 // pred_region
    _
  $region9: #{_lambda_.3} parent=0 // pred_fallthru
    _
  // Predicated region
  $region10: #{_lambda_.3} parent=0 // pred_check
    _
  $region11: #{_lambda_.3} parent=0 // pred_check_branch
    %13 = sbr.rel (0) target = $region13
  $region12: #{_lambda_.3} parent=0 // pred_region
    _
  $region13: #{_lambda_.3} parent=0 // pred_fallthru
    _
  %v14 = vld [vmem:[%s0] sm:$0xff]
  %v15 = vld [vmem:[%s0 + $0x8] sm:$0xff]
  %v16 = vld [vmem:[%s0 + $0x10] sm:$0xff]
  %v17 = vld [vmem:[%s0 + $0x18] sm:$0xff]
  %v18 = vld [vmem:[%s0 + $0x20] sm:$0xff]
  %v19 = vld [vmem:[%s0 + $0x28] sm:$0xff]
  %v20 = vld [vmem:[%s0 + $0x30] sm:$0xff]
  %v21 = vld [vmem:[%s0 + $0x38] sm:$0xff]
  %v22 = vld [vmem:[%s0 + $0x40] sm:$0xff]
  %v23 = vld [vmem:[%s0 + $0x48] sm:$0xff]
  %v24 = vld [vmem:[%s0 + $0x50] sm:$0xff]
  %v25 = vld [vmem:[%s0 + $0x58] sm:$0xff]
  %v26 = vld [vmem:[%s0 + $0x60] sm:$0xff]
  %v27 = vld [vmem:[%s0 + $0x68] sm:$0xff]
  %v28 = vld [vmem:[%s0 + $0x70] sm:$0xff]
  %v29 = vld [vmem:[%s0 + $0x78] sm:$0xff]
  %v30 = vld [vmem:[%s0 + $0x80] sm:$0xff]
  %v31 = vld [vmem:[%s0 + $0x88] sm:$0xff]
  %v32 = vld [vmem:[%s0 + $0x90] sm:$0xff]
  %v33 = vld [vmem:[%s0 + $0x98] sm:$0xff]
  %v34 = vld [vmem:[%s0 + $0xa0] sm:$0xff]
  %v35 = vld [vmem:[%s0 + $0xa8] sm:$0xff]
  %v36 = vld [vmem:[%s0 + $0xb0] sm:$0xff]
  %v37 = vld [vmem:[%s0 + $0xb8] sm:$0xff]
  %v38 = vld [vmem:[%s0 + $0xc0] sm:$0xff]
  %v39 = vld [vmem:[%s0 + $0xc8] sm:$0xff]
  %v40 = vld [vmem:[%s0 + $0xd0] sm:$0xff]
  %v41 = vld [vmem:[%s0 + $0xd8] sm:$0xff]
  %v42 = vld [vmem:[%s0 + $0xe0] sm:$0xff]
  %v43 = vld [vmem:[%s0 + $0xe8] sm:$0xff]
  %v44 = vld [vmem:[%s0 + $0xf0] sm:$0xff]
  %v45 = vld [vmem:[%s0 + $0xf8] sm:$0xff]
  %v46 = vld [vmem:[%s0 + $0x100] sm:$0xff]
  %v47 = vld [vmem:[%s0 + $0x108] sm:$0xff]
  %v48 = vld [vmem:[%s0 + $0x110] sm:$0xff]
  %v49 = vld [vmem:[%s0 + $0x118] sm:$0xff]
  %v50 = vld [vmem:[%s0 + $0x120] sm:$0xff]
  %v51 = vld [vmem:[%s0 + $0x128] sm:$0xff]
  %v52 = vld [vmem:[%s0 + $0x130] sm:$0xff]
  %v53 = vld [vmem:[%s0 + $0x138] sm:$0xff]
  %v54 = vld [vmem:[%s0 + $0x140] sm:$0xff]
  %v55 = vld [vmem:[%s0 + $0x148] sm:$0xff]
  %v56 = vld [vmem:[%s0 + $0x150] sm:$0xff]
  %v57 = vld [vmem:[%s0 + $0x158] sm:$0xff]
  %v58 = vld [vmem:[%s0 + $0x160] sm:$0xff]
  %v59 = vld [vmem:[%s0 + $0x168] sm:$0xff]
  %v60 = vld [vmem:[%s0 + $0x170] sm:$0xff]
  %v61 = vld [vmem:[%s0 + $0x178] sm:$0xff]
  %v62 = vld [vmem:[%s0 + $0x180] sm:$0xff]
  %v63 = vld [vmem:[%s0 + $0x188] sm:$0xff]
  %v64 = vld [vmem:[%s0 + $0x190] sm:$0xff]
  %v65 = vld [vmem:[%s0 + $0x198] sm:$0xff]
  %v66 = vld [vmem:[%s0 + $0x1a0] sm:$0xff]
  %v67 = vld [vmem:[%s0 + $0x1a8] sm:$0xff]
  %v68 = vld [vmem:[%s0 + $0x1b0] sm:$0xff]
  %v69 = vld [vmem:[%s0 + $0x1b8] sm:$0xff]
  %v70 = vld [vmem:[%s0 + $0x1c0] sm:$0xff]
  %v71 = vld [vmem:[%s0 + $0x1c8] sm:$0xff]
  %v72 = vld [vmem:[%s0 + $0x1d0] sm:$0xff]
  %v73 = vld [vmem:[%s0 + $0x1d8] sm:$0xff]
  %v74 = vld [vmem:[%s0 + $0x1e0] sm:$0xff]
  %v75 = vld [vmem:[%s0 + $0x1e8] sm:$0xff]
  %v76 = vld [vmem:[%s0 + $0x1f0] sm:$0xff]
  %v77 = vld [vmem:[%s0 + $0x1f8] sm:$0xff]
  %v78 = vld [vmem:[%s0 + $0x200] sm:$0xff]
  %v79 = vld [vmem:[%s0 + $0x208] sm:$0xff]
  %v80 = vld [vmem:[%s0 + $0x210] sm:$0xff]
  %v81 = vld [vmem:[%s0 + $0x218] sm:$0xff]
  %v82 = vld [vmem:[%s0 + $0x220] sm:$0xff]
  %v83 = vld [vmem:[%s0 + $0x228] sm:$0xff]
  %v84 = vld [vmem:[%s0 + $0x230] sm:$0xff]
  %v85 = vld [vmem:[%s0 + $0x238] sm:$0xff]
  %v86 = vld [vmem:[%s0 + $0x240] sm:$0xff]
  %v87 = vld [vmem:[%s0 + $0x248] sm:$0xff]
  %v88 = vld [vmem:[%s0 + $0x250] sm:$0xff]
  %v89 = vld [vmem:[%s0 + $0x258] sm:$0xff]
  %v90 = vld [vmem:[%s0 + $0x260] sm:$0xff]
  %v91 = vld [vmem:[%s0 + $0x268] sm:$0xff]
  %v92 = vld [vmem:[%s0 + $0x270] sm:$0xff]
  %v93 = vld [vmem:[%s0 + $0x278] sm:$0xff]
  %v94 = vld [vmem:[%s0 + $0x280] sm:$0xff]
  %v95 = vld [vmem:[%s0 + $0x288] sm:$0xff]
  %v96 = vld [vmem:[%s0 + $0x290] sm:$0xff]
  %v97 = vld [vmem:[%s0 + $0x298] sm:$0xff]
  %v98 = vld [vmem:[%s0 + $0x2a0] sm:$0xff]
  %v99 = vld [vmem:[%s0 + $0x2a8] sm:$0xff]
  %v100 = vld [vmem:[%s0 + $0x2b0] sm:$0xff]
  %v101 = vld [vmem:[%s0 + $0x2b8] sm:$0xff]
  %v102 = vld [vmem:[%s0 + $0x2c0] sm:$0xff]
  %v103 = vld [vmem:[%s0 + $0x2c8] sm:$0xff]
  %v104 = vld [vmem:[%s0 + $0x2d0] sm:$0xff]
  %v105 = vld [vmem:[%s0 + $0x2d8] sm:$0xff]
  %v106 = vld [vmem:[%s0 + $0x2e0] sm:$0xff]
  %v107 = vld [vmem:[%s0 + $0x2e8] sm:$0xff]
  %v108 = vld [vmem:[%s0 + $0x2f0] sm:$0xff]
  %v109 = vld [vmem:[%s0 + $0x2f8] sm:$0xff]
  %v110 = vld [vmem:[%s0 + $0x300] sm:$0xff]
  %v111 = vld [vmem:[%s0 + $0x308] sm:$0xff]
  %v112 = vld [vmem:[%s0 + $0x310] sm:$0xff]
  %v113 = vld [vmem:[%s0 + $0x318] sm:$0xff]
  %v114 = vld [vmem:[%s0 + $0x320] sm:$0xff]
  %v115 = vld [vmem:[%s0 + $0x328] sm:$0xff]
  %v116 = vld [vmem:[%s0 + $0x330] sm:$0xff]
  %v117 = vld [vmem:[%s0 + $0x338] sm:$0xff]
  %v118 = vld [vmem:[%s0 + $0x340] sm:$0xff]
  %v119 = vld [vmem:[%s0 + $0x348] sm:$0xff]
  %v120 = vld [vmem:[%s0 + $0x350] sm:$0xff]
  %v121 = vld [vmem:[%s0 + $0x358] sm:$0xff]
  %v122 = vld [vmem:[%s0 + $0x360] sm:$0xff]
  %v123 = vld [vmem:[%s0 + $0x368] sm:$0xff]
  %v124 = vld [vmem:[%s0 + $0x370] sm:$0xff]
  %v125 = vld [vmem:[%s0 + $0x378] sm:$0xff]
  %v126 = vld [vmem:[%s0 + $0x380] sm:$0xff]
  %v127 = vld [vmem:[%s0 + $0x388] sm:$0xff]
  %v128 = vld [vmem:[%s0 + $0x390] sm:$0xff]
  %v129 = vld [vmem:[%s0 + $0x398] sm:$0xff]
  %v130 = vld [vmem:[%s0 + $0x3a0] sm:$0xff]
  %v131 = vld [vmem:[%s0 + $0x3a8] sm:$0xff]
  %v132 = vld [vmem:[%s0 + $0x3b0] sm:$0xff]
  %v133 = vld [vmem:[%s0 + $0x3b8] sm:$0xff]
  %v134 = vld [vmem:[%s0 + $0x3c0] sm:$0xff]
  %v135 = vld [vmem:[%s0 + $0x3c8] sm:$0xff]
  %v136 = vld [vmem:[%s0 + $0x3d0] sm:$0xff]
  %v137 = vld [vmem:[%s0 + $0x3d8] sm:$0xff]
  %v138 = vld [vmem:[%s0 + $0x3e0] sm:$0xff]
  %v139 = vld [vmem:[%s0 + $0x3e8] sm:$0xff]
  %v140 = vld [vmem:[%s0 + $0x3f0] sm:$0xff]
  %v141 = vld [vmem:[%s0 + $0x3f8] sm:$0xff]
  %v142 = vld [vmem:[%s0 + $0x400] sm:$0xff]
  %v143 = vld [vmem:[%s0 + $0x408] sm:$0xff]
  %v144 = vld [vmem:[%s0 + $0x410] sm:$0xff]
  %v145 = vld [vmem:[%s0 + $0x418] sm:$0xff]
  %v146 = vld [vmem:[%s0 + $0x420] sm:$0xff]
  %v147 = vld [vmem:[%s0 + $0x428] sm:$0xff]
  %v148 = vld [vmem:[%s0 + $0x430] sm:$0xff]
  %v149 = vld [vmem:[%s0 + $0x438] sm:$0xff]
  %v150 = vld [vmem:[%s0 + $0x440] sm:$0xff]
  %v151 = vld [vmem:[%s0 + $0x448] sm:$0xff]
  %v152 = vld [vmem:[%s0 + $0x450] sm:$0xff]
  %v153 = vld [vmem:[%s0 + $0x458] sm:$0xff]
  %v154 = vld [vmem:[%s0 + $0x460] sm:$0xff]
  %v155 = vld [vmem:[%s0 + $0x468] sm:$0xff]
  %v156 = vld [vmem:[%s0 + $0x470] sm:$0xff]
  %v157 = vld [vmem:[%s0 + $0x478] sm:$0xff]
  %v158 = vld [vmem:[%s0 + $0x480] sm:$0xff]
  %v159 = vld [vmem:[%s0 + $0x488] sm:$0xff]
  %v160 = vld [vmem:[%s0 + $0x490] sm:$0xff]
  %v161 = vld [vmem:[%s0 + $0x498] sm:$0xff]
  %v162 = vld [vmem:[%s0 + $0x4a0] sm:$0xff]
  %v163 = vld [vmem:[%s0 + $0x4a8] sm:$0xff]
  %v164 = vld [vmem:[%s0 + $0x4b0] sm:$0xff]
  %v165 = vld [vmem:[%s0 + $0x4b8] sm:$0xff]
  %v166 = vld [vmem:[%s0 + $0x4c0] sm:$0xff]
  %v167 = vld [vmem:[%s0 + $0x4c8] sm:$0xff]
  %v168 = vld [vmem:[%s0 + $0x4d0] sm:$0xff]
  %v169 = vld [vmem:[%s0 + $0x4d8] sm:$0xff]
  %v170 = vld [vmem:[%s0 + $0x4e0] sm:$0xff]
  %v171 = vld [vmem:[%s0 + $0x4e8] sm:$0xff]
  %v172 = vld [vmem:[%s0 + $0x4f0] sm:$0xff]
  %v173 = vld [vmem:[%s0 + $0x4f8] sm:$0xff]
  %v174 = vld [vmem:[%s0 + $0x500] sm:$0xff]
  %v175 = vld [vmem:[%s0 + $0x508] sm:$0xff]
  %v176 = vld [vmem:[%s0 + $0x510] sm:$0xff]
  %v177 = vld [vmem:[%s0 + $0x518] sm:$0xff]
  %v178 = vld [vmem:[%s0 + $0x520] sm:$0xff]
  %v179 = vld [vmem:[%s0 + $0x528] sm:$0xff]
  %v180 = vld [vmem:[%s0 + $0x530] sm:$0xff]
  %v181 = vld [vmem:[%s0 + $0x538] sm:$0xff]
  %v182 = vld [vmem:[%s0 + $0x540] sm:$0xff]
  %v183 = vld [vmem:[%s0 + $0x548] sm:$0xff]
  %v184 = vld [vmem:[%s0 + $0x550] sm:$0xff]
  %v185 = vld [vmem:[%s0 + $0x558] sm:$0xff]
  %v186 = vld [vmem:[%s0 + $0x560] sm:$0xff]
  %v187 = vld [vmem:[%s0 + $0x568] sm:$0xff]
  %v188 = vld [vmem:[%s0 + $0x570] sm:$0xff]
  %v189 = vld [vmem:[%s0 + $0x578] sm:$0xff]
  %v190 = vld [vmem:[%s0 + $0x580] sm:$0xff]
  %v191 = vld [vmem:[%s0 + $0x588] sm:$0xff]
  %v192 = vld [vmem:[%s0 + $0x590] sm:$0xff]
  %v193 = vld [vmem:[%s0 + $0x598] sm:$0xff]
  %v194 = vld [vmem:[%s0 + $0x5a0] sm:$0xff]
  %v195 = vld [vmem:[%s0 + $0x5a8] sm:$0xff]
  %v196 = vld [vmem:[%s0 + $0x5b0] sm:$0xff]
  %v197 = vld [vmem:[%s0 + $0x5b8] sm:$0xff]
  %v198 = vld [vmem:[%s0 + $0x5c0] sm:$0xff]
  %v199 = vld [vmem:[%s0 + $0x5c8] sm:$0xff]
  %v200 = vld [vmem:[%s0 + $0x5d0] sm:$0xff]
  %v201 = vld [vmem:[%s0 + $0x5d8] sm:$0xff]
  %v202 = vld [vmem:[%s0 + $0x5e0] sm:$0xff]
  %v203 = vld [vmem:[%s0 + $0x5e8] sm:$0xff]
  %v204 = vld [vmem:[%s0 + $0x5f0] sm:$0xff]
  %v205 = vld [vmem:[%s0 + $0x5f8] sm:$0xff]
  %v206 = vld [vmem:[%s0 + $0x600] sm:$0xff]
  %v207 = vld [vmem:[%s0 + $0x608] sm:$0xff]
  %v208 = vld [vmem:[%s0 + $0x610] sm:$0xff]
  %v209 = vld [vmem:[%s0 + $0x618] sm:$0xff]
  %v210 = vld [vmem:[%s0 + $0x620] sm:$0xff]
  %v211 = vld [vmem:[%s0 + $0x628] sm:$0xff]
  %v212 = vld [vmem:[%s0 + $0x630] sm:$0xff]
  %v213 = vld [vmem:[%s0 + $0x638] sm:$0xff]
  %v214 = vld [vmem:[%s0 + $0x640] sm:$0xff]
  %v215 = vld [vmem:[%s0 + $0x648] sm:$0xff]
  %v216 = vld [vmem:[%s0 + $0x650] sm:$0xff]
  %v217 = vld [vmem:[%s0 + $0x658] sm:$0xff]
  %v218 = vld [vmem:[%s0 + $0x660] sm:$0xff]
  %v219 = vld [vmem:[%s0 + $0x668] sm:$0xff]
  %v220 = vld [vmem:[%s0 + $0x670] sm:$0xff]
  %v221 = vld [vmem:[%s0 + $0x678] sm:$0xff]
  %v222 = vld [vmem:[%s0 + $0x680] sm:$0xff]
  %v223 = vld [vmem:[%s0 + $0x688] sm:$0xff]
  %v224 = vld [vmem:[%s0 + $0x690] sm:$0xff]
  %v225 = vld [vmem:[%s0 + $0x698] sm:$0xff]
  %v226 = vld [vmem:[%s0 + $0x6a0] sm:$0xff]
  %v227 = vld [vmem:[%s0 + $0x6a8] sm:$0xff]
  %v228 = vld [vmem:[%s0 + $0x6b0] sm:$0xff]
  %v229 = vld [vmem:[%s0 + $0x6b8] sm:$0xff]
  %v230 = vld [vmem:[%s0 + $0x6c0] sm:$0xff]
  %v231 = vld [vmem:[%s0 + $0x6c8] sm:$0xff]
  %v232 = vld [vmem:[%s0 + $0x6d0] sm:$0xff]
  %v233 = vld [vmem:[%s0 + $0x6d8] sm:$0xff]
  %v234 = vld [vmem:[%s0 + $0x6e0] sm:$0xff]
  %v235 = vld [vmem:[%s0 + $0x6e8] sm:$0xff]
  %v236 = vld [vmem:[%s0 + $0x6f0] sm:$0xff]
  %v237 = vld [vmem:[%s0 + $0x6f8] sm:$0xff]
  %v238 = vld [vmem:[%s0 + $0x700] sm:$0xff]
  %v239 = vld [vmem:[%s0 + $0x708] sm:$0xff]
  %v240 = vld [vmem:[%s0 + $0x710] sm:$0xff]
  %v241 = vld [vmem:[%s0 + $0x718] sm:$0xff]
  %v242 = vld [vmem:[%s0 + $0x720] sm:$0xff]
  %v243 = vld [vmem:[%s0 + $0x728] sm:$0xff]
  %v244 = vld [vmem:[%s0 + $0x730] sm:$0xff]
  %v245 = vld [vmem:[%s0 + $0x738] sm:$0xff]
  %v246 = vld [vmem:[%s0 + $0x740] sm:$0xff]
  %v247 = vld [vmem:[%s0 + $0x748] sm:$0xff]
  %v248 = vld [vmem:[%s0 + $0x750] sm:$0xff]
  %v249 = vld [vmem:[%s0 + $0x758] sm:$0xff]
  %v250 = vld [vmem:[%s0 + $0x760] sm:$0xff]
  %v251 = vld [vmem:[%s0 + $0x768] sm:$0xff]
  %v252 = vld [vmem:[%s0 + $0x770] sm:$0xff]
  %v253 = vld [vmem:[%s0 + $0x778] sm:$0xff]
  %v254 = vld [vmem:[%s0 + $0x780] sm:$0xff]
  %v255 = vld [vmem:[%s0 + $0x788] sm:$0xff]
  %v256 = vld [vmem:[%s0 + $0x790] sm:$0xff]
  %v257 = vld [vmem:[%s0 + $0x798] sm:$0xff]
  %v258 = vld [vmem:[%s0 + $0x7a0] sm:$0xff]
  %v259 = vld [vmem:[%s0 + $0x7a8] sm:$0xff]
  %v260 = vld [vmem:[%s0 + $0x7b0] sm:$0xff]
  %v261 = vld [vmem:[%s0 + $0x7b8] sm:$0xff]
  %v262 = vld [vmem:[%s0 + $0x7c0] sm:$0xff]
  %v263 = vld [vmem:[%s0 + $0x7c8] sm:$0xff]
  %v264 = vld [vmem:[%s0 + $0x7d0] sm:$0xff]
  %v265 = vld [vmem:[%s0 + $0x7d8] sm:$0xff]
  %v266 = vld [vmem:[%s0 + $0x7e0] sm:$0xff]
  %v267 = vld [vmem:[%s0 + $0x7e8] sm:$0xff]
  %v268 = vld [vmem:[%s0 + $0x7f0] sm:$0xff]
  %v269 = vld [vmem:[%s0 + $0x7f8] sm:$0xff]
  %v270 = vld [vmem:[%s1] sm:$0x1]
  %v272 = vlaneseq
  %v273 = vshrl.u32 %v272, 7
  %v274 = vsub.s32 0, %v273
  %v275 = vrot.slane %v270, %v274
  %v277 = vmul.f32 %v14, %v275
  %v278 = vmul.f32 %v15, %v275
  %v279 = vmul.f32 %v16, %v275
  %v280 = vmul.f32 %v17, %v275
  %v281 = vmul.f32 %v18, %v275
  %v282 = vmul.f32 %v19, %v275
  %v283 = vmul.f32 %v20, %v275
  %v284 = vmul.f32 %v21, %v275
  %v285 = vmul.f32 %v22, %v275
  %v286 = vmul.f32 %v23, %v275
  %v287 = vmul.f32 %v24, %v275
  %v288 = vmul.f32 %v25, %v275
  %v289 = vmul.f32 %v26, %v275
  %v290 = vmul.f32 %v27, %v275
  %v291 = vmul.f32 %v28, %v275
  %v292 = vmul.f32 %v29, %v275
  %v293 = vmul.f32 %v30, %v275
  %v294 = vmul.f32 %v31, %v275
  %v295 = vmul.f32 %v32, %v275
  %v296 = vmul.f32 %v33, %v275
  %v297 = vmul.f32 %v34, %v275
  %v298 = vmul.f32 %v35, %v275
  %v299 = vmul.f32 %v36, %v275
  %v300 = vmul.f32 %v37, %v275
  %v301 = vmul.f32 %v38, %v275
  %v302 = vmul.f32 %v39, %v275
  %v303 = vmul.f32 %v40, %v275
  %v304 = vmul.f32 %v41, %v275
  %v305 = vmul.f32 %v42, %v275
  %v306 = vmul.f32 %v43, %v275
  %v307 = vmul.f32 %v44, %v275
  %v308 = vmul.f32 %v45, %v275
  %v309 = vmul.f32 %v46, %v275
  %v310 = vmul.f32 %v47, %v275
  %v311 = vmul.f32 %v48, %v275
  %v312 = vmul.f32 %v49, %v275
  %v313 = vmul.f32 %v50, %v275
  %v314 = vmul.f32 %v51, %v275
  %v315 = vmul.f32 %v52, %v275
  %v316 = vmul.f32 %v53, %v275
  %v317 = vmul.f32 %v54, %v275
  %v318 = vmul.f32 %v55, %v275
  %v319 = vmul.f32 %v56, %v275
  %v320 = vmul.f32 %v57, %v275
  %v321 = vmul.f32 %v58, %v275
  %v322 = vmul.f32 %v59, %v275
  %v323 = vmul.f32 %v60, %v275
  %v324 = vmul.f32 %v61, %v275
  %v325 = vmul.f32 %v62, %v275
  %v326 = vmul.f32 %v63, %v275
  %v327 = vmul.f32 %v64, %v275
  %v328 = vmul.f32 %v65, %v275
  %v329 = vmul.f32 %v66, %v275
  %v330 = vmul.f32 %v67, %v275
  %v331 = vmul.f32 %v68, %v275
  %v332 = vmul.f32 %v69, %v275
  %v333 = vmul.f32 %v70, %v275
  %v334 = vmul.f32 %v71, %v275
  %v335 = vmul.f32 %v72, %v275
  %v336 = vmul.f32 %v73, %v275
  %v337 = vmul.f32 %v74, %v275
  %v338 = vmul.f32 %v75, %v275
  %v339 = vmul.f32 %v76, %v275
  %v340 = vmul.f32 %v77, %v275
  %v341 = vmul.f32 %v78, %v275
  %v342 = vmul.f32 %v79, %v275
  %v343 = vmul.f32 %v80, %v275
  %v344 = vmul.f32 %v81, %v275
  %v345 = vmul.f32 %v82, %v275
  %v346 = vmul.f32 %v83, %v275
  %v347 = vmul.f32 %v84, %v275
  %v348 = vmul.f32 %v85, %v275
  %v349 = vmul.f32 %v86, %v275
  %v350 = vmul.f32 %v87, %v275
  %v351 = vmul.f32 %v88, %v275
  %v352 = vmul.f32 %v89, %v275
  %v353 = vmul.f32 %v90, %v275
  %v354 = vmul.f32 %v91, %v275
  %v355 = vmul.f32 %v92, %v275
  %v356 = vmul.f32 %v93, %v275
  %v357 = vmul.f32 %v94, %v275
  %v358 = vmul.f32 %v95, %v275
  %v359 = vmul.f32 %v96, %v275
  %v360 = vmul.f32 %v97, %v275
  %v361 = vmul.f32 %v98, %v275
  %v362 = vmul.f32 %v99, %v275
  %v363 = vmul.f32 %v100, %v275
  %v364 = vmul.f32 %v101, %v275
  %v365 = vmul.f32 %v102, %v275
  %v366 = vmul.f32 %v103, %v275
  %v367 = vmul.f32 %v104, %v275
  %v368 = vmul.f32 %v105, %v275
  %v369 = vmul.f32 %v106, %v275
  %v370 = vmul.f32 %v107, %v275
  %v371 = vmul.f32 %v108, %v275
  %v372 = vmul.f32 %v109, %v275
  %v373 = vmul.f32 %v110, %v275
  %v374 = vmul.f32 %v111, %v275
  %v375 = vmul.f32 %v112, %v275
  %v376 = vmul.f32 %v113, %v275
  %v377 = vmul.f32 %v114, %v275
  %v378 = vmul.f32 %v115, %v275
  %v379 = vmul.f32 %v116, %v275
  %v380 = vmul.f32 %v117, %v275
  %v381 = vmul.f32 %v118, %v275
  %v382 = vmul.f32 %v119, %v275
  %v383 = vmul.f32 %v120, %v275
  %v384 = vmul.f32 %v121, %v275
  %v385 = vmul.f32 %v122, %v275
  %v386 = vmul.f32 %v123, %v275
  %v387 = vmul.f32 %v124, %v275
  %v388 = vmul.f32 %v125, %v275
  %v389 = vmul.f32 %v126, %v275
  %v390 = vmul.f32 %v127, %v275
  %v391 = vmul.f32 %v128, %v275
  %v392 = vmul.f32 %v129, %v275
  %v393 = vmul.f32 %v130, %v275
  %v394 = vmul.f32 %v131, %v275
  %v395 = vmul.f32 %v132, %v275
  %v396 = vmul.f32 %v133, %v275
  %v397 = vmul.f32 %v134, %v275
  %v398 = vmul.f32 %v135, %v275
  %v399 = vmul.f32 %v136, %v275
  %v400 = vmul.f32 %v137, %v275
  %v401 = vmul.f32 %v138, %v275
  %v402 = vmul.f32 %v139, %v275
  %v403 = vmul.f32 %v140, %v275
  %v404 = vmul.f32 %v141, %v275
  %v405 = vmul.f32 %v142, %v275
  %v406 = vmul.f32 %v143, %v275
  %v407 = vmul.f32 %v144, %v275
  %v408 = vmul.f32 %v145, %v275
  %v409 = vmul.f32 %v146, %v275
  %v410 = vmul.f32 %v147, %v275
  %v411 = vmul.f32 %v148, %v275
  %v412 = vmul.f32 %v149, %v275
  %v413 = vmul.f32 %v150, %v275
  %v414 = vmul.f32 %v151, %v275
  %v415 = vmul.f32 %v152, %v275
  %v416 = vmul.f32 %v153, %v275
  %v417 = vmul.f32 %v154, %v275
  %v418 = vmul.f32 %v155, %v275
  %v419 = vmul.f32 %v156, %v275
  %v420 = vmul.f32 %v157, %v275
  %v421 = vmul.f32 %v158, %v275
  %v422 = vmul.f32 %v159, %v275
  %v423 = vmul.f32 %v160, %v275
  %v424 = vmul.f32 %v161, %v275
  %v425 = vmul.f32 %v162, %v275
  %v426 = vmul.f32 %v163, %v275
  %v427 = vmul.f32 %v164, %v275
  %v428 = vmul.f32 %v165, %v275
  %v429 = vmul.f32 %v166, %v275
  %v430 = vmul.f32 %v167, %v275
  %v431 = vmul.f32 %v168, %v275
  %v432 = vmul.f32 %v169, %v275
  %v433 = vmul.f32 %v170, %v275
  %v434 = vmul.f32 %v171, %v275
  %v435 = vmul.f32 %v172, %v275
  %v436 = vmul.f32 %v173, %v275
  %v437 = vmul.f32 %v174, %v275
  %v438 = vmul.f32 %v175, %v275
  %v439 = vmul.f32 %v176, %v275
  %v440 = vmul.f32 %v177, %v275
  %v441 = vmul.f32 %v178, %v275
  %v442 = vmul.f32 %v179, %v275
  %v443 = vmul.f32 %v180, %v275
  %v444 = vmul.f32 %v181, %v275
  %v445 = vmul.f32 %v182, %v275
  %v446 = vmul.f32 %v183, %v275
  %v447 = vmul.f32 %v184, %v275
  %v448 = vmul.f32 %v185, %v275
  %v449 = vmul.f32 %v186, %v275
  %v450 = vmul.f32 %v187, %v275
  %v451 = vmul.f32 %v188, %v275
  %v452 = vmul.f32 %v189, %v275
  %v453 = vmul.f32 %v190, %v275
  %v454 = vmul.f32 %v191, %v275
  %v455 = vmul.f32 %v192, %v275
  %v456 = vmul.f32 %v193, %v275
  %v457 = vmul.f32 %v194, %v275
  %v458 = vmul.f32 %v195, %v275
  %v459 = vmul.f32 %v196, %v275
  %v460 = vmul.f32 %v197, %v275
  %v461 = vmul.f32 %v198, %v275
  %v462 = vmul.f32 %v199, %v275
  %v463 = vmul.f32 %v200, %v275
  %v464 = vmul.f32 %v201, %v275
  %v465 = vmul.f32 %v202, %v275
  %v466 = vmul.f32 %v203, %v275
  %v467 = vmul.f32 %v204, %v275
  %v468 = vmul.f32 %v205, %v275
  %v469 = vmul.f32 %v206, %v275
  %v470 = vmul.f32 %v207, %v275
  %v471 = vmul.f32 %v208, %v275
  %v472 = vmul.f32 %v209, %v275
  %v473 = vmul.f32 %v210, %v275
  %v474 = vmul.f32 %v211, %v275
  %v475 = vmul.f32 %v212, %v275
  %v476 = vmul.f32 %v213, %v275
  %v477 = vmul.f32 %v214, %v275
  %v478 = vmul.f32 %v215, %v275
  %v479 = vmul.f32 %v216, %v275
  %v480 = vmul.f32 %v217, %v275
  %v481 = vmul.f32 %v218, %v275
  %v482 = vmul.f32 %v219, %v275
  %v483 = vmul.f32 %v220, %v275
  %v484 = vmul.f32 %v221, %v275
  %v485 = vmul.f32 %v222, %v275
  %v486 = vmul.f32 %v223, %v275
  %v487 = vmul.f32 %v224, %v275
  %v488 = vmul.f32 %v225, %v275
  %v489 = vmul.f32 %v226, %v275
  %v490 = vmul.f32 %v227, %v275
  %v491 = vmul.f32 %v228, %v275
  %v492 = vmul.f32 %v229, %v275
  %v493 = vmul.f32 %v230, %v275
  %v494 = vmul.f32 %v231, %v275
  %v495 = vmul.f32 %v232, %v275
  %v496 = vmul.f32 %v233, %v275
  %v497 = vmul.f32 %v234, %v275
  %v498 = vmul.f32 %v235, %v275
  %v499 = vmul.f32 %v236, %v275
  %v500 = vmul.f32 %v237, %v275
  %v501 = vmul.f32 %v238, %v275
  %v502 = vmul.f32 %v239, %v275
  %v503 = vmul.f32 %v240, %v275
  %v504 = vmul.f32 %v241, %v275
  %v505 = vmul.f32 %v242, %v275
  %v506 = vmul.f32 %v243, %v275
  %v507 = vmul.f32 %v244, %v275
  %v508 = vmul.f32 %v245, %v275
  %v509 = vmul.f32 %v246, %v275
  %v510 = vmul.f32 %v247, %v275
  %v511 = vmul.f32 %v248, %v275
  %v512 = vmul.f32 %v249, %v275
  %v513 = vmul.f32 %v250, %v275
  %v514 = vmul.f32 %v251, %v275
  %v515 = vmul.f32 %v252, %v275
  %v516 = vmul.f32 %v253, %v275
  %v517 = vmul.f32 %v254, %v275
  %v518 = vmul.f32 %v255, %v275
  %v519 = vmul.f32 %v256, %v275
  %v520 = vmul.f32 %v257, %v275
  %v521 = vmul.f32 %v258, %v275
  %v522 = vmul.f32 %v259, %v275
  %v523 = vmul.f32 %v260, %v275
  %v524 = vmul.f32 %v261, %v275
  %v525 = vmul.f32 %v262, %v275
  %v526 = vmul.f32 %v263, %v275
  %v527 = vmul.f32 %v264, %v275
  %v528 = vmul.f32 %v265, %v275
  %v529 = vmul.f32 %v266, %v275
  %v530 = vmul.f32 %v267, %v275
  %v531 = vmul.f32 %v268, %v275
  %v532 = vmul.f32 %v269, %v275
  %v533 = vld [vmem:[%s2] sm:$0x1]
  %v535 = vlaneseq
  %v536 = vshrl.u32 %v535, 7
  %v537 = vsub.s32 0, %v536
  %v538 = vrot.slane %v533, %v537
  %v540 = vadd.f32 %v277, %v538
  %v541 = vadd.f32 %v278, %v538
  %v542 = vadd.f32 %v279, %v538
  %v543 = vadd.f32 %v280, %v538
  %v544 = vadd.f32 %v281, %v538
  %v545 = vadd.f32 %v282, %v538
  %v546 = vadd.f32 %v283, %v538
  %v547 = vadd.f32 %v284, %v538
  %v548 = vadd.f32 %v285, %v538
  %v549 = vadd.f32 %v286, %v538
  %v550 = vadd.f32 %v287, %v538
  %v551 = vadd.f32 %v288, %v538
  %v552 = vadd.f32 %v289, %v538
  %v553 = vadd.f32 %v290, %v538
  %v554 = vadd.f32 %v291, %v538
  %v555 = vadd.f32 %v292, %v538
  %v556 = vadd.f32 %v293, %v538
  %v557 = vadd.f32 %v294, %v538
  %v558 = vadd.f32 %v295, %v538
  %v559 = vadd.f32 %v296, %v538
  %v560 = vadd.f32 %v297, %v538
  %v561 = vadd.f32 %v298, %v538
  %v562 = vadd.f32 %v299, %v538
  %v563 = vadd.f32 %v300, %v538
  %v564 = vadd.f32 %v301, %v538
  %v565 = vadd.f32 %v302, %v538
  %v566 = vadd.f32 %v303, %v538
  %v567 = vadd.f32 %v304, %v538
  %v568 = vadd.f32 %v305, %v538
  %v569 = vadd.f32 %v306, %v538
  %v570 = vadd.f32 %v307, %v538
  %v571 = vadd.f32 %v308, %v538
  %v572 = vadd.f32 %v309, %v538
  %v573 = vadd.f32 %v310, %v538
  %v574 = vadd.f32 %v311, %v538
  %v575 = vadd.f32 %v312, %v538
  %v576 = vadd.f32 %v313, %v538
  %v577 = vadd.f32 %v314, %v538
  %v578 = vadd.f32 %v315, %v538
  %v579 = vadd.f32 %v316, %v538
  %v580 = vadd.f32 %v317, %v538
  %v581 = vadd.f32 %v318, %v538
  %v582 = vadd.f32 %v319, %v538
  %v583 = vadd.f32 %v320, %v538
  %v584 = vadd.f32 %v321, %v538
  %v585 = vadd.f32 %v322, %v538
  %v586 = vadd.f32 %v323, %v538
  %v587 = vadd.f32 %v324, %v538
  %v588 = vadd.f32 %v325, %v538
  %v589 = vadd.f32 %v326, %v538
  %v590 = vadd.f32 %v327, %v538
  %v591 = vadd.f32 %v328, %v538
  %v592 = vadd.f32 %v329, %v538
  %v593 = vadd.f32 %v330, %v538
  %v594 = vadd.f32 %v331, %v538
  %v595 = vadd.f32 %v332, %v538
  %v596 = vadd.f32 %v333, %v538
  %v597 = vadd.f32 %v334, %v538
  %v598 = vadd.f32 %v335, %v538
  %v599 = vadd.f32 %v336, %v538
  %v600 = vadd.f32 %v337, %v538
  %v601 = vadd.f32 %v338, %v538
  %v602 = vadd.f32 %v339, %v538
  %v603 = vadd.f32 %v340, %v538
  %v604 = vadd.f32 %v341, %v538
  %v605 = vadd.f32 %v342, %v538
  %v606 = vadd.f32 %v343, %v538
  %v607 = vadd.f32 %v344, %v538
  %v608 = vadd.f32 %v345, %v538
  %v609 = vadd.f32 %v346, %v538
  %v610 = vadd.f32 %v347, %v538
  %v611 = vadd.f32 %v348, %v538
  %v612 = vadd.f32 %v349, %v538
  %v613 = vadd.f32 %v350, %v538
  %v614 = vadd.f32 %v351, %v538
  %v615 = vadd.f32 %v352, %v538
  %v616 = vadd.f32 %v353, %v538
  %v617 = vadd.f32 %v354, %v538
  %v618 = vadd.f32 %v355, %v538
  %v619 = vadd.f32 %v356, %v538
  %v620 = vadd.f32 %v357, %v538
  %v621 = vadd.f32 %v358, %v538
  %v622 = vadd.f32 %v359, %v538
  %v623 = vadd.f32 %v360, %v538
  %v624 = vadd.f32 %v361, %v538
  %v625 = vadd.f32 %v362, %v538
  %v626 = vadd.f32 %v363, %v538
  %v627 = vadd.f32 %v364, %v538
  %v628 = vadd.f32 %v365, %v538
  %v629 = vadd.f32 %v366, %v538
  %v630 = vadd.f32 %v367, %v538
  %v631 = vadd.f32 %v368, %v538
  %v632 = vadd.f32 %v369, %v538
  %v633 = vadd.f32 %v370, %v538
  %v634 = vadd.f32 %v371, %v538
  %v635 = vadd.f32 %v372, %v538
  %v636 = vadd.f32 %v373, %v538
  %v637 = vadd.f32 %v374, %v538
  %v638 = vadd.f32 %v375, %v538
  %v639 = vadd.f32 %v376, %v538
  %v640 = vadd.f32 %v377, %v538
  %v641 = vadd.f32 %v378, %v538
  %v642 = vadd.f32 %v379, %v538
  %v643 = vadd.f32 %v380, %v538
  %v644 = vadd.f32 %v381, %v538
  %v645 = vadd.f32 %v382, %v538
  %v646 = vadd.f32 %v383, %v538
  %v647 = vadd.f32 %v384, %v538
  %v648 = vadd.f32 %v385, %v538
  %v649 = vadd.f32 %v386, %v538
  %v650 = vadd.f32 %v387, %v538
  %v651 = vadd.f32 %v388, %v538
  %v652 = vadd.f32 %v389, %v538
  %v653 = vadd.f32 %v390, %v538
  %v654 = vadd.f32 %v391, %v538
  %v655 = vadd.f32 %v392, %v538
  %v656 = vadd.f32 %v393, %v538
  %v657 = vadd.f32 %v394, %v538
  %v658 = vadd.f32 %v395, %v538
  %v659 = vadd.f32 %v396, %v538
  %v660 = vadd.f32 %v397, %v538
  %v661 = vadd.f32 %v398, %v538
  %v662 = vadd.f32 %v399, %v538
  %v663 = vadd.f32 %v400, %v538
  %v664 = vadd.f32 %v401, %v538
  %v665 = vadd.f32 %v402, %v538
  %v666 = vadd.f32 %v403, %v538
  %v667 = vadd.f32 %v404, %v538
  %v668 = vadd.f32 %v405, %v538
  %v669 = vadd.f32 %v406, %v538
  %v670 = vadd.f32 %v407, %v538
  %v671 = vadd.f32 %v408, %v538
  %v672 = vadd.f32 %v409, %v538
  %v673 = vadd.f32 %v410, %v538
  %v674 = vadd.f32 %v411, %v538
  %v675 = vadd.f32 %v412, %v538
  %v676 = vadd.f32 %v413, %v538
  %v677 = vadd.f32 %v414, %v538
  %v678 = vadd.f32 %v415, %v538
  %v679 = vadd.f32 %v416, %v538
  %v680 = vadd.f32 %v417, %v538
  %v681 = vadd.f32 %v418, %v538
  %v682 = vadd.f32 %v419, %v538
  %v683 = vadd.f32 %v420, %v538
  %v684 = vadd.f32 %v421, %v538
  %v685 = vadd.f32 %v422, %v538
  %v686 = vadd.f32 %v423, %v538
  %v687 = vadd.f32 %v424, %v538
  %v688 = vadd.f32 %v425, %v538
  %v689 = vadd.f32 %v426, %v538
  %v690 = vadd.f32 %v427, %v538
  %v691 = vadd.f32 %v428, %v538
  %v692 = vadd.f32 %v429, %v538
  %v693 = vadd.f32 %v430, %v538
  %v694 = vadd.f32 %v431, %v538
  %v695 = vadd.f32 %v432, %v538
  %v696 = vadd.f32 %v433, %v538
  %v697 = vadd.f32 %v434, %v538
  %v698 = vadd.f32 %v435, %v538
  %v699 = vadd.f32 %v436, %v538
  %v700 = vadd.f32 %v437, %v538
  %v701 = vadd.f32 %v438, %v538
  %v702 = vadd.f32 %v439, %v538
  %v703 = vadd.f32 %v440, %v538
  %v704 = vadd.f32 %v441, %v538
  %v705 = vadd.f32 %v442, %v538
  %v706 = vadd.f32 %v443, %v538
  %v707 = vadd.f32 %v444, %v538
  %v708 = vadd.f32 %v445, %v538
  %v709 = vadd.f32 %v446, %v538
  %v710 = vadd.f32 %v447, %v538
  %v711 = vadd.f32 %v448, %v538
  %v712 = vadd.f32 %v449, %v538
  %v713 = vadd.f32 %v450, %v538
  %v714 = vadd.f32 %v451, %v538
  %v715 = vadd.f32 %v452, %v538
  %v716 = vadd.f32 %v453, %v538
  %v717 = vadd.f32 %v454, %v538
  %v718 = vadd.f32 %v455, %v538
  %v719 = vadd.f32 %v456, %v538
  %v720 = vadd.f32 %v457, %v538
  %v721 = vadd.f32 %v458, %v538
  %v722 = vadd.f32 %v459, %v538
  %v723 = vadd.f32 %v460, %v538
  %v724 = vadd.f32 %v461, %v538
  %v725 = vadd.f32 %v462, %v538
  %v726 = vadd.f32 %v463, %v538
  %v727 = vadd.f32 %v464, %v538
  %v728 = vadd.f32 %v465, %v538
  %v729 = vadd.f32 %v466, %v538
  %v730 = vadd.f32 %v467, %v538
  %v731 = vadd.f32 %v468, %v538
  %v732 = vadd.f32 %v469, %v538
  %v733 = vadd.f32 %v470, %v538
  %v734 = vadd.f32 %v471, %v538
  %v735 = vadd.f32 %v472, %v538
  %v736 = vadd.f32 %v473, %v538
  %v737 = vadd.f32 %v474, %v538
  %v738 = vadd.f32 %v475, %v538
  %v739 = vadd.f32 %v476, %v538
  %v740 = vadd.f32 %v477, %v538
  %v741 = vadd.f32 %v478, %v538
  %v742 = vadd.f32 %v479, %v538
  %v743 = vadd.f32 %v480, %v538
  %v744 = vadd.f32 %v481, %v538
  %v745 = vadd.f32 %v482, %v538
  %v746 = vadd.f32 %v483, %v538
  %v747 = vadd.f32 %v484, %v538
  %v748 = vadd.f32 %v485, %v538
  %v749 = vadd.f32 %v486, %v538
  %v750 = vadd.f32 %v487, %v538
  %v751 = vadd.f32 %v488, %v538
  %v752 = vadd.f32 %v489, %v538
  %v753 = vadd.f32 %v490, %v538
  %v754 = vadd.f32 %v491, %v538
  %v755 = vadd.f32 %v492, %v538
  %v756 = vadd.f32 %v493, %v538
  %v757 = vadd.f32 %v494, %v538
  %v758 = vadd.f32 %v495, %v538
  %v759 = vadd.f32 %v496, %v538
  %v760 = vadd.f32 %v497, %v538
  %v761 = vadd.f32 %v498, %v538
  %v762 = vadd.f32 %v499, %v538
  %v763 = vadd.f32 %v500, %v538
  %v764 = vadd.f32 %v501, %v538
  %v765 = vadd.f32 %v502, %v538
  %v766 = vadd.f32 %v503, %v538
  %v767 = vadd.f32 %v504, %v538
  %v768 = vadd.f32 %v505, %v538
  %v769 = vadd.f32 %v506, %v538
  %v770 = vadd.f32 %v507, %v538
  %v771 = vadd.f32 %v508, %v538
  %v772 = vadd.f32 %v509, %v538
  %v773 = vadd.f32 %v510, %v538
  %v774 = vadd.f32 %v511, %v538
  %v775 = vadd.f32 %v512, %v538
  %v776 = vadd.f32 %v513, %v538
  %v777 = vadd.f32 %v514, %v538
  %v778 = vadd.f32 %v515, %v538
  %v779 = vadd.f32 %v516, %v538
  %v780 = vadd.f32 %v517, %v538
  %v781 = vadd.f32 %v518, %v538
  %v782 = vadd.f32 %v519, %v538
  %v783 = vadd.f32 %v520, %v538
  %v784 = vadd.f32 %v521, %v538
  %v785 = vadd.f32 %v522, %v538
  %v786 = vadd.f32 %v523, %v538
  %v787 = vadd.f32 %v524, %v538
  %v788 = vadd.f32 %v525, %v538
  %v789 = vadd.f32 %v526, %v538
  %v790 = vadd.f32 %v527, %v538
  %v791 = vadd.f32 %v528, %v538
  %v792 = vadd.f32 %v529, %v538
  %v793 = vadd.f32 %v530, %v538
  %v794 = vadd.f32 %v531, %v538
  %v795 = vadd.f32 %v532, %v538
  %v796 = vmax.f32 %v540, 0.0
  %v797 = vmax.f32 %v541, 0.0
  %v798 = vmax.f32 %v542, 0.0
  %v799 = vmax.f32 %v543, 0.0
  %v800 = vmax.f32 %v544, 0.0
  %v801 = vmax.f32 %v545, 0.0
  %v802 = vmax.f32 %v546, 0.0
  %v803 = vmax.f32 %v547, 0.0
  %v804 = vmax.f32 %v548, 0.0
  %v805 = vmax.f32 %v549, 0.0
  %v806 = vmax.f32 %v550, 0.0
  %v807 = vmax.f32 %v551, 0.0
  %v808 = vmax.f32 %v552, 0.0
  %v809 = vmax.f32 %v553, 0.0
  %v810 = vmax.f32 %v554, 0.0
  %v811 = vmax.f32 %v555, 0.0
  %v812 = vmax.f32 %v556, 0.0
  %v813 = vmax.f32 %v557, 0.0
  %v814 = vmax.f32 %v558, 0.0
  %v815 = vmax.f32 %v559, 0.0
  %v816 = vmax.f32 %v560, 0.0
  %v817 = vmax.f32 %v561, 0.0
  %v818 = vmax.f32 %v562, 0.0
  %v819 = vmax.f32 %v563, 0.0
  %v820 = vmax.f32 %v564, 0.0
  %v821 = vmax.f32 %v565, 0.0
  %v822 = vmax.f32 %v566, 0.0
  %v823 = vmax.f32 %v567, 0.0
  %v824 = vmax.f32 %v568, 0.0
  %v825 = vmax.f32 %v569, 0.0
  %v826 = vmax.f32 %v570, 0.0
  %v827 = vmax.f32 %v571, 0.0
  %v828 = vmax.f32 %v572, 0.0
  %v829 = vmax.f32 %v573, 0.0
  %v830 = vmax.f32 %v574, 0.0
  %v831 = vmax.f32 %v575, 0.0
  %v832 = vmax.f32 %v576, 0.0
  %v833 = vmax.f32 %v577, 0.0
  %v834 = vmax.f32 %v578, 0.0
  %v835 = vmax.f32 %v579, 0.0
  %v836 = vmax.f32 %v580, 0.0
  %v837 = vmax.f32 %v581, 0.0
  %v838 = vmax.f32 %v582, 0.0
  %v839 = vmax.f32 %v583, 0.0
  %v840 = vmax.f32 %v584, 0.0
  %v841 = vmax.f32 %v585, 0.0
  %v842 = vmax.f32 %v586, 0.0
  %v843 = vmax.f32 %v587, 0.0
  %v844 = vmax.f32 %v588, 0.0
  %v845 = vmax.f32 %v589, 0.0
  %v846 = vmax.f32 %v590, 0.0
  %v847 = vmax.f32 %v591, 0.0
  %v848 = vmax.f32 %v592, 0.0
  %v849 = vmax.f32 %v593, 0.0
  %v850 = vmax.f32 %v594, 0.0
  %v851 = vmax.f32 %v595, 0.0
  %v852 = vmax.f32 %v596, 0.0
  %v853 = vmax.f32 %v597, 0.0
  %v854 = vmax.f32 %v598, 0.0
  %v855 = vmax.f32 %v599, 0.0
  %v856 = vmax.f32 %v600, 0.0
  %v857 = vmax.f32 %v601, 0.0
  %v858 = vmax.f32 %v602, 0.0
  %v859 = vmax.f32 %v603, 0.0
  %v860 = vmax.f32 %v604, 0.0
  %v861 = vmax.f32 %v605, 0.0
  %v862 = vmax.f32 %v606, 0.0
  %v863 = vmax.f32 %v607, 0.0
  %v864 = vmax.f32 %v608, 0.0
  %v865 = vmax.f32 %v609, 0.0
  %v866 = vmax.f32 %v610, 0.0
  %v867 = vmax.f32 %v611, 0.0
  %v868 = vmax.f32 %v612, 0.0
  %v869 = vmax.f32 %v613, 0.0
  %v870 = vmax.f32 %v614, 0.0
  %v871 = vmax.f32 %v615, 0.0
  %v872 = vmax.f32 %v616, 0.0
  %v873 = vmax.f32 %v617, 0.0
  %v874 = vmax.f32 %v618, 0.0
  %v875 = vmax.f32 %v619, 0.0
  %v876 = vmax.f32 %v620, 0.0
  %v877 = vmax.f32 %v621, 0.0
  %v878 = vmax.f32 %v622, 0.0
  %v879 = vmax.f32 %v623, 0.0
  %v880 = vmax.f32 %v624, 0.0
  %v881 = vmax.f32 %v625, 0.0
  %v882 = vmax.f32 %v626, 0.0
  %v883 = vmax.f32 %v627, 0.0
  %v884 = vmax.f32 %v628, 0.0
  %v885 = vmax.f32 %v629, 0.0
  %v886 = vmax.f32 %v630, 0.0
  %v887 = vmax.f32 %v631, 0.0
  %v888 = vmax.f32 %v632, 0.0
  %v889 = vmax.f32 %v633, 0.0
  %v890 = vmax.f32 %v634, 0.0
  %v891 = vmax.f32 %v635, 0.0
  %v892 = vmax.f32 %v636, 0.0
  %v893 = vmax.f32 %v637, 0.0
  %v894 = vmax.f32 %v638, 0.0
  %v895 = vmax.f32 %v639, 0.0
  %v896 = vmax.f32 %v640, 0.0
  %v897 = vmax.f32 %v641, 0.0
  %v898 = vmax.f32 %v642, 0.0
  %v899 = vmax.f32 %v643, 0.0
  %v900 = vmax.f32 %v644, 0.0
  %v901 = vmax.f32 %v645, 0.0
  %v902 = vmax.f32 %v646, 0.0
  %v903 = vmax.f32 %v647, 0.0
  %v904 = vmax.f32 %v648, 0.0
  %v905 = vmax.f32 %v649, 0.0
  %v906 = vmax.f32 %v650, 0.0
  %v907 = vmax.f32 %v651, 0.0
  %v908 = vmax.f32 %v652, 0.0
  %v909 = vmax.f32 %v653, 0.0
  %v910 = vmax.f32 %v654, 0.0
  %v911 = vmax.f32 %v655, 0.0
  %v912 = vmax.f32 %v656, 0.0
  %v913 = vmax.f32 %v657, 0.0
  %v914 = vmax.f32 %v658, 0.0
  %v915 = vmax.f32 %v659, 0.0
  %v916 = vmax.f32 %v660, 0.0
  %v917 = vmax.f32 %v661, 0.0
  %v918 = vmax.f32 %v662, 0.0
  %v919 = vmax.f32 %v663, 0.0
  %v920 = vmax.f32 %v664, 0.0
  %v921 = vmax.f32 %v665, 0.0
  %v922 = vmax.f32 %v666, 0.0
  %v923 = vmax.f32 %v667, 0.0
  %v924 = vmax.f32 %v668, 0.0
  %v925 = vmax.f32 %v669, 0.0
  %v926 = vmax.f32 %v670, 0.0
  %v927 = vmax.f32 %v671, 0.0
  %v928 = vmax.f32 %v672, 0.0
  %v929 = vmax.f32 %v673, 0.0
  %v930 = vmax.f32 %v674, 0.0
  %v931 = vmax.f32 %v675, 0.0
  %v932 = vmax.f32 %v676, 0.0
  %v933 = vmax.f32 %v677, 0.0
  %v934 = vmax.f32 %v678, 0.0
  %v935 = vmax.f32 %v679, 0.0
  %v936 = vmax.f32 %v680, 0.0
  %v937 = vmax.f32 %v681, 0.0
  %v938 = vmax.f32 %v682, 0.0
  %v939 = vmax.f32 %v683, 0.0
  %v940 = vmax.f32 %v684, 0.0
  %v941 = vmax.f32 %v685, 0.0
  %v942 = vmax.f32 %v686, 0.0
  %v943 = vmax.f32 %v687, 0.0
  %v944 = vmax.f32 %v688, 0.0
  %v945 = vmax.f32 %v689, 0.0
  %v946 = vmax.f32 %v690, 0.0
  %v947 = vmax.f32 %v691, 0.0
  %v948 = vmax.f32 %v692, 0.0
  %v949 = vmax.f32 %v693, 0.0
  %v950 = vmax.f32 %v694, 0.0
  %v951 = vmax.f32 %v695, 0.0
  %v952 = vmax.f32 %v696, 0.0
  %v953 = vmax.f32 %v697, 0.0
  %v954 = vmax.f32 %v698, 0.0
  %v955 = vmax.f32 %v699, 0.0
  %v956 = vmax.f32 %v700, 0.0
  %v957 = vmax.f32 %v701, 0.0
  %v958 = vmax.f32 %v702, 0.0
  %v959 = vmax.f32 %v703, 0.0
  %v960 = vmax.f32 %v704, 0.0
  %v961 = vmax.f32 %v705, 0.0
  %v962 = vmax.f32 %v706, 0.0
  %v963 = vmax.f32 %v707, 0.0
  %v964 = vmax.f32 %v708, 0.0
  %v965 = vmax.f32 %v709, 0.0
  %v966 = vmax.f32 %v710, 0.0
  %v967 = vmax.f32 %v711, 0.0
  %v968 = vmax.f32 %v712, 0.0
  %v969 = vmax.f32 %v713, 0.0
  %v970 = vmax.f32 %v714, 0.0
  %v971 = vmax.f32 %v715, 0.0
  %v972 = vmax.f32 %v716, 0.0
  %v973 = vmax.f32 %v717, 0.0
  %v974 = vmax.f32 %v718, 0.0
  %v975 = vmax.f32 %v719, 0.0
  %v976 = vmax.f32 %v720, 0.0
  %v977 = vmax.f32 %v721, 0.0
  %v978 = vmax.f32 %v722, 0.0
  %v979 = vmax.f32 %v723, 0.0
  %v980 = vmax.f32 %v724, 0.0
  %v981 = vmax.f32 %v725, 0.0
  %v982 = vmax.f32 %v726, 0.0
  %v983 = vmax.f32 %v727, 0.0
  %v984 = vmax.f32 %v728, 0.0
  %v985 = vmax.f32 %v729, 0.0
  %v986 = vmax.f32 %v730, 0.0
  %v987 = vmax.f32 %v731, 0.0
  %v988 = vmax.f32 %v732, 0.0
  %v989 = vmax.f32 %v733, 0.0
  %v990 = vmax.f32 %v734, 0.0
  %v991 = vmax.f32 %v735, 0.0
  %v992 = vmax.f32 %v736, 0.0
  %v993 = vmax.f32 %v737, 0.0
  %v994 = vmax.f32 %v738, 0.0
  %v995 = vmax.f32 %v739, 0.0
  %v996 = vmax.f32 %v740, 0.0
  %v997 = vmax.f32 %v741, 0.0
  %v998 = vmax.f32 %v742, 0.0
  %v999 = vmax.f32 %v743, 0.0
  %v1000 = vmax.f32 %v744, 0.0
  %v1001 = vmax.f32 %v745, 0.0
  %v1002 = vmax.f32 %v746, 0.0
  %v1003 = vmax.f32 %v747, 0.0
  %v1004 = vmax.f32 %v748, 0.0
  %v1005 = vmax.f32 %v749, 0.0
  %v1006 = vmax.f32 %v750, 0.0
  %v1007 = vmax.f32 %v751, 0.0
  %v1008 = vmax.f32 %v752, 0.0
  %v1009 = vmax.f32 %v753, 0.0
  %v1010 = vmax.f32 %v754, 0.0
  %v1011 = vmax.f32 %v755, 0.0
  %v1012 = vmax.f32 %v756, 0.0
  %v1013 = vmax.f32 %v757, 0.0
  %v1014 = vmax.f32 %v758, 0.0
  %v1015 = vmax.f32 %v759, 0.0
  %v1016 = vmax.f32 %v760, 0.0
  %v1017 = vmax.f32 %v761, 0.0
  %v1018 = vmax.f32 %v762, 0.0
  %v1019 = vmax.f32 %v763, 0.0
  %v1020 = vmax.f32 %v764, 0.0
  %v1021 = vmax.f32 %v765, 0.0
  %v1022 = vmax.f32 %v766, 0.0
  %v1023 = vmax.f32 %v767, 0.0
  %v1024 = vmax.f32 %v768, 0.0
  %v1025 = vmax.f32 %v769, 0.0
  %v1026 = vmax.f32 %v770, 0.0
  %v1027 = vmax.f32 %v771, 0.0
  %v1028 = vmax.f32 %v772, 0.0
  %v1029 = vmax.f32 %v773, 0.0
  %v1030 = vmax.f32 %v774, 0.0
  %v1031 = vmax.f32 %v775, 0.0
  %v1032 = vmax.f32 %v776, 0.0
  %v1033 = vmax.f32 %v777, 0.0
  %v1034 = vmax.f32 %v778, 0.0
  %v1035 = vmax.f32 %v779, 0.0
  %v1036 = vmax.f32 %v780, 0.0
  %v1037 = vmax.f32 %v781, 0.0
  %v1038 = vmax.f32 %v782, 0.0
  %v1039 = vmax.f32 %v783, 0.0
  %v1040 = vmax.f32 %v784, 0.0
  %v1041 = vmax.f32 %v785, 0.0
  %v1042 = vmax.f32 %v786, 0.0
  %v1043 = vmax.f32 %v787, 0.0
  %v1044 = vmax.f32 %v788, 0.0
  %v1045 = vmax.f32 %v789, 0.0
  %v1046 = vmax.f32 %v790, 0.0
  %v1047 = vmax.f32 %v791, 0.0
  %v1048 = vmax.f32 %v792, 0.0
  %v1049 = vmax.f32 %v793, 0.0
  %v1050 = vmax.f32 %v794, 0.0
  %v1051 = vmax.f32 %v795, 0.0
  %1052 = vst [vmem:[%s3] sm:$0xff] %v796
  %1053 = vst [vmem:[%s3 + $0x8] sm:$0xff] %v797
  %1054 = vst [vmem:[%s3 + $0x10] sm:$0xff] %v798
  %1055 = vst [vmem:[%s3 + $0x18] sm:$0xff] %v799
  %1056 = vst [vmem:[%s3 + $0x20] sm:$0xff] %v800
  %1057 = vst [vmem:[%s3 + $0x28] sm:$0xff] %v801
  %1058 = vst [vmem:[%s3 + $0x30] sm:$0xff] %v802
  %1059 = vst [vmem:[%s3 + $0x38] sm:$0xff] %v803
  %1060 = vst [vmem:[%s3 + $0x40] sm:$0xff] %v804
  %1061 = vst [vmem:[%s3 + $0x48] sm:$0xff] %v805
  %1062 = vst [vmem:[%s3 + $0x50] sm:$0xff] %v806
  %1063 = vst [vmem:[%s3 + $0x58] sm:$0xff] %v807
  %1064 = vst [vmem:[%s3 + $0x60] sm:$0xff] %v808
  %1065 = vst [vmem:[%s3 + $0x68] sm:$0xff] %v809
  %1066 = vst [vmem:[%s3 + $0x70] sm:$0xff] %v810
  %1067 = vst [vmem:[%s3 + $0x78] sm:$0xff] %v811
  %1068 = vst [vmem:[%s3 + $0x80] sm:$0xff] %v812
  %1069 = vst [vmem:[%s3 + $0x88] sm:$0xff] %v813
  %1070 = vst [vmem:[%s3 + $0x90] sm:$0xff] %v814
  %1071 = vst [vmem:[%s3 + $0x98] sm:$0xff] %v815
  %1072 = vst [vmem:[%s3 + $0xa0] sm:$0xff] %v816
  %1073 = vst [vmem:[%s3 + $0xa8] sm:$0xff] %v817
  %1074 = vst [vmem:[%s3 + $0xb0] sm:$0xff] %v818
  %1075 = vst [vmem:[%s3 + $0xb8] sm:$0xff] %v819
  %1076 = vst [vmem:[%s3 + $0xc0] sm:$0xff] %v820
  %1077 = vst [vmem:[%s3 + $0xc8] sm:$0xff] %v821
  %1078 = vst [vmem:[%s3 + $0xd0] sm:$0xff] %v822
  %1079 = vst [vmem:[%s3 + $0xd8] sm:$0xff] %v823
  %1080 = vst [vmem:[%s3 + $0xe0] sm:$0xff] %v824
  %1081 = vst [vmem:[%s3 + $0xe8] sm:$0xff] %v825
  %1082 = vst [vmem:[%s3 + $0xf0] sm:$0xff] %v826
  %1083 = vst [vmem:[%s3 + $0xf8] sm:$0xff] %v827
  %1084 = vst [vmem:[%s3 + $0x100] sm:$0xff] %v828
  %1085 = vst [vmem:[%s3 + $0x108] sm:$0xff] %v829
  %1086 = vst [vmem:[%s3 + $0x110] sm:$0xff] %v830
  %1087 = vst [vmem:[%s3 + $0x118] sm:$0xff] %v831
  %1088 = vst [vmem:[%s3 + $0x120] sm:$0xff] %v832
  %1089 = vst [vmem:[%s3 + $0x128] sm:$0xff] %v833
  %1090 = vst [vmem:[%s3 + $0x130] sm:$0xff] %v834
  %1091 = vst [vmem:[%s3 + $0x138] sm:$0xff] %v835
  %1092 = vst [vmem:[%s3 + $0x140] sm:$0xff] %v836
  %1093 = vst [vmem:[%s3 + $0x148] sm:$0xff] %v837
  %1094 = vst [vmem:[%s3 + $0x150] sm:$0xff] %v838
  %1095 = vst [vmem:[%s3 + $0x158] sm:$0xff] %v839
  %1096 = vst [vmem:[%s3 + $0x160] sm:$0xff] %v840
  %1097 = vst [vmem:[%s3 + $0x168] sm:$0xff] %v841
  %1098 = vst [vmem:[%s3 + $0x170] sm:$0xff] %v842
  %1099 = vst [vmem:[%s3 + $0x178] sm:$0xff] %v843
  %1100 = vst [vmem:[%s3 + $0x180] sm:$0xff] %v844
  %1101 = vst [vmem:[%s3 + $0x188] sm:$0xff] %v845
  %1102 = vst [vmem:[%s3 + $0x190] sm:$0xff] %v846
  %1103 = vst [vmem:[%s3 + $0x198] sm:$0xff] %v847
  %1104 = vst [vmem:[%s3 + $0x1a0] sm:$0xff] %v848
  %1105 = vst [vmem:[%s3 + $0x1a8] sm:$0xff] %v849
  %1106 = vst [vmem:[%s3 + $0x1b0] sm:$0xff] %v850
  %1107 = vst [vmem:[%s3 + $0x1b8] sm:$0xff] %v851
  %1108 = vst [vmem:[%s3 + $0x1c0] sm:$0xff] %v852
  %1109 = vst [vmem:[%s3 + $0x1c8] sm:$0xff] %v853
  %1110 = vst [vmem:[%s3 + $0x1d0] sm:$0xff] %v854
  %1111 = vst [vmem:[%s3 + $0x1d8] sm:$0xff] %v855
  %1112 = vst [vmem:[%s3 + $0x1e0] sm:$0xff] %v856
  %1113 = vst [vmem:[%s3 + $0x1e8] sm:$0xff] %v857
  %1114 = vst [vmem:[%s3 + $0x1f0] sm:$0xff] %v858
  %1115 = vst [vmem:[%s3 + $0x1f8] sm:$0xff] %v859
  %1116 = vst [vmem:[%s3 + $0x200] sm:$0xff] %v860
  %1117 = vst [vmem:[%s3 + $0x208] sm:$0xff] %v861
  %1118 = vst [vmem:[%s3 + $0x210] sm:$0xff] %v862
  %1119 = vst [vmem:[%s3 + $0x218] sm:$0xff] %v863
  %1120 = vst [vmem:[%s3 + $0x220] sm:$0xff] %v864
  %1121 = vst [vmem:[%s3 + $0x228] sm:$0xff] %v865
  %1122 = vst [vmem:[%s3 + $0x230] sm:$0xff] %v866
  %1123 = vst [vmem:[%s3 + $0x238] sm:$0xff] %v867
  %1124 = vst [vmem:[%s3 + $0x240] sm:$0xff] %v868
  %1125 = vst [vmem:[%s3 + $0x248] sm:$0xff] %v869
  %1126 = vst [vmem:[%s3 + $0x250] sm:$0xff] %v870
  %1127 = vst [vmem:[%s3 + $0x258] sm:$0xff] %v871
  %1128 = vst [vmem:[%s3 + $0x260] sm:$0xff] %v872
  %1129 = vst [vmem:[%s3 + $0x268] sm:$0xff] %v873
  %1130 = vst [vmem:[%s3 + $0x270] sm:$0xff] %v874
  %1131 = vst [vmem:[%s3 + $0x278] sm:$0xff] %v875
  %1132 = vst [vmem:[%s3 + $0x280] sm:$0xff] %v876
  %1133 = vst [vmem:[%s3 + $0x288] sm:$0xff] %v877
  %1134 = vst [vmem:[%s3 + $0x290] sm:$0xff] %v878
  %1135 = vst [vmem:[%s3 + $0x298] sm:$0xff] %v879
  %1136 = vst [vmem:[%s3 + $0x2a0] sm:$0xff] %v880
  %1137 = vst [vmem:[%s3 + $0x2a8] sm:$0xff] %v881
  %1138 = vst [vmem:[%s3 + $0x2b0] sm:$0xff] %v882
  %1139 = vst [vmem:[%s3 + $0x2b8] sm:$0xff] %v883
  %1140 = vst [vmem:[%s3 + $0x2c0] sm:$0xff] %v884
  %1141 = vst [vmem:[%s3 + $0x2c8] sm:$0xff] %v885
  %1142 = vst [vmem:[%s3 + $0x2d0] sm:$0xff] %v886
  %1143 = vst [vmem:[%s3 + $0x2d8] sm:$0xff] %v887
  %1144 = vst [vmem:[%s3 + $0x2e0] sm:$0xff] %v888
  %1145 = vst [vmem:[%s3 + $0x2e8] sm:$0xff] %v889
  %1146 = vst [vmem:[%s3 + $0x2f0] sm:$0xff] %v890
  %1147 = vst [vmem:[%s3 + $0x2f8] sm:$0xff] %v891
  %1148 = vst [vmem:[%s3 + $0x300] sm:$0xff] %v892
  %1149 = vst [vmem:[%s3 + $0x308] sm:$0xff] %v893
  %1150 = vst [vmem:[%s3 + $0x310] sm:$0xff] %v894
  %1151 = vst [vmem:[%s3 + $0x318] sm:$0xff] %v895
  %1152 = vst [vmem:[%s3 + $0x320] sm:$0xff] %v896
  %1153 = vst [vmem:[%s3 + $0x328] sm:$0xff] %v897
  %1154 = vst [vmem:[%s3 + $0x330] sm:$0xff] %v898
  %1155 = vst [vmem:[%s3 + $0x338] sm:$0xff] %v899
  %1156 = vst [vmem:[%s3 + $0x340] sm:$0xff] %v900
  %1157 = vst [vmem:[%s3 + $0x348] sm:$0xff] %v901
  %1158 = vst [vmem:[%s3 + $0x350] sm:$0xff] %v902
  %1159 = vst [vmem:[%s3 + $0x358] sm:$0xff] %v903
  %1160 = vst [vmem:[%s3 + $0x360] sm:$0xff] %v904
  %1161 = vst [vmem:[%s3 + $0x368] sm:$0xff] %v905
  %1162 = vst [vmem:[%s3 + $0x370] sm:$0xff] %v906
  %1163 = vst [vmem:[%s3 + $0x378] sm:$0xff] %v907
  %1164 = vst [vmem:[%s3 + $0x380] sm:$0xff] %v908
  %1165 = vst [vmem:[%s3 + $0x388] sm:$0xff] %v909
  %1166 = vst [vmem:[%s3 + $0x390] sm:$0xff] %v910
  %1167 = vst [vmem:[%s3 + $0x398] sm:$0xff] %v911
  %1168 = vst [vmem:[%s3 + $0x3a0] sm:$0xff] %v912
  %1169 = vst [vmem:[%s3 + $0x3a8] sm:$0xff] %v913
  %1170 = vst [vmem:[%s3 + $0x3b0] sm:$0xff] %v914
  %1171 = vst [vmem:[%s3 + $0x3b8] sm:$0xff] %v915
  %1172 = vst [vmem:[%s3 + $0x3c0] sm:$0xff] %v916
  %1173 = vst [vmem:[%s3 + $0x3c8] sm:$0xff] %v917
  %1174 = vst [vmem:[%s3 + $0x3d0] sm:$0xff] %v918
  %1175 = vst [vmem:[%s3 + $0x3d8] sm:$0xff] %v919
  %1176 = vst [vmem:[%s3 + $0x3e0] sm:$0xff] %v920
  %1177 = vst [vmem:[%s3 + $0x3e8] sm:$0xff] %v921
  %1178 = vst [vmem:[%s3 + $0x3f0] sm:$0xff] %v922
  %1179 = vst [vmem:[%s3 + $0x3f8] sm:$0xff] %v923
  %1180 = vst [vmem:[%s3 + $0x400] sm:$0xff] %v924
  %1181 = vst [vmem:[%s3 + $0x408] sm:$0xff] %v925
  %1182 = vst [vmem:[%s3 + $0x410] sm:$0xff] %v926
  %1183 = vst [vmem:[%s3 + $0x418] sm:$0xff] %v927
  %1184 = vst [vmem:[%s3 + $0x420] sm:$0xff] %v928
  %1185 = vst [vmem:[%s3 + $0x428] sm:$0xff] %v929
  %1186 = vst [vmem:[%s3 + $0x430] sm:$0xff] %v930
  %1187 = vst [vmem:[%s3 + $0x438] sm:$0xff] %v931
  %1188 = vst [vmem:[%s3 + $0x440] sm:$0xff] %v932
  %1189 = vst [vmem:[%s3 + $0x448] sm:$0xff] %v933
  %1190 = vst [vmem:[%s3 + $0x450] sm:$0xff] %v934
  %1191 = vst [vmem:[%s3 + $0x458] sm:$0xff] %v935
  %1192 = vst [vmem:[%s3 + $0x460] sm:$0xff] %v936
  %1193 = vst [vmem:[%s3 + $0x468] sm:$0xff] %v937
  %1194 = vst [vmem:[%s3 + $0x470] sm:$0xff] %v938
  %1195 = vst [vmem:[%s3 + $0x478] sm:$0xff] %v939
  %1196 = vst [vmem:[%s3 + $0x480] sm:$0xff] %v940
  %1197 = vst [vmem:[%s3 + $0x488] sm:$0xff] %v941
  %1198 = vst [vmem:[%s3 + $0x490] sm:$0xff] %v942
  %1199 = vst [vmem:[%s3 + $0x498] sm:$0xff] %v943
  %1200 = vst [vmem:[%s3 + $0x4a0] sm:$0xff] %v944
  %1201 = vst [vmem:[%s3 + $0x4a8] sm:$0xff] %v945
  %1202 = vst [vmem:[%s3 + $0x4b0] sm:$0xff] %v946
  %1203 = vst [vmem:[%s3 + $0x4b8] sm:$0xff] %v947
  %1204 = vst [vmem:[%s3 + $0x4c0] sm:$0xff] %v948
  %1205 = vst [vmem:[%s3 + $0x4c8] sm:$0xff] %v949
  %1206 = vst [vmem:[%s3 + $0x4d0] sm:$0xff] %v950
  %1207 = vst [vmem:[%s3 + $0x4d8] sm:$0xff] %v951
  %1208 = vst [vmem:[%s3 + $0x4e0] sm:$0xff] %v952
  %1209 = vst [vmem:[%s3 + $0x4e8] sm:$0xff] %v953
  %1210 = vst [vmem:[%s3 + $0x4f0] sm:$0xff] %v954
  %1211 = vst [vmem:[%s3 + $0x4f8] sm:$0xff] %v955
  %1212 = vst [vmem:[%s3 + $0x500] sm:$0xff] %v956
  %1213 = vst [vmem:[%s3 + $0x508] sm:$0xff] %v957
  %1214 = vst [vmem:[%s3 + $0x510] sm:$0xff] %v958
  %1215 = vst [vmem:[%s3 + $0x518] sm:$0xff] %v959
  %1216 = vst [vmem:[%s3 + $0x520] sm:$0xff] %v960
  %1217 = vst [vmem:[%s3 + $0x528] sm:$0xff] %v961
  %1218 = vst [vmem:[%s3 + $0x530] sm:$0xff] %v962
  %1219 = vst [vmem:[%s3 + $0x538] sm:$0xff] %v963
  %1220 = vst [vmem:[%s3 + $0x540] sm:$0xff] %v964
  %1221 = vst [vmem:[%s3 + $0x548] sm:$0xff] %v965
  %1222 = vst [vmem:[%s3 + $0x550] sm:$0xff] %v966
  %1223 = vst [vmem:[%s3 + $0x558] sm:$0xff] %v967
  %1224 = vst [vmem:[%s3 + $0x560] sm:$0xff] %v968
  %1225 = vst [vmem:[%s3 + $0x568] sm:$0xff] %v969
  %1226 = vst [vmem:[%s3 + $0x570] sm:$0xff] %v970
  %1227 = vst [vmem:[%s3 + $0x578] sm:$0xff] %v971
  %1228 = vst [vmem:[%s3 + $0x580] sm:$0xff] %v972
  %1229 = vst [vmem:[%s3 + $0x588] sm:$0xff] %v973
  %1230 = vst [vmem:[%s3 + $0x590] sm:$0xff] %v974
  %1231 = vst [vmem:[%s3 + $0x598] sm:$0xff] %v975
  %1232 = vst [vmem:[%s3 + $0x5a0] sm:$0xff] %v976
  %1233 = vst [vmem:[%s3 + $0x5a8] sm:$0xff] %v977
  %1234 = vst [vmem:[%s3 + $0x5b0] sm:$0xff] %v978
  %1235 = vst [vmem:[%s3 + $0x5b8] sm:$0xff] %v979
  %1236 = vst [vmem:[%s3 + $0x5c0] sm:$0xff] %v980
  %1237 = vst [vmem:[%s3 + $0x5c8] sm:$0xff] %v981
  %1238 = vst [vmem:[%s3 + $0x5d0] sm:$0xff] %v982
  %1239 = vst [vmem:[%s3 + $0x5d8] sm:$0xff] %v983
  %1240 = vst [vmem:[%s3 + $0x5e0] sm:$0xff] %v984
  %1241 = vst [vmem:[%s3 + $0x5e8] sm:$0xff] %v985
  %1242 = vst [vmem:[%s3 + $0x5f0] sm:$0xff] %v986
  %1243 = vst [vmem:[%s3 + $0x5f8] sm:$0xff] %v987
  %1244 = vst [vmem:[%s3 + $0x600] sm:$0xff] %v988
  %1245 = vst [vmem:[%s3 + $0x608] sm:$0xff] %v989
  %1246 = vst [vmem:[%s3 + $0x610] sm:$0xff] %v990
  %1247 = vst [vmem:[%s3 + $0x618] sm:$0xff] %v991
  %1248 = vst [vmem:[%s3 + $0x620] sm:$0xff] %v992
  %1249 = vst [vmem:[%s3 + $0x628] sm:$0xff] %v993
  %1250 = vst [vmem:[%s3 + $0x630] sm:$0xff] %v994
  %1251 = vst [vmem:[%s3 + $0x638] sm:$0xff] %v995
  %1252 = vst [vmem:[%s3 + $0x640] sm:$0xff] %v996
  %1253 = vst [vmem:[%s3 + $0x648] sm:$0xff] %v997
  %1254 = vst [vmem:[%s3 + $0x650] sm:$0xff] %v998
  %1255 = vst [vmem:[%s3 + $0x658] sm:$0xff] %v999
  %1256 = vst [vmem:[%s3 + $0x660] sm:$0xff] %v1000
  %1257 = vst [vmem:[%s3 + $0x668] sm:$0xff] %v1001
  %1258 = vst [vmem:[%s3 + $0x670] sm:$0xff] %v1002
  %1259 = vst [vmem:[%s3 + $0x678] sm:$0xff] %v1003
  %1260 = vst [vmem:[%s3 + $0x680] sm:$0xff] %v1004
  %1261 = vst [vmem:[%s3 + $0x688] sm:$0xff] %v1005
  %1262 = vst [vmem:[%s3 + $0x690] sm:$0xff] %v1006
  %1263 = vst [vmem:[%s3 + $0x698] sm:$0xff] %v1007
  %1264 = vst [vmem:[%s3 + $0x6a0] sm:$0xff] %v1008
  %1265 = vst [vmem:[%s3 + $0x6a8] sm:$0xff] %v1009
  %1266 = vst [vmem:[%s3 + $0x6b0] sm:$0xff] %v1010
  %1267 = vst [vmem:[%s3 + $0x6b8] sm:$0xff] %v1011
  %1268 = vst [vmem:[%s3 + $0x6c0] sm:$0xff] %v1012
  %1269 = vst [vmem:[%s3 + $0x6c8] sm:$0xff] %v1013
  %1270 = vst [vmem:[%s3 + $0x6d0] sm:$0xff] %v1014
  %1271 = vst [vmem:[%s3 + $0x6d8] sm:$0xff] %v1015
  %1272 = vst [vmem:[%s3 + $0x6e0] sm:$0xff] %v1016
  %1273 = vst [vmem:[%s3 + $0x6e8] sm:$0xff] %v1017
  %1274 = vst [vmem:[%s3 + $0x6f0] sm:$0xff] %v1018
  %1275 = vst [vmem:[%s3 + $0x6f8] sm:$0xff] %v1019
  %1276 = vst [vmem:[%s3 + $0x700] sm:$0xff] %v1020
  %1277 = vst [vmem:[%s3 + $0x708] sm:$0xff] %v1021
  %1278 = vst [vmem:[%s3 + $0x710] sm:$0xff] %v1022
  %1279 = vst [vmem:[%s3 + $0x718] sm:$0xff] %v1023
  %1280 = vst [vmem:[%s3 + $0x720] sm:$0xff] %v1024
  %1281 = vst [vmem:[%s3 + $0x728] sm:$0xff] %v1025
  %1282 = vst [vmem:[%s3 + $0x730] sm:$0xff] %v1026
  %1283 = vst [vmem:[%s3 + $0x738] sm:$0xff] %v1027
  %1284 = vst [vmem:[%s3 + $0x740] sm:$0xff] %v1028
  %1285 = vst [vmem:[%s3 + $0x748] sm:$0xff] %v1029
  %1286 = vst [vmem:[%s3 + $0x750] sm:$0xff] %v1030
  %1287 = vst [vmem:[%s3 + $0x758] sm:$0xff] %v1031
  %1288 = vst [vmem:[%s3 + $0x760] sm:$0xff] %v1032
  %1289 = vst [vmem:[%s3 + $0x768] sm:$0xff] %v1033
  %1290 = vst [vmem:[%s3 + $0x770] sm:$0xff] %v1034
  %1291 = vst [vmem:[%s3 + $0x778] sm:$0xff] %v1035
  %1292 = vst [vmem:[%s3 + $0x780] sm:$0xff] %v1036
  %1293 = vst [vmem:[%s3 + $0x788] sm:$0xff] %v1037
  %1294 = vst [vmem:[%s3 + $0x790] sm:$0xff] %v1038
  %1295 = vst [vmem:[%s3 + $0x798] sm:$0xff] %v1039
  %1296 = vst [vmem:[%s3 + $0x7a0] sm:$0xff] %v1040
  %1297 = vst [vmem:[%s3 + $0x7a8] sm:$0xff] %v1041
  %1298 = vst [vmem:[%s3 + $0x7b0] sm:$0xff] %v1042
  %1299 = vst [vmem:[%s3 + $0x7b8] sm:$0xff] %v1043
  %1300 = vst [vmem:[%s3 + $0x7c0] sm:$0xff] %v1044
  %1301 = vst [vmem:[%s3 + $0x7c8] sm:$0xff] %v1045
  %1302 = vst [vmem:[%s3 + $0x7d0] sm:$0xff] %v1046
  %1303 = vst [vmem:[%s3 + $0x7d8] sm:$0xff] %v1047
  %1304 = vst [vmem:[%s3 + $0x7e0] sm:$0xff] %v1048
  %1305 = vst [vmem:[%s3 + $0x7e8] sm:$0xff] %v1049
  %1306 = vst [vmem:[%s3 + $0x7f0] sm:$0xff] %v1050
  %1307 = vst [vmem:[%s3 + $0x7f8] sm:$0xff] %v1051
  // Predicated region
  $region14: #{_lambda_.3} parent=0 // pred_check
    _
  $region15: #{_lambda_.3} parent=0 // pred_check_branch
    %1309 = sbr.rel (0) target = $region17
  $region16: #{_lambda_.3} parent=0 // pred_region
    _
  $region17: #{_lambda_.3} parent=0 // pred_fallthru
    _
  // Predicated region
  $region18: #{_lambda_.3} parent=0 // pred_check
    _
  $region19: #{_lambda_.3} parent=0 // pred_check_branch
    %1311 = sbr.rel (0) target = $region21
  $region20: #{_lambda_.3} parent=0 // pred_region
    _
  $region21: #{_lambda_.3} parent=0 // pred_fallthru
    _

</llo_original>
